<compile_context>
chip_gen: v6e
topology: v6e:2x2x1
jax: 0.10.0
libtpu: 0.0.40
codegen_flags: <defaults>
</compile_context>

<pallas_src>
from functools import partial

import jax
import jax.numpy as jnp
from jax.experimental import pallas as pl
from jax.experimental.pallas import tpu as pltpu


# ------------------------------------------------------------------
# Fused kernel: 12 x (matmul + bias + activation) in one body
# ------------------------------------------------------------------
def _clasnet_fused_kernel(x_ref, *refs, acts):
    # refs = (w1, b1, w2, b2, ..., w12, b12, o_ref)
    o_ref = refs[-1]
    h = x_ref[...].astype(jnp.bfloat16)  # (TB, D_in) f32 -> bf16 in-kernel
    n_layers = len(acts)
    for i, act in enumerate(acts):
        w = refs[2 * i][...]          # (Din(_p), Dout_p) bf16, VMEM-resident
        b = refs[2 * i + 1][...]      # (1, Dout_p)        f32
        # MXU matmul with f32 accumulation; bias add in f32.
        y = jnp.dot(h, w, preferred_element_type=jnp.float32) + b
        last = i + 1 == n_layers
        if not last:
            # bf16 activations: v6e/v7x VPU/EUP are bf16-native (2 elem / lane).
            y = y.astype(jnp.bfloat16)
        if act == "sigmoid":
            # tanh form: single EUP push, no compare/select/abs VPU work.
            y = jnp.tanh(0.5 * y) * 0.5 + 0.5
        elif act == "relu":
            y = jnp.maximum(y, 0.0)
        elif act == "leaky_relu":
            # slope 0.01 < 1  =>  max(y, 0.01*y) == leaky_relu(y)
            y = jnp.maximum(y, 0.01 * y)
        elif act == "none":
            pass
        else:
            raise ValueError(f"unknown activation {act}")
        if last:
            o_ref[...] = y.astype(o_ref.dtype)   # lane-dense (TB, 128) f32 store
        else:
            h = y


def _round_up(n, m):
    return ((n + m - 1) // m) * m


def _choose_batch_tiling(B, batch_tile):
    """Pick (batch tile, padded batch)."""
    b16 = _round_up(B, 16)            # bf16 sublane packing
    if b16 <= 32:
        tb = b16                      # tiny batch: one grid step
    elif b16 <= batch_tile:
        # mid-size batch: force >= 2 grid steps so "parallel" semantics can
        # put work on v7x's second TensorCore.
        tb = _round_up((b16 + 1) // 2, 16)
    else:
        tb = batch_tile               # large batch: big tiles fill the MXU
    b_pad = _round_up(b16, tb)
    return tb, b_pad


def clasnet_forward(weights, biases, x, *, acts, out_features, batch_tile=512):
    """Fused forward pass: a single Pallas kernel tiled over the batch.

    weights[0]: (in_features, Dout_p) bf16 (input dim unpadded).
    weights[i>0]: (Din_p, Dout_p) bf16, zero-padded to multiples of 128.
    biases[i] : (1, Dout_p) f32, zero-padded.
    x         : (B, in_features) f32 (unpadded).
    """
    B, d_in = x.shape
    d_out_p = weights[-1].shape[1]

    tb, b_pad = _choose_batch_tiling(B, batch_tile)

    # Only batch padding happens outside the kernel; x stays f32 and feature-
    # unpadded (no inflated HBM copy).
    if b_pad != B:
        x_p = jnp.zeros((b_pad, d_in), x.dtype).at[:B].set(x)
    else:
        x_p = x

    # block (tb, d_in): last dim equals the full array dim -> legal even if
    # d_in is not a multiple of 128.
    in_specs = [pl.BlockSpec((tb, d_in), lambda i: (i, 0))]
    flat_args = []
    for w, b in zip(weights, biases):
        # Full-block, grid-invariant specs: weights/biases stay resident in
        # VMEM across batch tiles (Pallas skips re-DMA when the block index
        # repeats).  Default double-buffering kept: total weight footprint
        # (~2x2.8 MB) is far below VMEM on every generation.
        in_specs.append(pl.BlockSpec(w.shape, lambda i: (0, 0)))
        in_specs.append(pl.BlockSpec(b.shape, lambda i: (0, 0)))
        flat_args += [w, b]

    out = pl.pallas_call(
        partial(_clasnet_fused_kernel, acts=acts),
        out_shape=jax.ShapeDtypeStruct((b_pad, d_out_p), jnp.float32),
        grid=(b_pad // tb,),
        in_specs=in_specs,
        out_specs=pl.BlockSpec((tb, d_out_p), lambda i: (i, 0)),
        compiler_params=pltpu.CompilerParams(
            dimension_semantics=("parallel",),   # batch tiles split across TCs (v7x)
            vmem_limit_bytes=32 * 1024 * 1024,   # ~6 MB weights + a few MB activations
        ),
    )(x_p, *flat_args)

    return out[:B, :out_features]


# ------------------------------------------------------------------
# ClasNet parameter construction
# ------------------------------------------------------------------
def clasnet_layer_dims(input_size, output_size):
    # (name, in_dim, out_dim, activation) — matches the PyTorch forward()
    return [
        ("fc1", input_size, input_size, "sigmoid"),
        ("fc2", input_size, 360, "sigmoid"),
        ("fc5", 360, 360, "sigmoid"),
        ("fc6", 360, 512, "sigmoid"),
        ("fc7", 512, 512, "leaky_relu"),
        ("fc8", 512, 512, "leaky_relu"),
        ("fc9", 512, 360, "relu"),
        ("fc10", 360, 360, "relu"),
        ("fc11", 360, 256, "relu"),
        ("fc12", 256, 128, "relu"),
        ("fc13", 128, 64, "relu"),
        ("fc14", 64, output_size, "none"),
    ]


def init_clasnet_params(key, input_size, output_size):
    """Deterministic init mimicking PyTorch Linear default (uniform +/- 1/sqrt(in)).

    Weights are stored as (in_features, out_features), i.e. transposed vs.
    PyTorch's (out, in).
    """
    params = []
    for name, d_in, d_out, act in clasnet_layer_dims(input_size, output_size):
        key, kw, kb = jax.random.split(key, 3)
        bound = 1.0 / (float(d_in) ** 0.5)
        w = jax.random.uniform(kw, (d_in, d_out), jnp.float32, -bound, bound)
        b = jax.random.uniform(kb, (d_out,), jnp.float32, -bound, bound)
        params.append((name, w, b, act))
    return params


def pad_params_for_kernel(params):
    """Zero-pad layers to 128-multiples; weights -> bf16, biases -> f32 (1, Dout_p).

    The FIRST layer's input dim is left unpadded so the kernel can consume the
    raw (B, in_features) f32 input directly (no feature-padded HBM copy).
    """
    weights, biases, acts = [], [], []
    for li, (_, w, b, act) in enumerate(params):
        d_in, d_out = w.shape
        dip = d_in if li == 0 else _round_up(d_in, 128)
        dop = _round_up(d_out, 128)
        wp = (
            jnp.zeros((dip, dop), jnp.float32)
            .at[:d_in, :d_out]
            .set(w)
            .astype(jnp.bfloat16)
        )
        bp = jnp.zeros((1, dop), jnp.float32).at[0, :d_out].set(b)
        weights.append(wp)
        biases.append(bp)
        acts.append(act)
    return weights, biases, tuple(acts)


# ------------------------------------------------------------------
# References
# ------------------------------------------------------------------
def clasnet_forward_ref(params, x):
    """Pure-JAX reference using the SAME precision scheme as the kernel
    (bf16 weights, f32 MXU accumulate + bias, bf16 activations)."""
    n = len(params)
    h = x.astype(jnp.bfloat16)
    for i, (_, w, b, act) in enumerate(params):
        y = jnp.dot(h, w.astype(jnp.bfloat16),
                    preferred_element_type=jnp.float32) + b[None, :]
        if i + 1 < n:
            y = y.astype(jnp.bfloat16)
        if act == "sigmoid":
            y = jax.nn.sigmoid(y)
        elif act == "relu":
            y = jnp.maximum(y, 0.0)
        elif act == "leaky_relu":
            y = jnp.where(y >= 0.0, y, 0.01 * y)
        h = y
    return h.astype(jnp.float32)


def clasnet_forward_f32_ref(params, x):
    """Full-f32 reference (PyTorch-parity precision), diagnostic only."""
    h = x
    for _, w, b, act in params:
        y = h @ w + b[None, :]
        if act == "sigmoid":
            y = jax.nn.sigmoid(y)
        elif act == "relu":
            y = jnp.maximum(y, 0.0)
        elif act == "leaky_relu":
            y = jnp.where(y >= 0.0, y, 0.01 * y)
        h = y
    return h


if __name__ == "__main__":
    # Small, self-consistent shapes: input_size = number of tabular features,
    # output_size = number of TCH_grupo classes.
    batch = 8
    input_size = 32
    output_size = 8

    key = jax.random.PRNGKey(0)
    key, kx = jax.random.split(key)
    x = jax.random.normal(kx, (batch, input_size), jnp.float32)

    params = init_clasnet_params(key, input_size, output_size)
    weights, biases, acts = pad_params_for_kernel(params)

    fwd = jax.jit(
        partial(clasnet_forward, acts=acts, out_features=output_size)
    )
    out = fwd(weights, biases, x)
    out = jax.block_until_ready(out)

    ref = clasnet_forward_ref(params, x)
    assert out.shape == (batch, output_size), out.shape
    max_err = float(jnp.max(jnp.abs(out - ref)))
    assert jnp.allclose(out, ref, atol=1e-2, rtol=1e-2), max_err

    # Diagnostic only: deviation from a pure-f32 (PyTorch-parity) forward,
    # expected to be a bit larger because of the intentional bf16 scheme.
    f32_err = float(jnp.max(jnp.abs(out - clasnet_forward_f32_ref(params, x))))
    print(f"max_err_vs_bf16_ref={max_err:.3e} max_err_vs_f32_ref={f32_err:.3e}")

    print("KERNEL_OK")
</pallas_src>

<mosaic_0001>
module attributes {stable_mosaic.version = 11 : i64} {
  func.func @_clasnet_fused_kernel(%arg0: i32, %arg1: memref<16x32xf32, #tpu.memory_space<vmem>>, %arg2: memref<32x128xbf16, #tpu.memory_space<vmem>>, %arg3: memref<1x128xf32, #tpu.memory_space<vmem>>, %arg4: memref<128x384xbf16, #tpu.memory_space<vmem>>, %arg5: memref<1x384xf32, #tpu.memory_space<vmem>>, %arg6: memref<384x384xbf16, #tpu.memory_space<vmem>>, %arg7: memref<1x384xf32, #tpu.memory_space<vmem>>, %arg8: memref<384x512xbf16, #tpu.memory_space<vmem>>, %arg9: memref<1x512xf32, #tpu.memory_space<vmem>>, %arg10: memref<512x512xbf16, #tpu.memory_space<vmem>>, %arg11: memref<1x512xf32, #tpu.memory_space<vmem>>, %arg12: memref<512x512xbf16, #tpu.memory_space<vmem>>, %arg13: memref<1x512xf32, #tpu.memory_space<vmem>>, %arg14: memref<512x384xbf16, #tpu.memory_space<vmem>>, %arg15: memref<1x384xf32, #tpu.memory_space<vmem>>, %arg16: memref<384x384xbf16, #tpu.memory_space<vmem>>, %arg17: memref<1x384xf32, #tpu.memory_space<vmem>>, %arg18: memref<384x256xbf16, #tpu.memory_space<vmem>>, %arg19: memref<1x256xf32, #tpu.memory_space<vmem>>, %arg20: memref<256x128xbf16, #tpu.memory_space<vmem>>, %arg21: memref<1x128xf32, #tpu.memory_space<vmem>>, %arg22: memref<128x128xbf16, #tpu.memory_space<vmem>>, %arg23: memref<1x128xf32, #tpu.memory_space<vmem>>, %arg24: memref<128x128xbf16, #tpu.memory_space<vmem>>, %arg25: memref<1x128xf32, #tpu.memory_space<vmem>>, %arg26: memref<16x128xf32, #tpu.memory_space<vmem>>) attributes {dimension_semantics = [#tpu.dimension_semantics<parallel>], iteration_bounds = array<i64: 1>, scalar_prefetch = 0 : i64, scratch_operands = 0 : i64, tpu.core_type = #tpu.core_type<tc>, window_params = [{transform_indices = @transform_0, window_bounds = array<i64: 16, 32>}, {pipeline_mode = #tpu.pipeline_mode<synchronous>, transform_indices = @transform_1, window_bounds = array<i64: 32, 128>}, {pipeline_mode = #tpu.pipeline_mode<synchronous>, transform_indices = @transform_2, window_bounds = array<i64: 1, 128>}, {pipeline_mode = #tpu.pipeline_mode<synchronous>, transform_indices = @transform_3, window_bounds = array<i64: 128, 384>}, {pipeline_mode = #tpu.pipeline_mode<synchronous>, transform_indices = @transform_4, window_bounds = array<i64: 1, 384>}, {pipeline_mode = #tpu.pipeline_mode<synchronous>, transform_indices = @transform_5, window_bounds = array<i64: 384, 384>}, {pipeline_mode = #tpu.pipeline_mode<synchronous>, transform_indices = @transform_6, window_bounds = array<i64: 1, 384>}, {pipeline_mode = #tpu.pipeline_mode<synchronous>, transform_indices = @transform_7, window_bounds = array<i64: 384, 512>}, {pipeline_mode = #tpu.pipeline_mode<synchronous>, transform_indices = @transform_8, window_bounds = array<i64: 1, 512>}, {pipeline_mode = #tpu.pipeline_mode<synchronous>, transform_indices = @transform_9, window_bounds = array<i64: 512, 512>}, {pipeline_mode = #tpu.pipeline_mode<synchronous>, transform_indices = @transform_10, window_bounds = array<i64: 1, 512>}, {pipeline_mode = #tpu.pipeline_mode<synchronous>, transform_indices = @transform_11, window_bounds = array<i64: 512, 512>}, {pipeline_mode = #tpu.pipeline_mode<synchronous>, transform_indices = @transform_12, window_bounds = array<i64: 1, 512>}, {pipeline_mode = #tpu.pipeline_mode<synchronous>, transform_indices = @transform_13, window_bounds = array<i64: 512, 384>}, {pipeline_mode = #tpu.pipeline_mode<synchronous>, transform_indices = @transform_14, window_bounds = array<i64: 1, 384>}, {pipeline_mode = #tpu.pipeline_mode<synchronous>, transform_indices = @transform_15, window_bounds = array<i64: 384, 384>}, {pipeline_mode = #tpu.pipeline_mode<synchronous>, transform_indices = @transform_16, window_bounds = array<i64: 1, 384>}, {pipeline_mode = #tpu.pipeline_mode<synchronous>, transform_indices = @transform_17, window_bounds = array<i64: 384, 256>}, {pipeline_mode = #tpu.pipeline_mode<synchronous>, transform_indices = @transform_18, window_bounds = array<i64: 1, 256>}, {pipeline_mode = #tpu.pipeline_mode<synchronous>, transform_indices = @transform_19, window_bounds = array<i64: 256, 128>}, {pipeline_mode = #tpu.pipeline_mode<synchronous>, transform_indices = @transform_20, window_bounds = array<i64: 1, 128>}, {pipeline_mode = #tpu.pipeline_mode<synchronous>, transform_indices = @transform_21, window_bounds = array<i64: 128, 128>}, {pipeline_mode = #tpu.pipeline_mode<synchronous>, transform_indices = @transform_22, window_bounds = array<i64: 1, 128>}, {pipeline_mode = #tpu.pipeline_mode<synchronous>, transform_indices = @transform_23, window_bounds = array<i64: 128, 128>}, {pipeline_mode = #tpu.pipeline_mode<synchronous>, transform_indices = @transform_24, window_bounds = array<i64: 1, 128>}, {transform_indices = @transform_25, window_bounds = array<i64: 16, 128>}]} {
    %c0 = arith.constant 0 : index
    %c0_0 = arith.constant 0 : index
    %0 = vector.load %arg1[%c0, %c0_0] : memref<16x32xf32, #tpu.memory_space<vmem>>, vector<16x32xf32>
    %1 = arith.truncf %0 : vector<16x32xf32> to vector<16x32xbf16>
    %c0_1 = arith.constant 0 : index
    %c0_2 = arith.constant 0 : index
    %2 = vector.load %arg2[%c0_1, %c0_2] : memref<32x128xbf16, #tpu.memory_space<vmem>>, vector<32x128xbf16>
    %c0_3 = arith.constant 0 : index
    %c0_4 = arith.constant 0 : index
    %3 = vector.load %arg3[%c0_3, %c0_4] : memref<1x128xf32, #tpu.memory_space<vmem>>, vector<1x128xf32>
    %cst = arith.constant dense<0.000000e+00> : vector<16x128xf32>
    %4 = tpu.matmul %1, %2, %cst {dimension_numbers = #tpu.dot_dimension_numbers<[1], [0], [0], [1], [0, 0, 1, 1], [], []>} : vector<16x32xbf16>, vector<32x128xbf16>, vector<16x128xf32> -> vector<16x128xf32>
    %5 = vector.broadcast %3 : vector<1x128xf32> to vector<16x128xf32>
    %6 = arith.addf %4, %5 : vector<16x128xf32>
    %7 = arith.truncf %6 : vector<16x128xf32> to vector<16x128xbf16>
    %cst_5 = arith.constant 5.000000e-01 : bf16
    %8 = vector.broadcast %cst_5 : bf16 to vector<16x128xbf16>
    %9 = arith.mulf %8, %7 : vector<16x128xbf16>
    %10 = math.tanh %9 : vector<16x128xbf16>
    %cst_6 = arith.constant 5.000000e-01 : bf16
    %11 = vector.broadcast %cst_6 : bf16 to vector<16x128xbf16>
    %12 = arith.mulf %10, %11 : vector<16x128xbf16>
    %cst_7 = arith.constant 5.000000e-01 : bf16
    %13 = vector.broadcast %cst_7 : bf16 to vector<16x128xbf16>
    %14 = arith.addf %12, %13 : vector<16x128xbf16>
    %c0_8 = arith.constant 0 : index
    %c0_9 = arith.constant 0 : index
    %15 = vector.load %arg4[%c0_8, %c0_9] : memref<128x384xbf16, #tpu.memory_space<vmem>>, vector<128x384xbf16>
    %c0_10 = arith.constant 0 : index
    %c0_11 = arith.constant 0 : index
    %16 = vector.load %arg5[%c0_10, %c0_11] : memref<1x384xf32, #tpu.memory_space<vmem>>, vector<1x384xf32>
    %cst_12 = arith.constant dense<0.000000e+00> : vector<16x384xf32>
    %17 = tpu.matmul %14, %15, %cst_12 {dimension_numbers = #tpu.dot_dimension_numbers<[1], [0], [0], [1], [0, 0, 1, 1], [], []>} : vector<16x128xbf16>, vector<128x384xbf16>, vector<16x384xf32> -> vector<16x384xf32>
    %18 = vector.broadcast %16 : vector<1x384xf32> to vector<16x384xf32>
    %19 = arith.addf %17, %18 : vector<16x384xf32>
    %20 = arith.truncf %19 : vector<16x384xf32> to vector<16x384xbf16>
    %cst_13 = arith.constant 5.000000e-01 : bf16
    %21 = vector.broadcast %cst_13 : bf16 to vector<16x384xbf16>
    %22 = arith.mulf %21, %20 : vector<16x384xbf16>
    %23 = math.tanh %22 : vector<16x384xbf16>
    %cst_14 = arith.constant 5.000000e-01 : bf16
    %24 = vector.broadcast %cst_14 : bf16 to vector<16x384xbf16>
    %25 = arith.mulf %23, %24 : vector<16x384xbf16>
    %cst_15 = arith.constant 5.000000e-01 : bf16
    %26 = vector.broadcast %cst_15 : bf16 to vector<16x384xbf16>
    %27 = arith.addf %25, %26 : vector<16x384xbf16>
    %c0_16 = arith.constant 0 : index
    %c0_17 = arith.constant 0 : index
    %28 = vector.load %arg6[%c0_16, %c0_17] : memref<384x384xbf16, #tpu.memory_space<vmem>>, vector<384x384xbf16>
    %c0_18 = arith.constant 0 : index
    %c0_19 = arith.constant 0 : index
    %29 = vector.load %arg7[%c0_18, %c0_19] : memref<1x384xf32, #tpu.memory_space<vmem>>, vector<1x384xf32>
    %cst_20 = arith.constant dense<0.000000e+00> : vector<16x384xf32>
    %30 = tpu.matmul %27, %28, %cst_20 {dimension_numbers = #tpu.dot_dimension_numbers<[1], [0], [0], [1], [0, 0, 1, 1], [], []>} : vector<16x384xbf16>, vector<384x384xbf16>, vector<16x384xf32> -> vector<16x384xf32>
    %31 = vector.broadcast %29 : vector<1x384xf32> to vector<16x384xf32>
    %32 = arith.addf %30, %31 : vector<16x384xf32>
    %33 = arith.truncf %32 : vector<16x384xf32> to vector<16x384xbf16>
    %cst_21 = arith.constant 5.000000e-01 : bf16
    %34 = vector.broadcast %cst_21 : bf16 to vector<16x384xbf16>
    %35 = arith.mulf %34, %33 : vector<16x384xbf16>
    %36 = math.tanh %35 : vector<16x384xbf16>
    %cst_22 = arith.constant 5.000000e-01 : bf16
    %37 = vector.broadcast %cst_22 : bf16 to vector<16x384xbf16>
    %38 = arith.mulf %36, %37 : vector<16x384xbf16>
    %cst_23 = arith.constant 5.000000e-01 : bf16
    %39 = vector.broadcast %cst_23 : bf16 to vector<16x384xbf16>
    %40 = arith.addf %38, %39 : vector<16x384xbf16>
    %c0_24 = arith.constant 0 : index
    %c0_25 = arith.constant 0 : index
    %41 = vector.load %arg8[%c0_24, %c0_25] : memref<384x512xbf16, #tpu.memory_space<vmem>>, vector<384x512xbf16>
    %c0_26 = arith.constant 0 : index
    %c0_27 = arith.constant 0 : index
    %42 = vector.load %arg9[%c0_26, %c0_27] : memref<1x512xf32, #tpu.memory_space<vmem>>, vector<1x512xf32>
    %cst_28 = arith.constant dense<0.000000e+00> : vector<16x512xf32>
    %43 = tpu.matmul %40, %41, %cst_28 {dimension_numbers = #tpu.dot_dimension_numbers<[1], [0], [0], [1], [0, 0, 1, 1], [], []>} : vector<16x384xbf16>, vector<384x512xbf16>, vector<16x512xf32> -> vector<16x512xf32>
    %44 = vector.broadcast %42 : vector<1x512xf32> to vector<16x512xf32>
    %45 = arith.addf %43, %44 : vector<16x512xf32>
    %46 = arith.truncf %45 : vector<16x512xf32> to vector<16x512xbf16>
    %cst_29 = arith.constant 5.000000e-01 : bf16
    %47 = vector.broadcast %cst_29 : bf16 to vector<16x512xbf16>
    %48 = arith.mulf %47, %46 : vector<16x512xbf16>
    %49 = math.tanh %48 : vector<16x512xbf16>
    %cst_30 = arith.constant 5.000000e-01 : bf16
    %50 = vector.broadcast %cst_30 : bf16 to vector<16x512xbf16>
    %51 = arith.mulf %49, %50 : vector<16x512xbf16>
    %cst_31 = arith.constant 5.000000e-01 : bf16
    %52 = vector.broadcast %cst_31 : bf16 to vector<16x512xbf16>
    %53 = arith.addf %51, %52 : vector<16x512xbf16>
    %c0_32 = arith.constant 0 : index
    %c0_33 = arith.constant 0 : index
    %54 = vector.load %arg10[%c0_32, %c0_33] : memref<512x512xbf16, #tpu.memory_space<vmem>>, vector<512x512xbf16>
    %c0_34 = arith.constant 0 : index
    %c0_35 = arith.constant 0 : index
    %55 = vector.load %arg11[%c0_34, %c0_35] : memref<1x512xf32, #tpu.memory_space<vmem>>, vector<1x512xf32>
    %cst_36 = arith.constant dense<0.000000e+00> : vector<16x512xf32>
    %56 = tpu.matmul %53, %54, %cst_36 {dimension_numbers = #tpu.dot_dimension_numbers<[1], [0], [0], [1], [0, 0, 1, 1], [], []>} : vector<16x512xbf16>, vector<512x512xbf16>, vector<16x512xf32> -> vector<16x512xf32>
    %57 = vector.broadcast %55 : vector<1x512xf32> to vector<16x512xf32>
    %58 = arith.addf %56, %57 : vector<16x512xf32>
    %59 = arith.truncf %58 : vector<16x512xf32> to vector<16x512xbf16>
    %cst_37 = arith.constant 1.000980e-02 : bf16
    %60 = vector.broadcast %cst_37 : bf16 to vector<16x512xbf16>
    %61 = arith.mulf %60, %59 : vector<16x512xbf16>
    %62 = arith.maximumf %59, %61 : vector<16x512xbf16>
    %c0_38 = arith.constant 0 : index
    %c0_39 = arith.constant 0 : index
    %63 = vector.load %arg12[%c0_38, %c0_39] : memref<512x512xbf16, #tpu.memory_space<vmem>>, vector<512x512xbf16>
    %c0_40 = arith.constant 0 : index
    %c0_41 = arith.constant 0 : index
    %64 = vector.load %arg13[%c0_40, %c0_41] : memref<1x512xf32, #tpu.memory_space<vmem>>, vector<1x512xf32>
    %cst_42 = arith.constant dense<0.000000e+00> : vector<16x512xf32>
    %65 = tpu.matmul %62, %63, %cst_42 {dimension_numbers = #tpu.dot_dimension_numbers<[1], [0], [0], [1], [0, 0, 1, 1], [], []>} : vector<16x512xbf16>, vector<512x512xbf16>, vector<16x512xf32> -> vector<16x512xf32>
    %66 = vector.broadcast %64 : vector<1x512xf32> to vector<16x512xf32>
    %67 = arith.addf %65, %66 : vector<16x512xf32>
    %68 = arith.truncf %67 : vector<16x512xf32> to vector<16x512xbf16>
    %cst_43 = arith.constant 1.000980e-02 : bf16
    %69 = vector.broadcast %cst_43 : bf16 to vector<16x512xbf16>
    %70 = arith.mulf %69, %68 : vector<16x512xbf16>
    %71 = arith.maximumf %68, %70 : vector<16x512xbf16>
    %c0_44 = arith.constant 0 : index
    %c0_45 = arith.constant 0 : index
    %72 = vector.load %arg14[%c0_44, %c0_45] : memref<512x384xbf16, #tpu.memory_space<vmem>>, vector<512x384xbf16>
    %c0_46 = arith.constant 0 : index
    %c0_47 = arith.constant 0 : index
    %73 = vector.load %arg15[%c0_46, %c0_47] : memref<1x384xf32, #tpu.memory_space<vmem>>, vector<1x384xf32>
    %cst_48 = arith.constant dense<0.000000e+00> : vector<16x384xf32>
    %74 = tpu.matmul %71, %72, %cst_48 {dimension_numbers = #tpu.dot_dimension_numbers<[1], [0], [0], [1], [0, 0, 1, 1], [], []>} : vector<16x512xbf16>, vector<512x384xbf16>, vector<16x384xf32> -> vector<16x384xf32>
    %75 = vector.broadcast %73 : vector<1x384xf32> to vector<16x384xf32>
    %76 = arith.addf %74, %75 : vector<16x384xf32>
    %77 = arith.truncf %76 : vector<16x384xf32> to vector<16x384xbf16>
    %cst_49 = arith.constant 0.000000e+00 : bf16
    %78 = vector.broadcast %cst_49 : bf16 to vector<16x384xbf16>
    %79 = arith.maximumf %77, %78 : vector<16x384xbf16>
    %c0_50 = arith.constant 0 : index
    %c0_51 = arith.constant 0 : index
    %80 = vector.load %arg16[%c0_50, %c0_51] : memref<384x384xbf16, #tpu.memory_space<vmem>>, vector<384x384xbf16>
    %c0_52 = arith.constant 0 : index
    %c0_53 = arith.constant 0 : index
    %81 = vector.load %arg17[%c0_52, %c0_53] : memref<1x384xf32, #tpu.memory_space<vmem>>, vector<1x384xf32>
    %cst_54 = arith.constant dense<0.000000e+00> : vector<16x384xf32>
    %82 = tpu.matmul %79, %80, %cst_54 {dimension_numbers = #tpu.dot_dimension_numbers<[1], [0], [0], [1], [0, 0, 1, 1], [], []>} : vector<16x384xbf16>, vector<384x384xbf16>, vector<16x384xf32> -> vector<16x384xf32>
    %83 = vector.broadcast %81 : vector<1x384xf32> to vector<16x384xf32>
    %84 = arith.addf %82, %83 : vector<16x384xf32>
    %85 = arith.truncf %84 : vector<16x384xf32> to vector<16x384xbf16>
    %cst_55 = arith.constant 0.000000e+00 : bf16
    %86 = vector.broadcast %cst_55 : bf16 to vector<16x384xbf16>
    %87 = arith.maximumf %85, %86 : vector<16x384xbf16>
    %c0_56 = arith.constant 0 : index
    %c0_57 = arith.constant 0 : index
    %88 = vector.load %arg18[%c0_56, %c0_57] : memref<384x256xbf16, #tpu.memory_space<vmem>>, vector<384x256xbf16>
    %c0_58 = arith.constant 0 : index
    %c0_59 = arith.constant 0 : index
    %89 = vector.load %arg19[%c0_58, %c0_59] : memref<1x256xf32, #tpu.memory_space<vmem>>, vector<1x256xf32>
    %cst_60 = arith.constant dense<0.000000e+00> : vector<16x256xf32>
    %90 = tpu.matmul %87, %88, %cst_60 {dimension_numbers = #tpu.dot_dimension_numbers<[1], [0], [0], [1], [0, 0, 1, 1], [], []>} : vector<16x384xbf16>, vector<384x256xbf16>, vector<16x256xf32> -> vector<16x256xf32>
    %91 = vector.broadcast %89 : vector<1x256xf32> to vector<16x256xf32>
    %92 = arith.addf %90, %91 : vector<16x256xf32>
    %93 = arith.truncf %92 : vector<16x256xf32> to vector<16x256xbf16>
    %cst_61 = arith.constant 0.000000e+00 : bf16
    %94 = vector.broadcast %cst_61 : bf16 to vector<16x256xbf16>
    %95 = arith.maximumf %93, %94 : vector<16x256xbf16>
    %c0_62 = arith.constant 0 : index
    %c0_63 = arith.constant 0 : index
    %96 = vector.load %arg20[%c0_62, %c0_63] : memref<256x128xbf16, #tpu.memory_space<vmem>>, vector<256x128xbf16>
    %c0_64 = arith.constant 0 : index
    %c0_65 = arith.constant 0 : index
    %97 = vector.load %arg21[%c0_64, %c0_65] : memref<1x128xf32, #tpu.memory_space<vmem>>, vector<1x128xf32>
    %cst_66 = arith.constant dense<0.000000e+00> : vector<16x128xf32>
    %98 = tpu.matmul %95, %96, %cst_66 {dimension_numbers = #tpu.dot_dimension_numbers<[1], [0], [0], [1], [0, 0, 1, 1], [], []>} : vector<16x256xbf16>, vector<256x128xbf16>, vector<16x128xf32> -> vector<16x128xf32>
    %99 = vector.broadcast %97 : vector<1x128xf32> to vector<16x128xf32>
    %100 = arith.addf %98, %99 : vector<16x128xf32>
    %101 = arith.truncf %100 : vector<16x128xf32> to vector<16x128xbf16>
    %cst_67 = arith.constant 0.000000e+00 : bf16
    %102 = vector.broadcast %cst_67 : bf16 to vector<16x128xbf16>
    %103 = arith.maximumf %101, %102 : vector<16x128xbf16>
    %c0_68 = arith.constant 0 : index
    %c0_69 = arith.constant 0 : index
    %104 = vector.load %arg22[%c0_68, %c0_69] : memref<128x128xbf16, #tpu.memory_space<vmem>>, vector<128x128xbf16>
    %c0_70 = arith.constant 0 : index
    %c0_71 = arith.constant 0 : index
    %105 = vector.load %arg23[%c0_70, %c0_71] : memref<1x128xf32, #tpu.memory_space<vmem>>, vector<1x128xf32>
    %cst_72 = arith.constant dense<0.000000e+00> : vector<16x128xf32>
    %106 = tpu.matmul %103, %104, %cst_72 {dimension_numbers = #tpu.dot_dimension_numbers<[1], [0], [0], [1], [0, 0, 1, 1], [], []>} : vector<16x128xbf16>, vector<128x128xbf16>, vector<16x128xf32> -> vector<16x128xf32>
    %107 = vector.broadcast %105 : vector<1x128xf32> to vector<16x128xf32>
    %108 = arith.addf %106, %107 : vector<16x128xf32>
    %109 = arith.truncf %108 : vector<16x128xf32> to vector<16x128xbf16>
    %cst_73 = arith.constant 0.000000e+00 : bf16
    %110 = vector.broadcast %cst_73 : bf16 to vector<16x128xbf16>
    %111 = arith.maximumf %109, %110 : vector<16x128xbf16>
    %c0_74 = arith.constant 0 : index
    %c0_75 = arith.constant 0 : index
    %112 = vector.load %arg24[%c0_74, %c0_75] : memref<128x128xbf16, #tpu.memory_space<vmem>>, vector<128x128xbf16>
    %c0_76 = arith.constant 0 : index
    %c0_77 = arith.constant 0 : index
    %113 = vector.load %arg25[%c0_76, %c0_77] : memref<1x128xf32, #tpu.memory_space<vmem>>, vector<1x128xf32>
    %cst_78 = arith.constant dense<0.000000e+00> : vector<16x128xf32>
    %114 = tpu.matmul %111, %112, %cst_78 {dimension_numbers = #tpu.dot_dimension_numbers<[1], [0], [0], [1], [0, 0, 1, 1], [], []>} : vector<16x128xbf16>, vector<128x128xbf16>, vector<16x128xf32> -> vector<16x128xf32>
    %115 = vector.broadcast %113 : vector<1x128xf32> to vector<16x128xf32>
    %116 = arith.addf %114, %115 : vector<16x128xf32>
    %c0_79 = arith.constant 0 : index
    %c0_80 = arith.constant 0 : index
    %117 = vector.load %arg26[%c0_79, %c0_80] : memref<16x128xf32, #tpu.memory_space<vmem>>, vector<16x128xf32>
    tpu.vector_store %arg26[%c0_79, %c0_80], %116 {strides = array<i32>} : memref<16x128xf32, #tpu.memory_space<vmem>>, vector<16x128xf32>,
    return
  }
  func.func @transform_0(%arg0: i32) -> (i32, i32) {
    %c0_i32 = arith.constant 0 : i32
    %c0_i32_0 = arith.constant 0 : i32
    return %arg0, %c0_i32 : i32, i32
  }
  func.func @transform_1(%arg0: i32) -> (i32, i32) {
    %c0_i32 = arith.constant 0 : i32
    %c0_i32_0 = arith.constant 0 : i32
    %c0_i32_1 = arith.constant 0 : i32
    return %c0_i32, %c0_i32_0 : i32, i32
  }
  func.func @transform_2(%arg0: i32) -> (i32, i32) {
    %c0_i32 = arith.constant 0 : i32
    %c0_i32_0 = arith.constant 0 : i32
    %c0_i32_1 = arith.constant 0 : i32
    return %c0_i32, %c0_i32_0 : i32, i32
  }
  func.func @transform_3(%arg0: i32) -> (i32, i32) {
    %c0_i32 = arith.constant 0 : i32
    %c0_i32_0 = arith.constant 0 : i32
    %c0_i32_1 = arith.constant 0 : i32
    return %c0_i32, %c0_i32_0 : i32, i32
  }
  func.func @transform_4(%arg0: i32) -> (i32, i32) {
    %c0_i32 = arith.constant 0 : i32
    %c0_i32_0 = arith.constant 0 : i32
    %c0_i32_1 = arith.constant 0 : i32
    return %c0_i32, %c0_i32_0 : i32, i32
  }
  func.func @transform_5(%arg0: i32) -> (i32, i32) {
    %c0_i32 = arith.constant 0 : i32
    %c0_i32_0 = arith.constant 0 : i32
    %c0_i32_1 = arith.constant 0 : i32
    return %c0_i32, %c0_i32_0 : i32, i32
  }
  func.func @transform_6(%arg0: i32) -> (i32, i32) {
    %c0_i32 = arith.constant 0 : i32
    %c0_i32_0 = arith.constant 0 : i32
    %c0_i32_1 = arith.constant 0 : i32
    return %c0_i32, %c0_i32_0 : i32, i32
  }
  func.func @transform_7(%arg0: i32) -> (i32, i32) {
    %c0_i32 = arith.constant 0 : i32
    %c0_i32_0 = arith.constant 0 : i32
    %c0_i32_1 = arith.constant 0 : i32
    return %c0_i32, %c0_i32_0 : i32, i32
  }
  func.func @transform_8(%arg0: i32) -> (i32, i32) {
    %c0_i32 = arith.constant 0 : i32
    %c0_i32_0 = arith.constant 0 : i32
    %c0_i32_1 = arith.constant 0 : i32
    return %c0_i32, %c0_i32_0 : i32, i32
  }
  func.func @transform_9(%arg0: i32) -> (i32, i32) {
    %c0_i32 = arith.constant 0 : i32
    %c0_i32_0 = arith.constant 0 : i32
    %c0_i32_1 = arith.constant 0 : i32
    return %c0_i32, %c0_i32_0 : i32, i32
  }
  func.func @transform_10(%arg0: i32) -> (i32, i32) {
    %c0_i32 = arith.constant 0 : i32
    %c0_i32_0 = arith.constant 0 : i32
    %c0_i32_1 = arith.constant 0 : i32
    return %c0_i32, %c0_i32_0 : i32, i32
  }
  func.func @transform_11(%arg0: i32) -> (i32, i32) {
    %c0_i32 = arith.constant 0 : i32
    %c0_i32_0 = arith.constant 0 : i32
    %c0_i32_1 = arith.constant 0 : i32
    return %c0_i32, %c0_i32_0 : i32, i32
  }
  func.func @transform_12(%arg0: i32) -> (i32, i32) {
    %c0_i32 = arith.constant 0 : i32
    %c0_i32_0 = arith.constant 0 : i32
    %c0_i32_1 = arith.constant 0 : i32
    return %c0_i32, %c0_i32_0 : i32, i32
  }
  func.func @transform_13(%arg0: i32) -> (i32, i32) {
    %c0_i32 = arith.constant 0 : i32
    %c0_i32_0 = arith.constant 0 : i32
    %c0_i32_1 = arith.constant 0 : i32
    return %c0_i32, %c0_i32_0 : i32, i32
  }
  func.func @transform_14(%arg0: i32) -> (i32, i32) {
    %c0_i32 = arith.constant 0 : i32
    %c0_i32_0 = arith.constant 0 : i32
    %c0_i32_1 = arith.constant 0 : i32
    return %c0_i32, %c0_i32_0 : i32, i32
  }
  func.func @transform_15(%arg0: i32) -> (i32, i32) {
    %c0_i32 = arith.constant 0 : i32
    %c0_i32_0 = arith.constant 0 : i32
    %c0_i32_1 = arith.constant 0 : i32
    return %c0_i32, %c0_i32_0 : i32, i32
  }
  func.func @transform_16(%arg0: i32) -> (i32, i32) {
    %c0_i32 = arith.constant 0 : i32
    %c0_i32_0 = arith.constant 0 : i32
    %c0_i32_1 = arith.constant 0 : i32
    return %c0_i32, %c0_i32_0 : i32, i32
  }
  func.func @transform_17(%arg0: i32) -> (i32, i32) {
    %c0_i32 = arith.constant 0 : i32
    %c0_i32_0 = arith.constant 0 : i32
    %c0_i32_1 = arith.constant 0 : i32
    return %c0_i32, %c0_i32_0 : i32, i32
  }
  func.func @transform_18(%arg0: i32) -> (i32, i32) {
    %c0_i32 = arith.constant 0 : i32
    %c0_i32_0 = arith.constant 0 : i32
    %c0_i32_1 = arith.constant 0 : i32
    return %c0_i32, %c0_i32_0 : i32, i32
  }
  func.func @transform_19(%arg0: i32) -> (i32, i32) {
    %c0_i32 = arith.constant 0 : i32
    %c0_i32_0 = arith.constant 0 : i32
    %c0_i32_1 = arith.constant 0 : i32
    return %c0_i32, %c0_i32_0 : i32, i32
  }
  func.func @transform_20(%arg0: i32) -> (i32, i32) {
    %c0_i32 = arith.constant 0 : i32
    %c0_i32_0 = arith.constant 0 : i32
    %c0_i32_1 = arith.constant 0 : i32
    return %c0_i32, %c0_i32_0 : i32, i32
  }
  func.func @transform_21(%arg0: i32) -> (i32, i32) {
    %c0_i32 = arith.constant 0 : i32
    %c0_i32_0 = arith.constant 0 : i32
    %c0_i32_1 = arith.constant 0 : i32
    return %c0_i32, %c0_i32_0 : i32, i32
  }
  func.func @transform_22(%arg0: i32) -> (i32, i32) {
    %c0_i32 = arith.constant 0 : i32
    %c0_i32_0 = arith.constant 0 : i32
    %c0_i32_1 = arith.constant 0 : i32
    return %c0_i32, %c0_i32_0 : i32, i32
  }
  func.func @transform_23(%arg0: i32) -> (i32, i32) {
    %c0_i32 = arith.constant 0 : i32
    %c0_i32_0 = arith.constant 0 : i32
    %c0_i32_1 = arith.constant 0 : i32
    return %c0_i32, %c0_i32_0 : i32, i32
  }
  func.func @transform_24(%arg0: i32) -> (i32, i32) {
    %c0_i32 = arith.constant 0 : i32
    %c0_i32_0 = arith.constant 0 : i32
    %c0_i32_1 = arith.constant 0 : i32
    return %c0_i32, %c0_i32_0 : i32, i32
  }
  func.func @transform_25(%arg0: i32) -> (i32, i32) {
    %c0_i32 = arith.constant 0 : i32
    %c0_i32_0 = arith.constant 0 : i32
    return %arg0, %c0_i32 : i32, i32
  }
}

</mosaic_0001>

<llo_original>
// kernel: clasnet_forward.1
$region0: #{clasnet_forward.1}
  #allocation0 [shape = 'u32[]', space=smem, size = 0x4, offset = 0x4, fixed_abs, tag = 'smem constant byte address 0x4 - core index']
  #allocation1 [shape = 'u32[144,128]{1,0:T(1,128)}', space=vmem, size = 0x12000, scoped, tag = 'internal scratch']
  %s0 = inlined_call_operand.vmem [shape: f32[16,32], index: 0, kind: input, shape index: {}]
  %s1 = inlined_call_operand.vmem [shape: bf16[32,128], index: 1, kind: input, shape index: {}]
  %s2 = inlined_call_operand.hbm [shape: f32[1,128], index: 2, kind: input, shape index: {}]
  %s3 = inlined_call_operand.hbm [shape: bf16[128,384], index: 3, kind: input, shape index: {}]
  %s4 = inlined_call_operand.vmem [shape: f32[1,384], index: 4, kind: input, shape index: {}]
  %s5 = inlined_call_operand.hbm [shape: bf16[384,384], index: 5, kind: input, shape index: {}]
  %s6 = inlined_call_operand.vmem [shape: f32[1,384], index: 6, kind: input, shape index: {}]
  %s7 = inlined_call_operand.hbm [shape: bf16[384,512], index: 7, kind: input, shape index: {}]
  %s8 = inlined_call_operand.vmem [shape: f32[1,512], index: 8, kind: input, shape index: {}]
  %s9 = inlined_call_operand.hbm [shape: bf16[512,512], index: 9, kind: input, shape index: {}]
  %s10 = inlined_call_operand.vmem [shape: f32[1,512], index: 10, kind: input, shape index: {}]
  %s11 = inlined_call_operand.hbm [shape: bf16[512,512], index: 11, kind: input, shape index: {}]
  %s12 = inlined_call_operand.vmem [shape: f32[1,512], index: 12, kind: input, shape index: {}]
  %s13 = inlined_call_operand.hbm [shape: bf16[512,384], index: 13, kind: input, shape index: {}]
  %s14 = inlined_call_operand.vmem [shape: f32[1,384], index: 14, kind: input, shape index: {}]
  %s15 = inlined_call_operand.hbm [shape: bf16[384,384], index: 15, kind: input, shape index: {}]
  %s16 = inlined_call_operand.vmem [shape: f32[1,384], index: 16, kind: input, shape index: {}]
  %s17 = inlined_call_operand.hbm [shape: bf16[384,256], index: 17, kind: input, shape index: {}]
  %s18 = inlined_call_operand.vmem [shape: f32[1,256], index: 18, kind: input, shape index: {}]
  %s19 = inlined_call_operand.hbm [shape: bf16[256,128], index: 19, kind: input, shape index: {}]
  %s20 = inlined_call_operand.vmem [shape: f32[1,128], index: 20, kind: input, shape index: {}]
  %s21 = inlined_call_operand.hbm [shape: bf16[128,128], index: 21, kind: input, shape index: {}]
  %s22 = inlined_call_operand.vmem [shape: f32[1,128], index: 22, kind: input, shape index: {}]
  %s23 = inlined_call_operand.hbm [shape: bf16[128,128], index: 23, kind: input, shape index: {}]
  %s24 = inlined_call_operand.vmem [shape: f32[1,128], index: 24, kind: input, shape index: {}]
  %s25 = inlined_call_operand.vmem [shape: f32[16,128], index: 25, kind: output, shape index: {}]
  %s26 = sld [smem:[#allocation0]]
  $region158: #{clasnet_forward.1} parent=0
    _
  %s28 = ssub.s32 1, %s26
  %s29 = scalar_select 0, %s28, %s26
  $region1: #{clasnet_forward.1} parent=0
    #allocation2 [shape = 'u8[512]{0}', space=vmem, size = 0x400, scoped, tag = 'input window, operand 2, single buffered']
    #allocation3 [shape = 's32[1]{0}', space=sflag, size = 0x4, scoped, tag = 'scoped memory for clasnet_forward.1']
    #allocation4 [shape = 'u8[98304]{0}', space=vmem, size = 0x18000, scoped, tag = 'input window, operand 3, single buffered']
    #allocation5 [shape = 's32[1]{0}', space=sflag, size = 0x4, scoped, tag = 'scoped memory for clasnet_forward.1']
    #allocation6 [shape = 'u8[294912]{0}', space=vmem, size = 0x48000, scoped, tag = 'input window, operand 5, single buffered']
    #allocation7 [shape = 'u8[393216]{0}', space=vmem, size = 0x60000, scoped, tag = 'input window, operand 7, single buffered']
    #allocation8 [shape = 's32[1]{0}', space=sflag, size = 0x4, scoped, tag = 'scoped memory for clasnet_forward.1']
    #allocation9 [shape = 'u8[524288]{0}', space=vmem, size = 0x80000, scoped, tag = 'input window, operand 9, single buffered']
    #allocation10 [shape = 'u8[524288]{0}', space=vmem, size = 0x80000, scoped, tag = 'input window, operand 11, single buffered']
    #allocation11 [shape = 's32[1]{0}', space=sflag, size = 0x4, scoped, tag = 'scoped memory for clasnet_forward.1']
    #allocation12 [shape = 'u8[393216]{0}', space=vmem, size = 0x60000, scoped, tag = 'input window, operand 13, single buffered']
    #allocation13 [shape = 'u8[294912]{0}', space=vmem, size = 0x48000, scoped, tag = 'input window, operand 15, single buffered']
    #allocation14 [shape = 's32[1]{0}', space=sflag, size = 0x4, scoped, tag = 'scoped memory for clasnet_forward.1']
    #allocation15 [shape = 'u8[196608]{0}', space=vmem, size = 0x30000, scoped, tag = 'input window, operand 17, single buffered']
    #allocation16 [shape = 'u8[65536]{0}', space=vmem, size = 0x10000, scoped, tag = 'input window, operand 19, single buffered']
    #allocation17 [shape = 's32[1]{0}', space=sflag, size = 0x4, scoped, tag = 'scoped memory for clasnet_forward.1']
    #allocation18 [shape = 'u8[32768]{0}', space=vmem, size = 0x8000, scoped, tag = 'input window, operand 21, single buffered']
    #allocation19 [shape = 'u8[32768]{0}', space=vmem, size = 0x8000, scoped, tag = 'input window, operand 23, single buffered']
    #allocation20 [shape = 's32[1]{0}', space=sflag, size = 0x4, scoped, tag = 'scoped memory for clasnet_forward.1']
    %30 = vsyncpa [#allocation3], 0
    %31 = vsyncpa [#allocation5], 0
    %32 = vsyncpa [#allocation8], 0
    %33 = vsyncpa [#allocation11], 0
    %34 = vsyncpa [#allocation14], 0
    %35 = vsyncpa [#allocation17], 0
    %36 = vsyncpa [#allocation20], 0
    // Predicated region
    $region2: #{clasnet_forward.1} parent=1 // pred_check
      _
    $region3: #{clasnet_forward.1} parent=1 // pred_check_branch
      %38 = sbr.rel (0) target = $region5
    $region4: #{clasnet_forward.1} parent=1 // pred_region
      _
    $region5: #{clasnet_forward.1} parent=1 // pred_fallthru
      _
    // Predicated region
    $region6: #{clasnet_forward.1} parent=1 // pred_check
      _
    $region7: #{clasnet_forward.1} parent=1 // pred_check_branch
      %40 = sbr.rel (0) target = $region9
    $region8: #{clasnet_forward.1} parent=1 // pred_region
      _
    $region9: #{clasnet_forward.1} parent=1 // pred_fallthru
      _
    // Predicated region
    $region10: #{clasnet_forward.1} parent=1 // pred_check
      _
    $region11: #{clasnet_forward.1} parent=1 // pred_check_branch
      %42 = sbr.rel (0) target = $region13
    $region12: #{clasnet_forward.1} parent=1 // pred_region
      %s44 = ssub.s32 16, 16
      %45 = vsyncadd [#allocation3], %s44
      %s47 = sshll.u32 [#allocation2], 4
      %s48 = int_to_ptr.vmem [resolvable:$true] %s47
      %50 = dma.hbm_to_vmem [thread:$0]  %s2, 16, %s48, [#allocation3]
    $region13: #{clasnet_forward.1} parent=1 // pred_fallthru
      _
    // Predicated region
    $region14: #{clasnet_forward.1} parent=1 // pred_check
      _
    $region15: #{clasnet_forward.1} parent=1 // pred_check_branch
      %52 = sbr.rel (0) target = $region17
    $region16: #{clasnet_forward.1} parent=1 // pred_region
      %s54 = ssub.s32 3072, 3072
      %55 = vsyncadd [#allocation5], %s54
      %s56 = sshll.u32 [#allocation4], 4
      %s57 = int_to_ptr.vmem [resolvable:$true] %s56
      %62 = dma.hbm_to_vmem [thread:$0]  %s3, 3072, %s57, [#allocation5], 192, 192, 12
    $region17: #{clasnet_forward.1} parent=1 // pred_fallthru
      _
    // Predicated region
    $region18: #{clasnet_forward.1} parent=1 // pred_check
      _
    $region19: #{clasnet_forward.1} parent=1 // pred_check_branch
      %64 = sbr.rel (0) target = $region21
    $region20: #{clasnet_forward.1} parent=1 // pred_region
      _
    $region21: #{clasnet_forward.1} parent=1 // pred_fallthru
      _
    // Predicated region
    $region22: #{clasnet_forward.1} parent=1 // pred_check
      _
    $region23: #{clasnet_forward.1} parent=1 // pred_check_branch
      %66 = sbr.rel (0) target = $region25
    $region24: #{clasnet_forward.1} parent=1 // pred_region
      %s68 = ssub.s32 9216, 9216
      %69 = vsyncadd [#allocation5], %s68
      %s70 = sshll.u32 [#allocation6], 4
      %s71 = int_to_ptr.vmem [resolvable:$true] %s70
      %76 = dma.hbm_to_vmem [thread:$0]  %s5, 9216, %s71, [#allocation5], 192, 192, 12
    $region25: #{clasnet_forward.1} parent=1 // pred_fallthru
      _
    // Predicated region
    $region26: #{clasnet_forward.1} parent=1 // pred_check
      _
    $region27: #{clasnet_forward.1} parent=1 // pred_check_branch
      %78 = sbr.rel (0) target = $region29
    $region28: #{clasnet_forward.1} parent=1 // pred_region
      _
    $region29: #{clasnet_forward.1} parent=1 // pred_fallthru
      _
    // Predicated region
    $region30: #{clasnet_forward.1} parent=1 // pred_check
      _
    $region31: #{clasnet_forward.1} parent=1 // pred_check_branch
      %80 = sbr.rel (0) target = $region33
    $region32: #{clasnet_forward.1} parent=1 // pred_region
      %s82 = ssub.s32 12288, 12288
      %83 = vsyncadd [#allocation8], %s82
      %s84 = sshll.u32 [#allocation7], 4
      %s85 = int_to_ptr.vmem [resolvable:$true] %s84
      %90 = dma.hbm_to_vmem [thread:$0]  %s7, 12288, %s85, [#allocation8], 256, 256, 16
    $region33: #{clasnet_forward.1} parent=1 // pred_fallthru
      _
    // Predicated region
    $region34: #{clasnet_forward.1} parent=1 // pred_check
      _
    $region35: #{clasnet_forward.1} parent=1 // pred_check_branch
      %92 = sbr.rel (0) target = $region37
    $region36: #{clasnet_forward.1} parent=1 // pred_region
      _
    $region37: #{clasnet_forward.1} parent=1 // pred_fallthru
      _
    // Predicated region
    $region38: #{clasnet_forward.1} parent=1 // pred_check
      _
    $region39: #{clasnet_forward.1} parent=1 // pred_check_branch
      %94 = sbr.rel (0) target = $region41
    $region40: #{clasnet_forward.1} parent=1 // pred_region
      %s96 = ssub.s32 16384, 16384
      %97 = vsyncadd [#allocation8], %s96
      %s98 = sshll.u32 [#allocation9], 4
      %s99 = int_to_ptr.vmem [resolvable:$true] %s98
      %104 = dma.hbm_to_vmem [thread:$0]  %s9, 16384, %s99, [#allocation8], 256, 256, 16
    $region41: #{clasnet_forward.1} parent=1 // pred_fallthru
      _
    // Predicated region
    $region42: #{clasnet_forward.1} parent=1 // pred_check
      _
    $region43: #{clasnet_forward.1} parent=1 // pred_check_branch
      %106 = sbr.rel (0) target = $region45
    $region44: #{clasnet_forward.1} parent=1 // pred_region
      _
    $region45: #{clasnet_forward.1} parent=1 // pred_fallthru
      _
    // Predicated region
    $region46: #{clasnet_forward.1} parent=1 // pred_check
      _
    $region47: #{clasnet_forward.1} parent=1 // pred_check_branch
      %108 = sbr.rel (0) target = $region49
    $region48: #{clasnet_forward.1} parent=1 // pred_region
      %s110 = ssub.s32 16384, 16384
      %111 = vsyncadd [#allocation11], %s110
      %s112 = sshll.u32 [#allocation10], 4
      %s113 = int_to_ptr.vmem [resolvable:$true] %s112
      %118 = dma.hbm_to_vmem [thread:$0]  %s11, 16384, %s113, [#allocation11], 256, 256, 16
    $region49: #{clasnet_forward.1} parent=1 // pred_fallthru
      _
    // Predicated region
    $region50: #{clasnet_forward.1} parent=1 // pred_check
      _
    $region51: #{clasnet_forward.1} parent=1 // pred_check_branch
      %120 = sbr.rel (0) target = $region53
    $region52: #{clasnet_forward.1} parent=1 // pred_region
      _
    $region53: #{clasnet_forward.1} parent=1 // pred_fallthru
      _
    // Predicated region
    $region54: #{clasnet_forward.1} parent=1 // pred_check
      _
    $region55: #{clasnet_forward.1} parent=1 // pred_check_branch
      %122 = sbr.rel (0) target = $region57
    $region56: #{clasnet_forward.1} parent=1 // pred_region
      %s124 = ssub.s32 12288, 12288
      %125 = vsyncadd [#allocation11], %s124
      %s126 = sshll.u32 [#allocation12], 4
      %s127 = int_to_ptr.vmem [resolvable:$true] %s126
      %132 = dma.hbm_to_vmem [thread:$0]  %s13, 12288, %s127, [#allocation11], 192, 192, 12
    $region57: #{clasnet_forward.1} parent=1 // pred_fallthru
      _
    // Predicated region
    $region58: #{clasnet_forward.1} parent=1 // pred_check
      _
    $region59: #{clasnet_forward.1} parent=1 // pred_check_branch
      %134 = sbr.rel (0) target = $region61
    $region60: #{clasnet_forward.1} parent=1 // pred_region
      _
    $region61: #{clasnet_forward.1} parent=1 // pred_fallthru
      _
    // Predicated region
    $region62: #{clasnet_forward.1} parent=1 // pred_check
      _
    $region63: #{clasnet_forward.1} parent=1 // pred_check_branch
      %136 = sbr.rel (0) target = $region65
    $region64: #{clasnet_forward.1} parent=1 // pred_region
      %s138 = ssub.s32 9216, 9216
      %139 = vsyncadd [#allocation14], %s138
      %s140 = sshll.u32 [#allocation13], 4
      %s141 = int_to_ptr.vmem [resolvable:$true] %s140
      %146 = dma.hbm_to_vmem [thread:$0]  %s15, 9216, %s141, [#allocation14], 192, 192, 12
    $region65: #{clasnet_forward.1} parent=1 // pred_fallthru
      _
    // Predicated region
    $region66: #{clasnet_forward.1} parent=1 // pred_check
      _
    $region67: #{clasnet_forward.1} parent=1 // pred_check_branch
      %148 = sbr.rel (0) target = $region69
    $region68: #{clasnet_forward.1} parent=1 // pred_region
      _
    $region69: #{clasnet_forward.1} parent=1 // pred_fallthru
      _
    // Predicated region
    $region70: #{clasnet_forward.1} parent=1 // pred_check
      _
    $region71: #{clasnet_forward.1} parent=1 // pred_check_branch
      %150 = sbr.rel (0) target = $region73
    $region72: #{clasnet_forward.1} parent=1 // pred_region
      %s152 = ssub.s32 6144, 6144
      %153 = vsyncadd [#allocation14], %s152
      %s154 = sshll.u32 [#allocation15], 4
      %s155 = int_to_ptr.vmem [resolvable:$true] %s154
      %160 = dma.hbm_to_vmem [thread:$0]  %s17, 6144, %s155, [#allocation14], 128, 128, 8
    $region73: #{clasnet_forward.1} parent=1 // pred_fallthru
      _
    // Predicated region
    $region74: #{clasnet_forward.1} parent=1 // pred_check
      _
    $region75: #{clasnet_forward.1} parent=1 // pred_check_branch
      %162 = sbr.rel (0) target = $region77
    $region76: #{clasnet_forward.1} parent=1 // pred_region
      _
    $region77: #{clasnet_forward.1} parent=1 // pred_fallthru
      _
    // Predicated region
    $region78: #{clasnet_forward.1} parent=1 // pred_check
      _
    $region79: #{clasnet_forward.1} parent=1 // pred_check_branch
      %164 = sbr.rel (0) target = $region81
    $region80: #{clasnet_forward.1} parent=1 // pred_region
      %s166 = ssub.s32 2048, 2048
      %167 = vsyncadd [#allocation17], %s166
      %s168 = sshll.u32 [#allocation16], 4
      %s169 = int_to_ptr.vmem [resolvable:$true] %s168
      %174 = dma.hbm_to_vmem [thread:$0]  %s19, 2048, %s169, [#allocation17], 64, 64, 4
    $region81: #{clasnet_forward.1} parent=1 // pred_fallthru
      _
    // Predicated region
    $region82: #{clasnet_forward.1} parent=1 // pred_check
      _
    $region83: #{clasnet_forward.1} parent=1 // pred_check_branch
      %176 = sbr.rel (0) target = $region85
    $region84: #{clasnet_forward.1} parent=1 // pred_region
      _
    $region85: #{clasnet_forward.1} parent=1 // pred_fallthru
      _
    // Predicated region
    $region86: #{clasnet_forward.1} parent=1 // pred_check
      _
    $region87: #{clasnet_forward.1} parent=1 // pred_check_branch
      %178 = sbr.rel (0) target = $region89
    $region88: #{clasnet_forward.1} parent=1 // pred_region
      %s180 = ssub.s32 1024, 1024
      %181 = vsyncadd [#allocation17], %s180
      %s182 = sshll.u32 [#allocation18], 4
      %s183 = int_to_ptr.vmem [resolvable:$true] %s182
      %188 = dma.hbm_to_vmem [thread:$0]  %s21, 1024, %s183, [#allocation17], 64, 64, 4
    $region89: #{clasnet_forward.1} parent=1 // pred_fallthru
      _
    // Predicated region
    $region90: #{clasnet_forward.1} parent=1 // pred_check
      _
    $region91: #{clasnet_forward.1} parent=1 // pred_check_branch
      %190 = sbr.rel (0) target = $region93
    $region92: #{clasnet_forward.1} parent=1 // pred_region
      _
    $region93: #{clasnet_forward.1} parent=1 // pred_fallthru
      _
    // Predicated region
    $region94: #{clasnet_forward.1} parent=1 // pred_check
      _
    $region95: #{clasnet_forward.1} parent=1 // pred_check_branch
      %192 = sbr.rel (0) target = $region97
    $region96: #{clasnet_forward.1} parent=1 // pred_region
      %s194 = ssub.s32 1024, 1024
      %195 = vsyncadd [#allocation20], %s194
      %s196 = sshll.u32 [#allocation19], 4
      %s197 = int_to_ptr.vmem [resolvable:$true] %s196
      %202 = dma.hbm_to_vmem [thread:$0]  %s23, 1024, %s197, [#allocation20], 64, 64, 4
    $region97: #{clasnet_forward.1} parent=1 // pred_fallthru
      _
    // Predicated region
    $region98: #{clasnet_forward.1} parent=1 // pred_check
      _
    $region99: #{clasnet_forward.1} parent=1 // pred_check_branch
      %204 = sbr.rel (0) target = $region101
    $region100: #{clasnet_forward.1} parent=1 // pred_region
      _
    $region101: #{clasnet_forward.1} parent=1 // pred_fallthru
      _
    // Predicated region
    $region102: #{clasnet_forward.1} parent=1 // pred_check
      _
    $region103: #{clasnet_forward.1} parent=1 // pred_check_branch
      %206 = sbr.rel (0) target = $region105
    $region104: #{clasnet_forward.1} parent=1 // pred_region
      %207 = dma.done [#allocation3], 16
    $region105: #{clasnet_forward.1} parent=1 // pred_fallthru
      _
    // Predicated region
    $region106: #{clasnet_forward.1} parent=1 // pred_check
      _
    $region107: #{clasnet_forward.1} parent=1 // pred_check_branch
      %209 = sbr.rel (0) target = $region109
    $region108: #{clasnet_forward.1} parent=1 // pred_region
      %210 = dma.done [#allocation5], 3072
    $region109: #{clasnet_forward.1} parent=1 // pred_fallthru
      _
    // Predicated region
    $region110: #{clasnet_forward.1} parent=1 // pred_check
      _
    $region111: #{clasnet_forward.1} parent=1 // pred_check_branch
      %212 = sbr.rel (0) target = $region113
    $region112: #{clasnet_forward.1} parent=1 // pred_region
      %213 = dma.done [#allocation5], 9216
    $region113: #{clasnet_forward.1} parent=1 // pred_fallthru
      _
    // Predicated region
    $region114: #{clasnet_forward.1} parent=1 // pred_check
      _
    $region115: #{clasnet_forward.1} parent=1 // pred_check_branch
      %215 = sbr.rel (0) target = $region117
    $region116: #{clasnet_forward.1} parent=1 // pred_region
      %216 = dma.done [#allocation8], 12288
    $region117: #{clasnet_forward.1} parent=1 // pred_fallthru
      _
    // Predicated region
    $region118: #{clasnet_forward.1} parent=1 // pred_check
      _
    $region119: #{clasnet_forward.1} parent=1 // pred_check_branch
      %218 = sbr.rel (0) target = $region121
    $region120: #{clasnet_forward.1} parent=1 // pred_region
      %219 = dma.done [#allocation8], 16384
    $region121: #{clasnet_forward.1} parent=1 // pred_fallthru
      _
    // Predicated region
    $region122: #{clasnet_forward.1} parent=1 // pred_check
      _
    $region123: #{clasnet_forward.1} parent=1 // pred_check_branch
      %221 = sbr.rel (0) target = $region125
    $region124: #{clasnet_forward.1} parent=1 // pred_region
      %222 = dma.done [#allocation11], 16384
    $region125: #{clasnet_forward.1} parent=1 // pred_fallthru
      _
    // Predicated region
    $region126: #{clasnet_forward.1} parent=1 // pred_check
      _
    $region127: #{clasnet_forward.1} parent=1 // pred_check_branch
      %224 = sbr.rel (0) target = $region129
    $region128: #{clasnet_forward.1} parent=1 // pred_region
      %225 = dma.done [#allocation11], 12288
    $region129: #{clasnet_forward.1} parent=1 // pred_fallthru
      _
    // Predicated region
    $region130: #{clasnet_forward.1} parent=1 // pred_check
      _
    $region131: #{clasnet_forward.1} parent=1 // pred_check_branch
      %227 = sbr.rel (0) target = $region133
    $region132: #{clasnet_forward.1} parent=1 // pred_region
      %228 = dma.done [#allocation14], 9216
    $region133: #{clasnet_forward.1} parent=1 // pred_fallthru
      _
    // Predicated region
    $region134: #{clasnet_forward.1} parent=1 // pred_check
      _
    $region135: #{clasnet_forward.1} parent=1 // pred_check_branch
      %230 = sbr.rel (0) target = $region137
    $region136: #{clasnet_forward.1} parent=1 // pred_region
      %231 = dma.done [#allocation14], 6144
    $region137: #{clasnet_forward.1} parent=1 // pred_fallthru
      _
    // Predicated region
    $region138: #{clasnet_forward.1} parent=1 // pred_check
      _
    $region139: #{clasnet_forward.1} parent=1 // pred_check_branch
      %233 = sbr.rel (0) target = $region141
    $region140: #{clasnet_forward.1} parent=1 // pred_region
      %234 = dma.done [#allocation17], 2048
    $region141: #{clasnet_forward.1} parent=1 // pred_fallthru
      _
    // Predicated region
    $region142: #{clasnet_forward.1} parent=1 // pred_check
      _
    $region143: #{clasnet_forward.1} parent=1 // pred_check_branch
      %236 = sbr.rel (0) target = $region145
    $region144: #{clasnet_forward.1} parent=1 // pred_region
      %237 = dma.done [#allocation17], 1024
    $region145: #{clasnet_forward.1} parent=1 // pred_fallthru
      _
    // Predicated region
    $region146: #{clasnet_forward.1} parent=1 // pred_check
      _
    $region147: #{clasnet_forward.1} parent=1 // pred_check_branch
      %239 = sbr.rel (0) target = $region149
    $region148: #{clasnet_forward.1} parent=1 // pred_region
      %240 = dma.done [#allocation20], 1024
    $region149: #{clasnet_forward.1} parent=1 // pred_fallthru
      _
    %v244 = vld [vmem:[%s0] sm:$0xff]
    %v245 = vld [vmem:[%s0 + $0x8] sm:$0xff]
    %v246 = vpack.c.bf16 %v245, %v244
    %v247 = vld [vmem:[%s1] sm:$0xf]
    %v248 = vld [vmem:[%s1 + $0x4] sm:$0xf]
    %v249 = vld [vmem:[%s1 + $0x8] sm:$0xf]
    %v250 = vld [vmem:[%s1 + $0xc] sm:$0xf]
    %v251 = vld [vmem:[#allocation2] sm:$0x1]
    %v253 = vlaneseq
    %v254 = vshrl.u32 %v253, 7
    %v255 = vsub.s32 0, %v254
    %v256 = vrot.slane %v251, %v255
    %v262 = vunpack.c.l.b16 %v247
    %v263 = vunpack.c.l.b16 %v248
    %v264 = vunpack.c.l.b16 %v249
    %v265 = vunpack.c.l.b16 %v250
    %v266 = vpack.c.b16 %v263, %v262
    %v267 = vpack.c.b16 %v265, %v264
    %vm270 = vcmask 261120
    %v272 = vsel %vm270, %v246, 0
    %274 = vmatprep.subr.bf16.mxu0 0
    %275 = vmatpush1.bf16.msra.mxu0 0
    %276 = vmatprep.subr.bf16.mxu0 0
    %277 = vmatpush1.bf16.msra.mxu0 0
    %278 = vmatprep.subr.bf16.mxu0 0
    %279 = vmatpush1.bf16.msra.mxu0 0
    %280 = vmatprep.subr.bf16.mxu0 0
    %281 = vmatpush1.bf16.msra.mxu0 0
    %282 = vmatprep.subr.bf16.mxu0 0
    %283 = vmatpush1.bf16.msra.mxu0 0
    %284 = vmatprep.subr.bf16.mxu0 0
    %285 = vmatpush1.bf16.msra.mxu0 0
    %286 = vmatprep.subr.bf16.mxu0 0
    %287 = vmatpush1.bf16.msra.mxu0 %v267
    %288 = vmatprep.subr.bf16.mxu0 0
    %289 = vmatpush1.bf16.msra.mxu0 %v266
    %290 = vmatprep.subr.bf16.mxu0 0
    %291 = vmatpush2.bf16.msra.mxu0 0
    %292 = vmatprep.subr.bf16.mxu0 0
    %293 = vmatpush2.bf16.msra.mxu0 0
    %294 = vmatprep.subr.bf16.mxu0 0
    %295 = vmatpush2.bf16.msra.mxu0 0
    %296 = vmatprep.subr.bf16.mxu0 0
    %297 = vmatpush2.bf16.msra.mxu0 0
    %298 = vmatprep.subr.bf16.mxu0 0
    %299 = vmatpush2.bf16.msra.mxu0 0
    %300 = vmatprep.subr.bf16.mxu0 0
    %301 = vmatpush2.bf16.msra.mxu0 0
    %302 = vmatprep.subr.bf16.mxu0 0
    %303 = vmatpush2.bf16.msra.mxu0 0
    %304 = vmatprep.subr.bf16.mxu0 0
    %305 = vmatpush2.bf16.msra.mxu0 0
    %306 = vmatprep.mubr.bf16.mxu0 0
    %307 = vmatmul.mubr.bf16.gmra.mxu0 %v272
    %v308 = vpop.f32.mrf.mxu0
    %v309 = vadd.f32 %v256, %v308
    %v310 = vpop.f32.mrf.mxu0
    %v311 = vpop.f32.mrf.mxu0
    %v312 = vadd.f32 %v256, %v311
    %v313 = vpop.f32.mrf.mxu0
    %314 = vdwg.mxu0
    %v315 = vpack.c.bf16 %v312, %v309
    %v316 = vmul.bf16 %v315, 1056980736
    %v317 = vtanh.bf16.pop %v316
    %v318 = vmul.bf16 %v317, 1056980736
    %v319 = vadd.bf16 %v318, 1056980736
    %v320 = vld [vmem:[#allocation4] sm:$0xff]
    %v321 = vld [vmem:[#allocation4 + $0x8] sm:$0xf]
    %v322 = vld [vmem:[#allocation4 + $0xc] sm:$0xff]
    %v323 = vld [vmem:[#allocation4 + $0x14] sm:$0xf]
    %v324 = vld [vmem:[#allocation4 + $0x18] sm:$0xff]
    %v325 = vld [vmem:[#allocation4 + $0x20] sm:$0xf]
    %v326 = vld [vmem:[#allocation4 + $0x24] sm:$0xff]
    %v327 = vld [vmem:[#allocation4 + $0x2c] sm:$0xf]
    %v328 = vld [vmem:[#allocation4 + $0x30] sm:$0xff]
    %v329 = vld [vmem:[#allocation4 + $0x38] sm:$0xf]
    %v330 = vld [vmem:[#allocation4 + $0x3c] sm:$0xff]
    %v331 = vld [vmem:[#allocation4 + $0x44] sm:$0xf]
    %v332 = vld [vmem:[#allocation4 + $0x48] sm:$0xff]
    %v333 = vld [vmem:[#allocation4 + $0x50] sm:$0xf]
    %v334 = vld [vmem:[#allocation4 + $0x54] sm:$0xff]
    %v335 = vld [vmem:[#allocation4 + $0x5c] sm:$0xf]
    %v336 = vld [vmem:[#allocation4 + $0x60] sm:$0xff]
    %v337 = vld [vmem:[#allocation4 + $0x68] sm:$0xf]
    %v338 = vld [vmem:[#allocation4 + $0x6c] sm:$0xff]
    %v339 = vld [vmem:[#allocation4 + $0x74] sm:$0xf]
    %v340 = vld [vmem:[#allocation4 + $0x78] sm:$0xff]
    %v341 = vld [vmem:[#allocation4 + $0x80] sm:$0xf]
    %v342 = vld [vmem:[#allocation4 + $0x84] sm:$0xff]
    %v343 = vld [vmem:[#allocation4 + $0x8c] sm:$0xf]
    %v344 = vld [vmem:[#allocation4 + $0x90] sm:$0xff]
    %v345 = vld [vmem:[#allocation4 + $0x98] sm:$0xf]
    %v346 = vld [vmem:[#allocation4 + $0x9c] sm:$0xff]
    %v347 = vld [vmem:[#allocation4 + $0xa4] sm:$0xf]
    %v348 = vld [vmem:[#allocation4 + $0xa8] sm:$0xff]
    %v349 = vld [vmem:[#allocation4 + $0xb0] sm:$0xf]
    %v350 = vld [vmem:[#allocation4 + $0xb4] sm:$0xff]
    %v351 = vld [vmem:[#allocation4 + $0xbc] sm:$0xf]
    %v352 = vld [vmem:[%s4] sm:$0x7]
    %v354 = vlaneseq
    %v355 = vshrl.u32 %v354, 7
    %v356 = vsub.s32 0, %v355
    %v357 = vrot.slane %v352, %v356
    %v358 = vlaneseq
    %v359 = vshrl.u32 %v358, 7
    %v360 = vsub.s32 1, %v359
    %v361 = vrot.slane %v352, %v360
    %v362 = vlaneseq
    %v363 = vshrl.u32 %v362, 7
    %v364 = vsub.s32 2, %v363
    %v365 = vrot.slane %v352, %v364
    %v401 = vunpack.c.l.b16 %v320
    %v402 = vunpack.c.h.b16 %v320
    %v403 = vunpack.c.l.b16 %v321
    %v404 = vunpack.c.l.b16 %v322
    %v405 = vunpack.c.h.b16 %v322
    %v406 = vunpack.c.l.b16 %v323
    %v407 = vunpack.c.l.b16 %v324
    %v408 = vunpack.c.h.b16 %v324
    %v409 = vunpack.c.l.b16 %v325
    %v410 = vunpack.c.l.b16 %v326
    %v411 = vunpack.c.h.b16 %v326
    %v412 = vunpack.c.l.b16 %v327
    %v413 = vunpack.c.l.b16 %v328
    %v414 = vunpack.c.h.b16 %v328
    %v415 = vunpack.c.l.b16 %v329
    %v416 = vunpack.c.l.b16 %v330
    %v417 = vunpack.c.h.b16 %v330
    %v418 = vunpack.c.l.b16 %v331
    %v419 = vunpack.c.l.b16 %v332
    %v420 = vunpack.c.h.b16 %v332
    %v421 = vunpack.c.l.b16 %v333
    %v422 = vunpack.c.l.b16 %v334
    %v423 = vunpack.c.h.b16 %v334
    %v424 = vunpack.c.l.b16 %v335
    %v425 = vunpack.c.l.b16 %v336
    %v426 = vunpack.c.h.b16 %v336
    %v427 = vunpack.c.l.b16 %v337
    %v428 = vunpack.c.l.b16 %v338
    %v429 = vunpack.c.h.b16 %v338
    %v430 = vunpack.c.l.b16 %v339
    %v431 = vunpack.c.l.b16 %v340
    %v432 = vunpack.c.h.b16 %v340
    %v433 = vunpack.c.l.b16 %v341
    %v434 = vunpack.c.l.b16 %v342
    %v435 = vunpack.c.h.b16 %v342
    %v436 = vunpack.c.l.b16 %v343
    %v437 = vunpack.c.l.b16 %v344
    %v438 = vunpack.c.h.b16 %v344
    %v439 = vunpack.c.l.b16 %v345
    %v440 = vunpack.c.l.b16 %v346
    %v441 = vunpack.c.h.b16 %v346
    %v442 = vunpack.c.l.b16 %v347
    %v443 = vunpack.c.l.b16 %v348
    %v444 = vunpack.c.h.b16 %v348
    %v445 = vunpack.c.l.b16 %v349
    %v446 = vunpack.c.l.b16 %v350
    %v447 = vunpack.c.h.b16 %v350
    %v448 = vunpack.c.l.b16 %v351
    %v449 = vpack.c.b16 %v404, %v401
    %v450 = vpack.c.b16 %v405, %v402
    %v451 = vpack.c.b16 %v406, %v403
    %v452 = vpack.c.b16 %v410, %v407
    %v453 = vpack.c.b16 %v411, %v408
    %v454 = vpack.c.b16 %v412, %v409
    %v455 = vpack.c.b16 %v416, %v413
    %v456 = vpack.c.b16 %v417, %v414
    %v457 = vpack.c.b16 %v418, %v415
    %v458 = vpack.c.b16 %v422, %v419
    %v459 = vpack.c.b16 %v423, %v420
    %v460 = vpack.c.b16 %v424, %v421
    %v461 = vpack.c.b16 %v428, %v425
    %v462 = vpack.c.b16 %v429, %v426
    %v463 = vpack.c.b16 %v430, %v427
    %v464 = vpack.c.b16 %v434, %v431
    %v465 = vpack.c.b16 %v435, %v432
    %v466 = vpack.c.b16 %v436, %v433
    %v467 = vpack.c.b16 %v440, %v437
    %v468 = vpack.c.b16 %v441, %v438
    %v469 = vpack.c.b16 %v442, %v439
    %v470 = vpack.c.b16 %v446, %v443
    %v471 = vpack.c.b16 %v447, %v444
    %v472 = vpack.c.b16 %v448, %v445
    %497 = vmatprep.subr.bf16.mxu0 %v471
    %498 = vmatpush1.bf16.msra.mxu0 %v470
    %499 = vmatprep.subr.bf16.mxu0 %v468
    %500 = vmatpush1.bf16.msra.mxu0 %v467
    %501 = vmatprep.subr.bf16.mxu0 %v465
    %502 = vmatpush1.bf16.msra.mxu0 %v464
    %503 = vmatprep.subr.bf16.mxu0 %v462
    %504 = vmatpush1.bf16.msra.mxu0 %v461
    %505 = vmatprep.subr.bf16.mxu0 %v459
    %506 = vmatpush1.bf16.msra.mxu0 %v458
    %507 = vmatprep.subr.bf16.mxu0 %v456
    %508 = vmatpush1.bf16.msra.mxu0 %v455
    %509 = vmatprep.subr.bf16.mxu0 %v453
    %510 = vmatpush1.bf16.msra.mxu0 %v452
    %511 = vmatprep.subr.bf16.mxu0 %v450
    %512 = vmatpush1.bf16.msra.mxu0 %v449
    %513 = vmatprep.subr.bf16.mxu0 0
    %514 = vmatpush2.bf16.msra.mxu0 0
    %515 = vmatprep.subr.bf16.mxu0 0
    %516 = vmatpush2.bf16.msra.mxu0 0
    %517 = vmatprep.subr.bf16.mxu0 0
    %518 = vmatpush2.bf16.msra.mxu0 0
    %519 = vmatprep.subr.bf16.mxu0 0
    %520 = vmatpush2.bf16.msra.mxu0 0
    %521 = vmatprep.subr.bf16.mxu0 0
    %522 = vmatpush2.bf16.msra.mxu0 0
    %523 = vmatprep.subr.bf16.mxu0 0
    %524 = vmatpush2.bf16.msra.mxu0 0
    %525 = vmatprep.subr.bf16.mxu0 0
    %526 = vmatpush2.bf16.msra.mxu0 0
    %527 = vmatprep.subr.bf16.mxu0 0
    %528 = vmatpush2.bf16.msra.mxu0 0
    %529 = vmatprep.mubr.bf16.mxu0 0
    %530 = vmatmul.mubr.bf16.gmra.mxu0 %v319
    %v531 = vpop.f32.mrf.mxu0
    %v532 = vadd.f32 %v357, %v531
    %v533 = vpop.f32.mrf.mxu0
    %v534 = vadd.f32 %v361, %v533
    %v535 = vpop.f32.mrf.mxu0
    %v536 = vadd.f32 %v357, %v535
    %v537 = vpop.f32.mrf.mxu0
    %v538 = vadd.f32 %v361, %v537
    %539 = vdwg.mxu0
    %540 = vmatprep.subr.bf16.mxu0 0
    %541 = vmatpush1.bf16.msra.mxu0 %v472
    %542 = vmatprep.subr.bf16.mxu0 0
    %543 = vmatpush1.bf16.msra.mxu0 %v469
    %544 = vmatprep.subr.bf16.mxu0 0
    %545 = vmatpush1.bf16.msra.mxu0 %v466
    %546 = vmatprep.subr.bf16.mxu0 0
    %547 = vmatpush1.bf16.msra.mxu0 %v463
    %548 = vmatprep.subr.bf16.mxu0 0
    %549 = vmatpush1.bf16.msra.mxu0 %v460
    %550 = vmatprep.subr.bf16.mxu0 0
    %551 = vmatpush1.bf16.msra.mxu0 %v457
    %552 = vmatprep.subr.bf16.mxu0 0
    %553 = vmatpush1.bf16.msra.mxu0 %v454
    %554 = vmatprep.subr.bf16.mxu0 0
    %555 = vmatpush1.bf16.msra.mxu0 %v451
    %556 = vmatprep.subr.bf16.mxu0 0
    %557 = vmatpush2.bf16.msra.mxu0 0
    %558 = vmatprep.subr.bf16.mxu0 0
    %559 = vmatpush2.bf16.msra.mxu0 0
    %560 = vmatprep.subr.bf16.mxu0 0
    %561 = vmatpush2.bf16.msra.mxu0 0
    %562 = vmatprep.subr.bf16.mxu0 0
    %563 = vmatpush2.bf16.msra.mxu0 0
    %564 = vmatprep.subr.bf16.mxu0 0
    %565 = vmatpush2.bf16.msra.mxu0 0
    %566 = vmatprep.subr.bf16.mxu0 0
    %567 = vmatpush2.bf16.msra.mxu0 0
    %568 = vmatprep.subr.bf16.mxu0 0
    %569 = vmatpush2.bf16.msra.mxu0 0
    %570 = vmatprep.subr.bf16.mxu0 0
    %571 = vmatpush2.bf16.msra.mxu0 0
    %572 = vmatprep.mubr.bf16.mxu0 0
    %573 = vmatmul.mubr.bf16.gmra.mxu0 %v319
    %v574 = vpop.f32.mrf.mxu0
    %v575 = vadd.f32 %v365, %v574
    %v576 = vpop.f32.mrf.mxu0
    %v577 = vpop.f32.mrf.mxu0
    %v578 = vadd.f32 %v365, %v577
    %v579 = vpop.f32.mrf.mxu0
    %580 = vdwg.mxu0
    %v581 = vpack.c.bf16 %v536, %v532
    %v582 = vpack.c.bf16 %v538, %v534
    %v583 = vpack.c.bf16 %v578, %v575
    %v584 = vmul.bf16 %v581, 1056980736
    %v585 = vmul.bf16 %v582, 1056980736
    %v586 = vmul.bf16 %v583, 1056980736
    %v587 = vtanh.bf16.pop %v584
    %v588 = vtanh.bf16.pop %v585
    %v589 = vtanh.bf16.pop %v586
    %v590 = vmul.bf16 %v587, 1056980736
    %v591 = vmul.bf16 %v588, 1056980736
    %v592 = vmul.bf16 %v589, 1056980736
    %v593 = vadd.bf16 %v590, 1056980736
    %v594 = vadd.bf16 %v591, 1056980736
    %v595 = vadd.bf16 %v592, 1056980736
    %v596 = vld [vmem:[#allocation6] sm:$0xff]
    %v597 = vld [vmem:[#allocation6 + $0x8] sm:$0xf]
    %v598 = vld [vmem:[#allocation6 + $0xc] sm:$0xff]
    %v599 = vld [vmem:[#allocation6 + $0x14] sm:$0xf]
    %v600 = vld [vmem:[#allocation6 + $0x18] sm:$0xff]
    %v601 = vld [vmem:[#allocation6 + $0x20] sm:$0xf]
    %v602 = vld [vmem:[#allocation6 + $0x24] sm:$0xff]
    %v603 = vld [vmem:[#allocation6 + $0x2c] sm:$0xf]
    %v604 = vld [vmem:[#allocation6 + $0x30] sm:$0xff]
    %v605 = vld [vmem:[#allocation6 + $0x38] sm:$0xf]
    %v606 = vld [vmem:[#allocation6 + $0x3c] sm:$0xff]
    %v607 = vld [vmem:[#allocation6 + $0x44] sm:$0xf]
    %v608 = vld [vmem:[#allocation6 + $0x48] sm:$0xff]
    %v609 = vld [vmem:[#allocation6 + $0x50] sm:$0xf]
    %v610 = vld [vmem:[#allocation6 + $0x54] sm:$0xff]
    %v611 = vld [vmem:[#allocation6 + $0x5c] sm:$0xf]
    %v612 = vld [vmem:[#allocation6 + $0x60] sm:$0xff]
    %v613 = vld [vmem:[#allocation6 + $0x68] sm:$0xf]
    %v614 = vld [vmem:[#allocation6 + $0x6c] sm:$0xff]
    %v615 = vld [vmem:[#allocation6 + $0x74] sm:$0xf]
    %v616 = vld [vmem:[#allocation6 + $0x78] sm:$0xff]
    %v617 = vld [vmem:[#allocation6 + $0x80] sm:$0xf]
    %v618 = vld [vmem:[#allocation6 + $0x84] sm:$0xff]
    %v619 = vld [vmem:[#allocation6 + $0x8c] sm:$0xf]
    %v620 = vld [vmem:[#allocation6 + $0x90] sm:$0xff]
    %v621 = vld [vmem:[#allocation6 + $0x98] sm:$0xf]
    %v622 = vld [vmem:[#allocation6 + $0x9c] sm:$0xff]
    %v623 = vld [vmem:[#allocation6 + $0xa4] sm:$0xf]
    %v624 = vld [vmem:[#allocation6 + $0xa8] sm:$0xff]
    %v625 = vld [vmem:[#allocation6 + $0xb0] sm:$0xf]
    %v626 = vld [vmem:[#allocation6 + $0xb4] sm:$0xff]
    %v627 = vld [vmem:[#allocation6 + $0xbc] sm:$0xf]
    %v628 = vld [vmem:[#allocation6 + $0xc0] sm:$0xff]
    %v629 = vld [vmem:[#allocation6 + $0xc8] sm:$0xf]
    %v630 = vld [vmem:[#allocation6 + $0xcc] sm:$0xff]
    %v631 = vld [vmem:[#allocation6 + $0xd4] sm:$0xf]
    %v632 = vld [vmem:[#allocation6 + $0xd8] sm:$0xff]
    %v633 = vld [vmem:[#allocation6 + $0xe0] sm:$0xf]
    %v634 = vld [vmem:[#allocation6 + $0xe4] sm:$0xff]
    %v635 = vld [vmem:[#allocation6 + $0xec] sm:$0xf]
    %v636 = vld [vmem:[#allocation6 + $0xf0] sm:$0xff]
    %v637 = vld [vmem:[#allocation6 + $0xf8] sm:$0xf]
    %v638 = vld [vmem:[#allocation6 + $0xfc] sm:$0xff]
    %v639 = vld [vmem:[#allocation6 + $0x104] sm:$0xf]
    %v640 = vld [vmem:[#allocation6 + $0x108] sm:$0xff]
    %v641 = vld [vmem:[#allocation6 + $0x110] sm:$0xf]
    %v642 = vld [vmem:[#allocation6 + $0x114] sm:$0xff]
    %v643 = vld [vmem:[#allocation6 + $0x11c] sm:$0xf]
    %v644 = vld [vmem:[#allocation6 + $0x120] sm:$0xff]
    %v645 = vld [vmem:[#allocation6 + $0x128] sm:$0xf]
    %v646 = vld [vmem:[#allocation6 + $0x12c] sm:$0xff]
    %v647 = vld [vmem:[#allocation6 + $0x134] sm:$0xf]
    %v648 = vld [vmem:[#allocation6 + $0x138] sm:$0xff]
    %v649 = vld [vmem:[#allocation6 + $0x140] sm:$0xf]
    %v650 = vld [vmem:[#allocation6 + $0x144] sm:$0xff]
    %v651 = vld [vmem:[#allocation6 + $0x14c] sm:$0xf]
    %v652 = vld [vmem:[#allocation6 + $0x150] sm:$0xff]
    %v653 = vld [vmem:[#allocation6 + $0x158] sm:$0xf]
    %v654 = vld [vmem:[#allocation6 + $0x15c] sm:$0xff]
    %v655 = vld [vmem:[#allocation6 + $0x164] sm:$0xf]
    %v656 = vld [vmem:[#allocation6 + $0x168] sm:$0xff]
    %v657 = vld [vmem:[#allocation6 + $0x170] sm:$0xf]
    %v658 = vld [vmem:[#allocation6 + $0x174] sm:$0xff]
    %v659 = vld [vmem:[#allocation6 + $0x17c] sm:$0xf]
    %v660 = vld [vmem:[#allocation6 + $0x180] sm:$0xff]
    %v661 = vld [vmem:[#allocation6 + $0x188] sm:$0xf]
    %v662 = vld [vmem:[#allocation6 + $0x18c] sm:$0xff]
    %v663 = vld [vmem:[#allocation6 + $0x194] sm:$0xf]
    %v664 = vld [vmem:[#allocation6 + $0x198] sm:$0xff]
    %v665 = vld [vmem:[#allocation6 + $0x1a0] sm:$0xf]
    %v666 = vld [vmem:[#allocation6 + $0x1a4] sm:$0xff]
    %v667 = vld [vmem:[#allocation6 + $0x1ac] sm:$0xf]
    %v668 = vld [vmem:[#allocation6 + $0x1b0] sm:$0xff]
    %v669 = vld [vmem:[#allocation6 + $0x1b8] sm:$0xf]
    %v670 = vld [vmem:[#allocation6 + $0x1bc] sm:$0xff]
    %v671 = vld [vmem:[#allocation6 + $0x1c4] sm:$0xf]
    %v672 = vld [vmem:[#allocation6 + $0x1c8] sm:$0xff]
    %v673 = vld [vmem:[#allocation6 + $0x1d0] sm:$0xf]
    %v674 = vld [vmem:[#allocation6 + $0x1d4] sm:$0xff]
    %v675 = vld [vmem:[#allocation6 + $0x1dc] sm:$0xf]
    %v676 = vld [vmem:[#allocation6 + $0x1e0] sm:$0xff]
    %v677 = vld [vmem:[#allocation6 + $0x1e8] sm:$0xf]
    %v678 = vld [vmem:[#allocation6 + $0x1ec] sm:$0xff]
    %v679 = vld [vmem:[#allocation6 + $0x1f4] sm:$0xf]
    %v680 = vld [vmem:[#allocation6 + $0x1f8] sm:$0xff]
    %v681 = vld [vmem:[#allocation6 + $0x200] sm:$0xf]
    %v682 = vld [vmem:[#allocation6 + $0x204] sm:$0xff]
    %v683 = vld [vmem:[#allocation6 + $0x20c] sm:$0xf]
    %v684 = vld [vmem:[#allocation6 + $0x210] sm:$0xff]
    %v685 = vld [vmem:[#allocation6 + $0x218] sm:$0xf]
    %v686 = vld [vmem:[#allocation6 + $0x21c] sm:$0xff]
    %v687 = vld [vmem:[#allocation6 + $0x224] sm:$0xf]
    %v688 = vld [vmem:[#allocation6 + $0x228] sm:$0xff]
    %v689 = vld [vmem:[#allocation6 + $0x230] sm:$0xf]
    %v690 = vld [vmem:[#allocation6 + $0x234] sm:$0xff]
    %v691 = vld [vmem:[#allocation6 + $0x23c] sm:$0xf]
    %v692 = vld [vmem:[%s6] sm:$0x7]
    %v694 = vlaneseq
    %v695 = vshrl.u32 %v694, 7
    %v696 = vsub.s32 0, %v695
    %v697 = vrot.slane %v692, %v696
    %v698 = vlaneseq
    %v699 = vshrl.u32 %v698, 7
    %v700 = vsub.s32 1, %v699
    %v701 = vrot.slane %v692, %v700
    %v702 = vlaneseq
    %v703 = vshrl.u32 %v702, 7
    %v704 = vsub.s32 2, %v703
    %v705 = vrot.slane %v692, %v704
    %v805 = vunpack.c.l.b16 %v596
    %v806 = vunpack.c.h.b16 %v596
    %v807 = vunpack.c.l.b16 %v597
    %v808 = vunpack.c.l.b16 %v598
    %v809 = vunpack.c.h.b16 %v598
    %v810 = vunpack.c.l.b16 %v599
    %v811 = vunpack.c.l.b16 %v600
    %v812 = vunpack.c.h.b16 %v600
    %v813 = vunpack.c.l.b16 %v601
    %v814 = vunpack.c.l.b16 %v602
    %v815 = vunpack.c.h.b16 %v602
    %v816 = vunpack.c.l.b16 %v603
    %v817 = vunpack.c.l.b16 %v604
    %v818 = vunpack.c.h.b16 %v604
    %v819 = vunpack.c.l.b16 %v605
    %v820 = vunpack.c.l.b16 %v606
    %v821 = vunpack.c.h.b16 %v606
    %v822 = vunpack.c.l.b16 %v607
    %v823 = vunpack.c.l.b16 %v608
    %v824 = vunpack.c.h.b16 %v608
    %v825 = vunpack.c.l.b16 %v609
    %v826 = vunpack.c.l.b16 %v610
    %v827 = vunpack.c.h.b16 %v610
    %v828 = vunpack.c.l.b16 %v611
    %v829 = vunpack.c.l.b16 %v612
    %v830 = vunpack.c.h.b16 %v612
    %v831 = vunpack.c.l.b16 %v613
    %v832 = vunpack.c.l.b16 %v614
    %v833 = vunpack.c.h.b16 %v614
    %v834 = vunpack.c.l.b16 %v615
    %v835 = vunpack.c.l.b16 %v616
    %v836 = vunpack.c.h.b16 %v616
    %v837 = vunpack.c.l.b16 %v617
    %v838 = vunpack.c.l.b16 %v618
    %v839 = vunpack.c.h.b16 %v618
    %v840 = vunpack.c.l.b16 %v619
    %v841 = vunpack.c.l.b16 %v620
    %v842 = vunpack.c.h.b16 %v620
    %v843 = vunpack.c.l.b16 %v621
    %v844 = vunpack.c.l.b16 %v622
    %v845 = vunpack.c.h.b16 %v622
    %v846 = vunpack.c.l.b16 %v623
    %v847 = vunpack.c.l.b16 %v624
    %v848 = vunpack.c.h.b16 %v624
    %v849 = vunpack.c.l.b16 %v625
    %v850 = vunpack.c.l.b16 %v626
    %v851 = vunpack.c.h.b16 %v626
    %v852 = vunpack.c.l.b16 %v627
    %v853 = vunpack.c.l.b16 %v628
    %v854 = vunpack.c.h.b16 %v628
    %v855 = vunpack.c.l.b16 %v629
    %v856 = vunpack.c.l.b16 %v630
    %v857 = vunpack.c.h.b16 %v630
    %v858 = vunpack.c.l.b16 %v631
    %v859 = vunpack.c.l.b16 %v632
    %v860 = vunpack.c.h.b16 %v632
    %v861 = vunpack.c.l.b16 %v633
    %v862 = vunpack.c.l.b16 %v634
    %v863 = vunpack.c.h.b16 %v634
    %v864 = vunpack.c.l.b16 %v635
    %v865 = vunpack.c.l.b16 %v636
    %v866 = vunpack.c.h.b16 %v636
    %v867 = vunpack.c.l.b16 %v637
    %v868 = vunpack.c.l.b16 %v638
    %v869 = vunpack.c.h.b16 %v638
    %v870 = vunpack.c.l.b16 %v639
    %v871 = vunpack.c.l.b16 %v640
    %v872 = vunpack.c.h.b16 %v640
    %v873 = vunpack.c.l.b16 %v641
    %v874 = vunpack.c.l.b16 %v642
    %v875 = vunpack.c.h.b16 %v642
    %v876 = vunpack.c.l.b16 %v643
    %v877 = vunpack.c.l.b16 %v644
    %v878 = vunpack.c.h.b16 %v644
    %v879 = vunpack.c.l.b16 %v645
    %v880 = vunpack.c.l.b16 %v646
    %v881 = vunpack.c.h.b16 %v646
    %v882 = vunpack.c.l.b16 %v647
    %v883 = vunpack.c.l.b16 %v648
    %v884 = vunpack.c.h.b16 %v648
    %v885 = vunpack.c.l.b16 %v649
    %v886 = vunpack.c.l.b16 %v650
    %v887 = vunpack.c.h.b16 %v650
    %v888 = vunpack.c.l.b16 %v651
    %v889 = vunpack.c.l.b16 %v652
    %v890 = vunpack.c.h.b16 %v652
    %v891 = vunpack.c.l.b16 %v653
    %v892 = vunpack.c.l.b16 %v654
    %v893 = vunpack.c.h.b16 %v654
    %v894 = vunpack.c.l.b16 %v655
    %v895 = vunpack.c.l.b16 %v656
    %v896 = vunpack.c.h.b16 %v656
    %v897 = vunpack.c.l.b16 %v657
    %v898 = vunpack.c.l.b16 %v658
    %v899 = vunpack.c.h.b16 %v658
    %v900 = vunpack.c.l.b16 %v659
    %v901 = vunpack.c.l.b16 %v660
    %v902 = vunpack.c.h.b16 %v660
    %v903 = vunpack.c.l.b16 %v661
    %v904 = vunpack.c.l.b16 %v662
    %v905 = vunpack.c.h.b16 %v662
    %v906 = vunpack.c.l.b16 %v663
    %v907 = vunpack.c.l.b16 %v664
    %v908 = vunpack.c.h.b16 %v664
    %v909 = vunpack.c.l.b16 %v665
    %v910 = vunpack.c.l.b16 %v666
    %v911 = vunpack.c.h.b16 %v666
    %v912 = vunpack.c.l.b16 %v667
    %v913 = vunpack.c.l.b16 %v668
    %v914 = vunpack.c.h.b16 %v668
    %v915 = vunpack.c.l.b16 %v669
    %v916 = vunpack.c.l.b16 %v670
    %v917 = vunpack.c.h.b16 %v670
    %v918 = vunpack.c.l.b16 %v671
    %v919 = vunpack.c.l.b16 %v672
    %v920 = vunpack.c.h.b16 %v672
    %v921 = vunpack.c.l.b16 %v673
    %v922 = vunpack.c.l.b16 %v674
    %v923 = vunpack.c.h.b16 %v674
    %v924 = vunpack.c.l.b16 %v675
    %v925 = vunpack.c.l.b16 %v676
    %v926 = vunpack.c.h.b16 %v676
    %v927 = vunpack.c.l.b16 %v677
    %v928 = vunpack.c.l.b16 %v678
    %v929 = vunpack.c.h.b16 %v678
    %v930 = vunpack.c.l.b16 %v679
    %v931 = vunpack.c.l.b16 %v680
    %v932 = vunpack.c.h.b16 %v680
    %v933 = vunpack.c.l.b16 %v681
    %v934 = vunpack.c.l.b16 %v682
    %v935 = vunpack.c.h.b16 %v682
    %v936 = vunpack.c.l.b16 %v683
    %v937 = vunpack.c.l.b16 %v684
    %v938 = vunpack.c.h.b16 %v684
    %v939 = vunpack.c.l.b16 %v685
    %v940 = vunpack.c.l.b16 %v686
    %v941 = vunpack.c.h.b16 %v686
    %v942 = vunpack.c.l.b16 %v687
    %v943 = vunpack.c.l.b16 %v688
    %v944 = vunpack.c.h.b16 %v688
    %v945 = vunpack.c.l.b16 %v689
    %v946 = vunpack.c.l.b16 %v690
    %v947 = vunpack.c.h.b16 %v690
    %v948 = vunpack.c.l.b16 %v691
    %v949 = vpack.c.b16 %v808, %v805
    %v950 = vpack.c.b16 %v809, %v806
    %v951 = vpack.c.b16 %v810, %v807
    %v952 = vpack.c.b16 %v814, %v811
    %v953 = vpack.c.b16 %v815, %v812
    %v954 = vpack.c.b16 %v816, %v813
    %v955 = vpack.c.b16 %v820, %v817
    %v956 = vpack.c.b16 %v821, %v818
    %v957 = vpack.c.b16 %v822, %v819
    %v958 = vpack.c.b16 %v826, %v823
    %v959 = vpack.c.b16 %v827, %v824
    %v960 = vpack.c.b16 %v828, %v825
    %v961 = vpack.c.b16 %v832, %v829
    %v962 = vpack.c.b16 %v833, %v830
    %v963 = vpack.c.b16 %v834, %v831
    %v964 = vpack.c.b16 %v838, %v835
    %v965 = vpack.c.b16 %v839, %v836
    %v966 = vpack.c.b16 %v840, %v837
    %v967 = vpack.c.b16 %v844, %v841
    %v968 = vpack.c.b16 %v845, %v842
    %v969 = vpack.c.b16 %v846, %v843
    %v970 = vpack.c.b16 %v850, %v847
    %v971 = vpack.c.b16 %v851, %v848
    %v972 = vpack.c.b16 %v852, %v849
    %v973 = vpack.c.b16 %v856, %v853
    %v974 = vpack.c.b16 %v857, %v854
    %v975 = vpack.c.b16 %v858, %v855
    %v976 = vpack.c.b16 %v862, %v859
    %v977 = vpack.c.b16 %v863, %v860
    %v978 = vpack.c.b16 %v864, %v861
    %v979 = vpack.c.b16 %v868, %v865
    %v980 = vpack.c.b16 %v869, %v866
    %v981 = vpack.c.b16 %v870, %v867
    %v982 = vpack.c.b16 %v874, %v871
    %v983 = vpack.c.b16 %v875, %v872
    %v984 = vpack.c.b16 %v876, %v873
    %v985 = vpack.c.b16 %v880, %v877
    %v986 = vpack.c.b16 %v881, %v878
    %v987 = vpack.c.b16 %v882, %v879
    %v988 = vpack.c.b16 %v886, %v883
    %v989 = vpack.c.b16 %v887, %v884
    %v990 = vpack.c.b16 %v888, %v885
    %v991 = vpack.c.b16 %v892, %v889
    %v992 = vpack.c.b16 %v893, %v890
    %v993 = vpack.c.b16 %v894, %v891
    %v994 = vpack.c.b16 %v898, %v895
    %v995 = vpack.c.b16 %v899, %v896
    %v996 = vpack.c.b16 %v900, %v897
    %v997 = vpack.c.b16 %v904, %v901
    %v998 = vpack.c.b16 %v905, %v902
    %v999 = vpack.c.b16 %v906, %v903
    %v1000 = vpack.c.b16 %v910, %v907
    %v1001 = vpack.c.b16 %v911, %v908
    %v1002 = vpack.c.b16 %v912, %v909
    %v1003 = vpack.c.b16 %v916, %v913
    %v1004 = vpack.c.b16 %v917, %v914
    %v1005 = vpack.c.b16 %v918, %v915
    %v1006 = vpack.c.b16 %v922, %v919
    %v1007 = vpack.c.b16 %v923, %v920
    %v1008 = vpack.c.b16 %v924, %v921
    %v1009 = vpack.c.b16 %v928, %v925
    %v1010 = vpack.c.b16 %v929, %v926
    %v1011 = vpack.c.b16 %v930, %v927
    %v1012 = vpack.c.b16 %v934, %v931
    %v1013 = vpack.c.b16 %v935, %v932
    %v1014 = vpack.c.b16 %v936, %v933
    %v1015 = vpack.c.b16 %v940, %v937
    %v1016 = vpack.c.b16 %v941, %v938
    %v1017 = vpack.c.b16 %v942, %v939
    %v1018 = vpack.c.b16 %v946, %v943
    %v1019 = vpack.c.b16 %v947, %v944
    %v1020 = vpack.c.b16 %v948, %v945
    %1093 = vmatprep.subr.bf16.mxu0 %v971
    %1094 = vmatpush1.bf16.msra.mxu0 %v970
    %1095 = vmatprep.subr.bf16.mxu0 %v968
    %1096 = vmatpush1.bf16.msra.mxu0 %v967
    %1097 = vmatprep.subr.bf16.mxu0 %v965
    %1098 = vmatpush1.bf16.msra.mxu0 %v964
    %1099 = vmatprep.subr.bf16.mxu0 %v962
    %1100 = vmatpush1.bf16.msra.mxu0 %v961
    %1101 = vmatprep.subr.bf16.mxu0 %v959
    %1102 = vmatpush1.bf16.msra.mxu0 %v958
    %1103 = vmatprep.subr.bf16.mxu0 %v956
    %1104 = vmatpush1.bf16.msra.mxu0 %v955
    %1105 = vmatprep.subr.bf16.mxu0 %v953
    %1106 = vmatpush1.bf16.msra.mxu0 %v952
    %1107 = vmatprep.subr.bf16.mxu0 %v950
    %1108 = vmatpush1.bf16.msra.mxu0 %v949
    %1109 = vmatprep.subr.bf16.mxu0 %v995
    %1110 = vmatpush2.bf16.msra.mxu0 %v994
    %1111 = vmatprep.subr.bf16.mxu0 %v992
    %1112 = vmatpush2.bf16.msra.mxu0 %v991
    %1113 = vmatprep.subr.bf16.mxu0 %v989
    %1114 = vmatpush2.bf16.msra.mxu0 %v988
    %1115 = vmatprep.subr.bf16.mxu0 %v986
    %1116 = vmatpush2.bf16.msra.mxu0 %v985
    %1117 = vmatprep.subr.bf16.mxu0 %v983
    %1118 = vmatpush2.bf16.msra.mxu0 %v982
    %1119 = vmatprep.subr.bf16.mxu0 %v980
    %1120 = vmatpush2.bf16.msra.mxu0 %v979
    %1121 = vmatprep.subr.bf16.mxu0 %v977
    %1122 = vmatpush2.bf16.msra.mxu0 %v976
    %1123 = vmatprep.subr.bf16.mxu0 %v974
    %1124 = vmatpush2.bf16.msra.mxu0 %v973
    %1125 = vmatprep.mubr.bf16.mxu0 %v594
    %1126 = vmatmul.mubr.bf16.gmra.mxu0 %v593
    %v1127 = vpop.f32.mrf.mxu0
    %v1128 = vadd.f32 %v697, %v1127
    %v1129 = vpop.f32.mrf.mxu0
    %v1130 = vadd.f32 %v701, %v1129
    %v1131 = vpop.f32.mrf.mxu0
    %v1132 = vadd.f32 %v697, %v1131
    %v1133 = vpop.f32.mrf.mxu0
    %v1134 = vadd.f32 %v701, %v1133
    %1135 = vdwg.mxu0
    %1136 = vmatprep.subr.bf16.mxu0 %v1019
    %1137 = vmatpush1.bf16.msra.mxu0 %v1018
    %1138 = vmatprep.subr.bf16.mxu0 %v1016
    %1139 = vmatpush1.bf16.msra.mxu0 %v1015
    %1140 = vmatprep.subr.bf16.mxu0 %v1013
    %1141 = vmatpush1.bf16.msra.mxu0 %v1012
    %1142 = vmatprep.subr.bf16.mxu0 %v1010
    %1143 = vmatpush1.bf16.msra.mxu0 %v1009
    %1144 = vmatprep.subr.bf16.mxu0 %v1007
    %1145 = vmatpush1.bf16.msra.mxu0 %v1006
    %1146 = vmatprep.subr.bf16.mxu0 %v1004
    %1147 = vmatpush1.bf16.msra.mxu0 %v1003
    %1148 = vmatprep.subr.bf16.mxu0 %v1001
    %1149 = vmatpush1.bf16.msra.mxu0 %v1000
    %1150 = vmatprep.subr.bf16.mxu0 %v998
    %1151 = vmatpush1.bf16.msra.mxu0 %v997
    %1152 = vmatprep.subr.bf16.mxu0 0
    %1153 = vmatpush2.bf16.msra.mxu0 0
    %1154 = vmatprep.subr.bf16.mxu0 0
    %1155 = vmatpush2.bf16.msra.mxu0 0
    %1156 = vmatprep.subr.bf16.mxu0 0
    %1157 = vmatpush2.bf16.msra.mxu0 0
    %1158 = vmatprep.subr.bf16.mxu0 0
    %1159 = vmatpush2.bf16.msra.mxu0 0
    %1160 = vmatprep.subr.bf16.mxu0 0
    %1161 = vmatpush2.bf16.msra.mxu0 0
    %1162 = vmatprep.subr.bf16.mxu0 0
    %1163 = vmatpush2.bf16.msra.mxu0 0
    %1164 = vmatprep.subr.bf16.mxu0 0
    %1165 = vmatpush2.bf16.msra.mxu0 0
    %1166 = vmatprep.subr.bf16.mxu0 0
    %1167 = vmatpush2.bf16.msra.mxu0 0
    %1168 = vmatprep.mubr.bf16.mxu0 0
    %1169 = vmatmul.mubr.bf16.gmra.mxu0 %v595
    %v1170 = vpop.f32.mrf.mxu0
    %v1171 = vadd.f32 %v1128, %v1170
    %v1172 = vpop.f32.mrf.mxu0
    %v1173 = vadd.f32 %v1130, %v1172
    %v1174 = vpop.f32.mrf.mxu0
    %v1175 = vadd.f32 %v1132, %v1174
    %v1176 = vpop.f32.mrf.mxu0
    %v1177 = vadd.f32 %v1134, %v1176
    %1178 = vdwg.mxu0
    %1179 = vmatprep.subr.bf16.mxu0 0
    %1180 = vmatpush1.bf16.msra.mxu0 %v972
    %1181 = vmatprep.subr.bf16.mxu0 0
    %1182 = vmatpush1.bf16.msra.mxu0 %v969
    %1183 = vmatprep.subr.bf16.mxu0 0
    %1184 = vmatpush1.bf16.msra.mxu0 %v966
    %1185 = vmatprep.subr.bf16.mxu0 0
    %1186 = vmatpush1.bf16.msra.mxu0 %v963
    %1187 = vmatprep.subr.bf16.mxu0 0
    %1188 = vmatpush1.bf16.msra.mxu0 %v960
    %1189 = vmatprep.subr.bf16.mxu0 0
    %1190 = vmatpush1.bf16.msra.mxu0 %v957
    %1191 = vmatprep.subr.bf16.mxu0 0
    %1192 = vmatpush1.bf16.msra.mxu0 %v954
    %1193 = vmatprep.subr.bf16.mxu0 0
    %1194 = vmatpush1.bf16.msra.mxu0 %v951
    %1195 = vmatprep.subr.bf16.mxu0 0
    %1196 = vmatpush2.bf16.msra.mxu0 %v996
    %1197 = vmatprep.subr.bf16.mxu0 0
    %1198 = vmatpush2.bf16.msra.mxu0 %v993
    %1199 = vmatprep.subr.bf16.mxu0 0
    %1200 = vmatpush2.bf16.msra.mxu0 %v990
    %1201 = vmatprep.subr.bf16.mxu0 0
    %1202 = vmatpush2.bf16.msra.mxu0 %v987
    %1203 = vmatprep.subr.bf16.mxu0 0
    %1204 = vmatpush2.bf16.msra.mxu0 %v984
    %1205 = vmatprep.subr.bf16.mxu0 0
    %1206 = vmatpush2.bf16.msra.mxu0 %v981
    %1207 = vmatprep.subr.bf16.mxu0 0
    %1208 = vmatpush2.bf16.msra.mxu0 %v978
    %1209 = vmatprep.subr.bf16.mxu0 0
    %1210 = vmatpush2.bf16.msra.mxu0 %v975
    %1211 = vmatprep.mubr.bf16.mxu0 %v594
    %1212 = vmatmul.mubr.bf16.gmra.mxu0 %v593
    %v1213 = vpop.f32.mrf.mxu0
    %v1214 = vadd.f32 %v705, %v1213
    %v1215 = vpop.f32.mrf.mxu0
    %v1216 = vpop.f32.mrf.mxu0
    %v1217 = vadd.f32 %v705, %v1216
    %v1218 = vpop.f32.mrf.mxu0
    %1219 = vdwg.mxu0
    %1220 = vmatprep.subr.bf16.mxu0 0
    %1221 = vmatpush1.bf16.msra.mxu0 %v1020
    %1222 = vmatprep.subr.bf16.mxu0 0
    %1223 = vmatpush1.bf16.msra.mxu0 %v1017
    %1224 = vmatprep.subr.bf16.mxu0 0
    %1225 = vmatpush1.bf16.msra.mxu0 %v1014
    %1226 = vmatprep.subr.bf16.mxu0 0
    %1227 = vmatpush1.bf16.msra.mxu0 %v1011
    %1228 = vmatprep.subr.bf16.mxu0 0
    %1229 = vmatpush1.bf16.msra.mxu0 %v1008
    %1230 = vmatprep.subr.bf16.mxu0 0
    %1231 = vmatpush1.bf16.msra.mxu0 %v1005
    %1232 = vmatprep.subr.bf16.mxu0 0
    %1233 = vmatpush1.bf16.msra.mxu0 %v1002
    %1234 = vmatprep.subr.bf16.mxu0 0
    %1235 = vmatpush1.bf16.msra.mxu0 %v999
    %1236 = vmatprep.subr.bf16.mxu0 0
    %1237 = vmatpush2.bf16.msra.mxu0 0
    %1238 = vmatprep.subr.bf16.mxu0 0
    %1239 = vmatpush2.bf16.msra.mxu0 0
    %1240 = vmatprep.subr.bf16.mxu0 0
    %1241 = vmatpush2.bf16.msra.mxu0 0
    %1242 = vmatprep.subr.bf16.mxu0 0
    %1243 = vmatpush2.bf16.msra.mxu0 0
    %1244 = vmatprep.subr.bf16.mxu0 0
    %1245 = vmatpush2.bf16.msra.mxu0 0
    %1246 = vmatprep.subr.bf16.mxu0 0
    %1247 = vmatpush2.bf16.msra.mxu0 0
    %1248 = vmatprep.subr.bf16.mxu0 0
    %1249 = vmatpush2.bf16.msra.mxu0 0
    %1250 = vmatprep.subr.bf16.mxu0 0
    %1251 = vmatpush2.bf16.msra.mxu0 0
    %1252 = vmatprep.mubr.bf16.mxu0 0
    %1253 = vmatmul.mubr.bf16.gmra.mxu0 %v595
    %v1254 = vpop.f32.mrf.mxu0
    %v1255 = vadd.f32 %v1214, %v1254
    %v1256 = vpop.f32.mrf.mxu0
    %v1257 = vpop.f32.mrf.mxu0
    %v1258 = vadd.f32 %v1217, %v1257
    %v1259 = vpop.f32.mrf.mxu0
    %1260 = vdwg.mxu0
    %v1261 = vpack.c.bf16 %v1175, %v1171
    %v1262 = vpack.c.bf16 %v1177, %v1173
    %v1263 = vpack.c.bf16 %v1258, %v1255
    %v1264 = vmul.bf16 %v1261, 1056980736
    %v1265 = vmul.bf16 %v1262, 1056980736
    %v1266 = vmul.bf16 %v1263, 1056980736
    %v1267 = vtanh.bf16.pop %v1264
    %v1268 = vtanh.bf16.pop %v1265
    %v1269 = vtanh.bf16.pop %v1266
    %v1270 = vmul.bf16 %v1267, 1056980736
    %v1271 = vmul.bf16 %v1268, 1056980736
    %v1272 = vmul.bf16 %v1269, 1056980736
    %v1273 = vadd.bf16 %v1270, 1056980736
    %v1274 = vadd.bf16 %v1271, 1056980736
    %v1275 = vadd.bf16 %v1272, 1056980736
    %v1276 = vld [vmem:[#allocation7] sm:$0xff]
    %v1277 = vld [vmem:[#allocation7 + $0x8] sm:$0xff]
    %v1278 = vld [vmem:[#allocation7 + $0x10] sm:$0xff]
    %v1279 = vld [vmem:[#allocation7 + $0x18] sm:$0xff]
    %v1280 = vld [vmem:[#allocation7 + $0x20] sm:$0xff]
    %v1281 = vld [vmem:[#allocation7 + $0x28] sm:$0xff]
    %v1282 = vld [vmem:[#allocation7 + $0x30] sm:$0xff]
    %v1283 = vld [vmem:[#allocation7 + $0x38] sm:$0xff]
    %v1284 = vld [vmem:[#allocation7 + $0x40] sm:$0xff]
    %v1285 = vld [vmem:[#allocation7 + $0x48] sm:$0xff]
    %v1286 = vld [vmem:[#allocation7 + $0x50] sm:$0xff]
    %v1287 = vld [vmem:[#allocation7 + $0x58] sm:$0xff]
    %v1288 = vld [vmem:[#allocation7 + $0x60] sm:$0xff]
    %v1289 = vld [vmem:[#allocation7 + $0x68] sm:$0xff]
    %v1290 = vld [vmem:[#allocation7 + $0x70] sm:$0xff]
    %v1291 = vld [vmem:[#allocation7 + $0x78] sm:$0xff]
    %v1292 = vld [vmem:[#allocation7 + $0x80] sm:$0xff]
    %v1293 = vld [vmem:[#allocation7 + $0x88] sm:$0xff]
    %v1294 = vld [vmem:[#allocation7 + $0x90] sm:$0xff]
    %v1295 = vld [vmem:[#allocation7 + $0x98] sm:$0xff]
    %v1296 = vld [vmem:[#allocation7 + $0xa0] sm:$0xff]
    %v1297 = vld [vmem:[#allocation7 + $0xa8] sm:$0xff]
    %v1298 = vld [vmem:[#allocation7 + $0xb0] sm:$0xff]
    %v1299 = vld [vmem:[#allocation7 + $0xb8] sm:$0xff]
    %v1300 = vld [vmem:[#allocation7 + $0xc0] sm:$0xff]
    %v1301 = vld [vmem:[#allocation7 + $0xc8] sm:$0xff]
    %v1302 = vld [vmem:[#allocation7 + $0xd0] sm:$0xff]
    %v1303 = vld [vmem:[#allocation7 + $0xd8] sm:$0xff]
    %v1304 = vld [vmem:[#allocation7 + $0xe0] sm:$0xff]
    %v1305 = vld [vmem:[#allocation7 + $0xe8] sm:$0xff]
    %v1306 = vld [vmem:[#allocation7 + $0xf0] sm:$0xff]
    %v1307 = vld [vmem:[#allocation7 + $0xf8] sm:$0xff]
    %v1308 = vld [vmem:[#allocation7 + $0x100] sm:$0xff]
    %v1309 = vld [vmem:[#allocation7 + $0x108] sm:$0xff]
    %v1310 = vld [vmem:[#allocation7 + $0x110] sm:$0xff]
    %v1311 = vld [vmem:[#allocation7 + $0x118] sm:$0xff]
    %v1312 = vld [vmem:[#allocation7 + $0x120] sm:$0xff]
    %v1313 = vld [vmem:[#allocation7 + $0x128] sm:$0xff]
    %v1314 = vld [vmem:[#allocation7 + $0x130] sm:$0xff]
    %v1315 = vld [vmem:[#allocation7 + $0x138] sm:$0xff]
    %v1316 = vld [vmem:[#allocation7 + $0x140] sm:$0xff]
    %v1317 = vld [vmem:[#allocation7 + $0x148] sm:$0xff]
    %v1318 = vld [vmem:[#allocation7 + $0x150] sm:$0xff]
    %v1319 = vld [vmem:[#allocation7 + $0x158] sm:$0xff]
    %v1320 = vld [vmem:[#allocation7 + $0x160] sm:$0xff]
    %v1321 = vld [vmem:[#allocation7 + $0x168] sm:$0xff]
    %v1322 = vld [vmem:[#allocation7 + $0x170] sm:$0xff]
    %v1323 = vld [vmem:[#allocation7 + $0x178] sm:$0xff]
    %v1324 = vld [vmem:[#allocation7 + $0x180] sm:$0xff]
    %v1325 = vld [vmem:[#allocation7 + $0x188] sm:$0xff]
    %v1326 = vld [vmem:[#allocation7 + $0x190] sm:$0xff]
    %v1327 = vld [vmem:[#allocation7 + $0x198] sm:$0xff]
    %v1328 = vld [vmem:[#allocation7 + $0x1a0] sm:$0xff]
    %v1329 = vld [vmem:[#allocation7 + $0x1a8] sm:$0xff]
    %v1330 = vld [vmem:[#allocation7 + $0x1b0] sm:$0xff]
    %v1331 = vld [vmem:[#allocation7 + $0x1b8] sm:$0xff]
    %v1332 = vld [vmem:[#allocation7 + $0x1c0] sm:$0xff]
    %v1333 = vld [vmem:[#allocation7 + $0x1c8] sm:$0xff]
    %v1334 = vld [vmem:[#allocation7 + $0x1d0] sm:$0xff]
    %v1335 = vld [vmem:[#allocation7 + $0x1d8] sm:$0xff]
    %v1336 = vld [vmem:[#allocation7 + $0x1e0] sm:$0xff]
    %v1337 = vld [vmem:[#allocation7 + $0x1e8] sm:$0xff]
    %v1338 = vld [vmem:[#allocation7 + $0x1f0] sm:$0xff]
    %v1339 = vld [vmem:[#allocation7 + $0x1f8] sm:$0xff]
    %v1340 = vld [vmem:[#allocation7 + $0x200] sm:$0xff]
    %v1341 = vld [vmem:[#allocation7 + $0x208] sm:$0xff]
    %v1342 = vld [vmem:[#allocation7 + $0x210] sm:$0xff]
    %v1343 = vld [vmem:[#allocation7 + $0x218] sm:$0xff]
    %v1344 = vld [vmem:[#allocation7 + $0x220] sm:$0xff]
    %v1345 = vld [vmem:[#allocation7 + $0x228] sm:$0xff]
    %v1346 = vld [vmem:[#allocation7 + $0x230] sm:$0xff]
    %v1347 = vld [vmem:[#allocation7 + $0x238] sm:$0xff]
    %v1348 = vld [vmem:[#allocation7 + $0x240] sm:$0xff]
    %v1349 = vld [vmem:[#allocation7 + $0x248] sm:$0xff]
    %v1350 = vld [vmem:[#allocation7 + $0x250] sm:$0xff]
    %v1351 = vld [vmem:[#allocation7 + $0x258] sm:$0xff]
    %v1352 = vld [vmem:[#allocation7 + $0x260] sm:$0xff]
    %v1353 = vld [vmem:[#allocation7 + $0x268] sm:$0xff]
    %v1354 = vld [vmem:[#allocation7 + $0x270] sm:$0xff]
    %v1355 = vld [vmem:[#allocation7 + $0x278] sm:$0xff]
    %v1356 = vld [vmem:[#allocation7 + $0x280] sm:$0xff]
    %v1357 = vld [vmem:[#allocation7 + $0x288] sm:$0xff]
    %v1358 = vld [vmem:[#allocation7 + $0x290] sm:$0xff]
    %v1359 = vld [vmem:[#allocation7 + $0x298] sm:$0xff]
    %v1360 = vld [vmem:[#allocation7 + $0x2a0] sm:$0xff]
    %v1361 = vld [vmem:[#allocation7 + $0x2a8] sm:$0xff]
    %v1362 = vld [vmem:[#allocation7 + $0x2b0] sm:$0xff]
    %v1363 = vld [vmem:[#allocation7 + $0x2b8] sm:$0xff]
    %v1364 = vld [vmem:[#allocation7 + $0x2c0] sm:$0xff]
    %v1365 = vld [vmem:[#allocation7 + $0x2c8] sm:$0xff]
    %v1366 = vld [vmem:[#allocation7 + $0x2d0] sm:$0xff]
    %v1367 = vld [vmem:[#allocation7 + $0x2d8] sm:$0xff]
    %v1368 = vld [vmem:[#allocation7 + $0x2e0] sm:$0xff]
    %v1369 = vld [vmem:[#allocation7 + $0x2e8] sm:$0xff]
    %v1370 = vld [vmem:[#allocation7 + $0x2f0] sm:$0xff]
    %v1371 = vld [vmem:[#allocation7 + $0x2f8] sm:$0xff]
    %v1372 = vld [vmem:[%s8] sm:$0xf]
    %v1374 = vlaneseq
    %v1375 = vshrl.u32 %v1374, 7
    %v1376 = vsub.s32 0, %v1375
    %v1377 = vrot.slane %v1372, %v1376
    %v1378 = vlaneseq
    %v1379 = vshrl.u32 %v1378, 7
    %v1380 = vsub.s32 1, %v1379
    %v1381 = vrot.slane %v1372, %v1380
    %v1382 = vlaneseq
    %v1383 = vshrl.u32 %v1382, 7
    %v1384 = vsub.s32 2, %v1383
    %v1385 = vrot.slane %v1372, %v1384
    %v1386 = vlaneseq
    %v1387 = vshrl.u32 %v1386, 7
    %v1388 = vsub.s32 3, %v1387
    %v1389 = vrot.slane %v1372, %v1388
    %v1490 = vunpack.c.l.b16 %v1276
    %v1491 = vunpack.c.h.b16 %v1276
    %v1492 = vunpack.c.l.b16 %v1277
    %v1493 = vunpack.c.h.b16 %v1277
    %v1494 = vunpack.c.l.b16 %v1278
    %v1495 = vunpack.c.h.b16 %v1278
    %v1496 = vunpack.c.l.b16 %v1279
    %v1497 = vunpack.c.h.b16 %v1279
    %v1498 = vunpack.c.l.b16 %v1280
    %v1499 = vunpack.c.h.b16 %v1280
    %v1500 = vunpack.c.l.b16 %v1281
    %v1501 = vunpack.c.h.b16 %v1281
    %v1502 = vunpack.c.l.b16 %v1282
    %v1503 = vunpack.c.h.b16 %v1282
    %v1504 = vunpack.c.l.b16 %v1283
    %v1505 = vunpack.c.h.b16 %v1283
    %v1506 = vunpack.c.l.b16 %v1284
    %v1507 = vunpack.c.h.b16 %v1284
    %v1508 = vunpack.c.l.b16 %v1285
    %v1509 = vunpack.c.h.b16 %v1285
    %v1510 = vunpack.c.l.b16 %v1286
    %v1511 = vunpack.c.h.b16 %v1286
    %v1512 = vunpack.c.l.b16 %v1287
    %v1513 = vunpack.c.h.b16 %v1287
    %v1514 = vunpack.c.l.b16 %v1288
    %v1515 = vunpack.c.h.b16 %v1288
    %v1516 = vunpack.c.l.b16 %v1289
    %v1517 = vunpack.c.h.b16 %v1289
    %v1518 = vunpack.c.l.b16 %v1290
    %v1519 = vunpack.c.h.b16 %v1290
    %v1520 = vunpack.c.l.b16 %v1291
    %v1521 = vunpack.c.h.b16 %v1291
    %v1522 = vunpack.c.l.b16 %v1292
    %v1523 = vunpack.c.h.b16 %v1292
    %v1524 = vunpack.c.l.b16 %v1293
    %v1525 = vunpack.c.h.b16 %v1293
    %v1526 = vunpack.c.l.b16 %v1294
    %v1527 = vunpack.c.h.b16 %v1294
    %v1528 = vunpack.c.l.b16 %v1295
    %v1529 = vunpack.c.h.b16 %v1295
    %v1530 = vunpack.c.l.b16 %v1296
    %v1531 = vunpack.c.h.b16 %v1296
    %v1532 = vunpack.c.l.b16 %v1297
    %v1533 = vunpack.c.h.b16 %v1297
    %v1534 = vunpack.c.l.b16 %v1298
    %v1535 = vunpack.c.h.b16 %v1298
    %v1536 = vunpack.c.l.b16 %v1299
    %v1537 = vunpack.c.h.b16 %v1299
    %v1538 = vunpack.c.l.b16 %v1300
    %v1539 = vunpack.c.h.b16 %v1300
    %v1540 = vunpack.c.l.b16 %v1301
    %v1541 = vunpack.c.h.b16 %v1301
    %v1542 = vunpack.c.l.b16 %v1302
    %v1543 = vunpack.c.h.b16 %v1302
    %v1544 = vunpack.c.l.b16 %v1303
    %v1545 = vunpack.c.h.b16 %v1303
    %v1546 = vunpack.c.l.b16 %v1304
    %v1547 = vunpack.c.h.b16 %v1304
    %v1548 = vunpack.c.l.b16 %v1305
    %v1549 = vunpack.c.h.b16 %v1305
    %v1550 = vunpack.c.l.b16 %v1306
    %v1551 = vunpack.c.h.b16 %v1306
    %v1552 = vunpack.c.l.b16 %v1307
    %v1553 = vunpack.c.h.b16 %v1307
    %v1554 = vunpack.c.l.b16 %v1308
    %v1555 = vunpack.c.h.b16 %v1308
    %v1556 = vunpack.c.l.b16 %v1309
    %v1557 = vunpack.c.h.b16 %v1309
    %v1558 = vunpack.c.l.b16 %v1310
    %v1559 = vunpack.c.h.b16 %v1310
    %v1560 = vunpack.c.l.b16 %v1311
    %v1561 = vunpack.c.h.b16 %v1311
    %v1562 = vunpack.c.l.b16 %v1312
    %v1563 = vunpack.c.h.b16 %v1312
    %v1564 = vunpack.c.l.b16 %v1313
    %v1565 = vunpack.c.h.b16 %v1313
    %v1566 = vunpack.c.l.b16 %v1314
    %v1567 = vunpack.c.h.b16 %v1314
    %v1568 = vunpack.c.l.b16 %v1315
    %v1569 = vunpack.c.h.b16 %v1315
    %v1570 = vunpack.c.l.b16 %v1316
    %v1571 = vunpack.c.h.b16 %v1316
    %v1572 = vunpack.c.l.b16 %v1317
    %v1573 = vunpack.c.h.b16 %v1317
    %v1574 = vunpack.c.l.b16 %v1318
    %v1575 = vunpack.c.h.b16 %v1318
    %v1576 = vunpack.c.l.b16 %v1319
    %v1577 = vunpack.c.h.b16 %v1319
    %v1578 = vunpack.c.l.b16 %v1320
    %v1579 = vunpack.c.h.b16 %v1320
    %v1580 = vunpack.c.l.b16 %v1321
    %v1581 = vunpack.c.h.b16 %v1321
    %v1582 = vunpack.c.l.b16 %v1322
    %v1583 = vunpack.c.h.b16 %v1322
    %v1584 = vunpack.c.l.b16 %v1323
    %v1585 = vunpack.c.h.b16 %v1323
    %v1586 = vunpack.c.l.b16 %v1324
    %v1587 = vunpack.c.h.b16 %v1324
    %v1588 = vunpack.c.l.b16 %v1325
    %v1589 = vunpack.c.h.b16 %v1325
    %v1590 = vunpack.c.l.b16 %v1326
    %v1591 = vunpack.c.h.b16 %v1326
    %v1592 = vunpack.c.l.b16 %v1327
    %v1593 = vunpack.c.h.b16 %v1327
    %v1594 = vunpack.c.l.b16 %v1328
    %v1595 = vunpack.c.h.b16 %v1328
    %v1596 = vunpack.c.l.b16 %v1329
    %v1597 = vunpack.c.h.b16 %v1329
    %v1598 = vunpack.c.l.b16 %v1330
    %v1599 = vunpack.c.h.b16 %v1330
    %v1600 = vunpack.c.l.b16 %v1331
    %v1601 = vunpack.c.h.b16 %v1331
    %v1602 = vunpack.c.l.b16 %v1332
    %v1603 = vunpack.c.h.b16 %v1332
    %v1604 = vunpack.c.l.b16 %v1333
    %v1605 = vunpack.c.h.b16 %v1333
    %v1606 = vunpack.c.l.b16 %v1334
    %v1607 = vunpack.c.h.b16 %v1334
    %v1608 = vunpack.c.l.b16 %v1335
    %v1609 = vunpack.c.h.b16 %v1335
    %v1610 = vunpack.c.l.b16 %v1336
    %v1611 = vunpack.c.h.b16 %v1336
    %v1612 = vunpack.c.l.b16 %v1337
    %v1613 = vunpack.c.h.b16 %v1337
    %v1614 = vunpack.c.l.b16 %v1338
    %v1615 = vunpack.c.h.b16 %v1338
    %v1616 = vunpack.c.l.b16 %v1339
    %v1617 = vunpack.c.h.b16 %v1339
    %v1618 = vunpack.c.l.b16 %v1340
    %v1619 = vunpack.c.h.b16 %v1340
    %v1620 = vunpack.c.l.b16 %v1341
    %v1621 = vunpack.c.h.b16 %v1341
    %v1622 = vunpack.c.l.b16 %v1342
    %v1623 = vunpack.c.h.b16 %v1342
    %v1624 = vunpack.c.l.b16 %v1343
    %v1625 = vunpack.c.h.b16 %v1343
    %v1626 = vunpack.c.l.b16 %v1344
    %v1627 = vunpack.c.h.b16 %v1344
    %v1628 = vunpack.c.l.b16 %v1345
    %v1629 = vunpack.c.h.b16 %v1345
    %v1630 = vunpack.c.l.b16 %v1346
    %v1631 = vunpack.c.h.b16 %v1346
    %v1632 = vunpack.c.l.b16 %v1347
    %v1633 = vunpack.c.h.b16 %v1347
    %v1634 = vunpack.c.l.b16 %v1348
    %v1635 = vunpack.c.h.b16 %v1348
    %v1636 = vunpack.c.l.b16 %v1349
    %v1637 = vunpack.c.h.b16 %v1349
    %v1638 = vunpack.c.l.b16 %v1350
    %v1639 = vunpack.c.h.b16 %v1350
    %v1640 = vunpack.c.l.b16 %v1351
    %v1641 = vunpack.c.h.b16 %v1351
    %v1642 = vunpack.c.l.b16 %v1352
    %v1643 = vunpack.c.h.b16 %v1352
    %v1644 = vunpack.c.l.b16 %v1353
    %v1645 = vunpack.c.h.b16 %v1353
    %v1646 = vunpack.c.l.b16 %v1354
    %v1647 = vunpack.c.h.b16 %v1354
    %v1648 = vunpack.c.l.b16 %v1355
    %v1649 = vunpack.c.h.b16 %v1355
    %v1650 = vunpack.c.l.b16 %v1356
    %v1651 = vunpack.c.h.b16 %v1356
    %v1652 = vunpack.c.l.b16 %v1357
    %v1653 = vunpack.c.h.b16 %v1357
    %v1654 = vunpack.c.l.b16 %v1358
    %v1655 = vunpack.c.h.b16 %v1358
    %v1656 = vunpack.c.l.b16 %v1359
    %v1657 = vunpack.c.h.b16 %v1359
    %v1658 = vunpack.c.l.b16 %v1360
    %v1659 = vunpack.c.h.b16 %v1360
    %v1660 = vunpack.c.l.b16 %v1361
    %v1661 = vunpack.c.h.b16 %v1361
    %v1662 = vunpack.c.l.b16 %v1362
    %v1663 = vunpack.c.h.b16 %v1362
    %v1664 = vunpack.c.l.b16 %v1363
    %v1665 = vunpack.c.h.b16 %v1363
    %v1666 = vunpack.c.l.b16 %v1364
    %v1667 = vunpack.c.h.b16 %v1364
    %v1668 = vunpack.c.l.b16 %v1365
    %v1669 = vunpack.c.h.b16 %v1365
    %v1670 = vunpack.c.l.b16 %v1366
    %v1671 = vunpack.c.h.b16 %v1366
    %v1672 = vunpack.c.l.b16 %v1367
    %v1673 = vunpack.c.h.b16 %v1367
    %v1674 = vunpack.c.l.b16 %v1368
    %v1675 = vunpack.c.h.b16 %v1368
    %v1676 = vunpack.c.l.b16 %v1369
    %v1677 = vunpack.c.h.b16 %v1369
    %v1678 = vunpack.c.l.b16 %v1370
    %v1679 = vunpack.c.h.b16 %v1370
    %v1680 = vunpack.c.l.b16 %v1371
    %v1681 = vunpack.c.h.b16 %v1371
    %v1682 = vpack.c.b16 %v1494, %v1490
    %v1683 = vpack.c.b16 %v1495, %v1491
    %v1684 = vpack.c.b16 %v1496, %v1492
    %v1685 = vpack.c.b16 %v1497, %v1493
    %v1686 = vpack.c.b16 %v1502, %v1498
    %v1687 = vpack.c.b16 %v1503, %v1499
    %v1688 = vpack.c.b16 %v1504, %v1500
    %v1689 = vpack.c.b16 %v1505, %v1501
    %v1690 = vpack.c.b16 %v1510, %v1506
    %v1691 = vpack.c.b16 %v1511, %v1507
    %v1692 = vpack.c.b16 %v1512, %v1508
    %v1693 = vpack.c.b16 %v1513, %v1509
    %v1694 = vpack.c.b16 %v1518, %v1514
    %v1695 = vpack.c.b16 %v1519, %v1515
    %v1696 = vpack.c.b16 %v1520, %v1516
    %v1697 = vpack.c.b16 %v1521, %v1517
    %v1698 = vpack.c.b16 %v1526, %v1522
    %v1699 = vpack.c.b16 %v1527, %v1523
    %v1700 = vpack.c.b16 %v1528, %v1524
    %v1701 = vpack.c.b16 %v1529, %v1525
    %v1702 = vpack.c.b16 %v1534, %v1530
    %v1703 = vpack.c.b16 %v1535, %v1531
    %v1704 = vpack.c.b16 %v1536, %v1532
    %v1705 = vpack.c.b16 %v1537, %v1533
    %v1706 = vpack.c.b16 %v1542, %v1538
    %v1707 = vpack.c.b16 %v1543, %v1539
    %v1708 = vpack.c.b16 %v1544, %v1540
    %v1709 = vpack.c.b16 %v1545, %v1541
    %v1710 = vpack.c.b16 %v1550, %v1546
    %v1711 = vpack.c.b16 %v1551, %v1547
    %v1712 = vpack.c.b16 %v1552, %v1548
    %v1713 = vpack.c.b16 %v1553, %v1549
    %v1714 = vpack.c.b16 %v1558, %v1554
    %v1715 = vpack.c.b16 %v1559, %v1555
    %v1716 = vpack.c.b16 %v1560, %v1556
    %v1717 = vpack.c.b16 %v1561, %v1557
    %v1718 = vpack.c.b16 %v1566, %v1562
    %v1719 = vpack.c.b16 %v1567, %v1563
    %v1720 = vpack.c.b16 %v1568, %v1564
    %v1721 = vpack.c.b16 %v1569, %v1565
    %v1722 = vpack.c.b16 %v1574, %v1570
    %v1723 = vpack.c.b16 %v1575, %v1571
    %v1724 = vpack.c.b16 %v1576, %v1572
    %v1725 = vpack.c.b16 %v1577, %v1573
    %v1726 = vpack.c.b16 %v1582, %v1578
    %v1727 = vpack.c.b16 %v1583, %v1579
    %v1728 = vpack.c.b16 %v1584, %v1580
    %v1729 = vpack.c.b16 %v1585, %v1581
    %v1730 = vpack.c.b16 %v1590, %v1586
    %v1731 = vpack.c.b16 %v1591, %v1587
    %v1732 = vpack.c.b16 %v1592, %v1588
    %v1733 = vpack.c.b16 %v1593, %v1589
    %v1734 = vpack.c.b16 %v1598, %v1594
    %v1735 = vpack.c.b16 %v1599, %v1595
    %v1736 = vpack.c.b16 %v1600, %v1596
    %v1737 = vpack.c.b16 %v1601, %v1597
    %v1738 = vpack.c.b16 %v1606, %v1602
    %v1739 = vpack.c.b16 %v1607, %v1603
    %v1740 = vpack.c.b16 %v1608, %v1604
    %v1741 = vpack.c.b16 %v1609, %v1605
    %v1742 = vpack.c.b16 %v1614, %v1610
    %v1743 = vpack.c.b16 %v1615, %v1611
    %v1744 = vpack.c.b16 %v1616, %v1612
    %v1745 = vpack.c.b16 %v1617, %v1613
    %v1746 = vpack.c.b16 %v1622, %v1618
    %v1747 = vpack.c.b16 %v1623, %v1619
    %v1748 = vpack.c.b16 %v1624, %v1620
    %v1749 = vpack.c.b16 %v1625, %v1621
    %v1750 = vpack.c.b16 %v1630, %v1626
    %v1751 = vpack.c.b16 %v1631, %v1627
    %v1752 = vpack.c.b16 %v1632, %v1628
    %v1753 = vpack.c.b16 %v1633, %v1629
    %v1754 = vpack.c.b16 %v1638, %v1634
    %v1755 = vpack.c.b16 %v1639, %v1635
    %v1756 = vpack.c.b16 %v1640, %v1636
    %v1757 = vpack.c.b16 %v1641, %v1637
    %v1758 = vpack.c.b16 %v1646, %v1642
    %v1759 = vpack.c.b16 %v1647, %v1643
    %v1760 = vpack.c.b16 %v1648, %v1644
    %v1761 = vpack.c.b16 %v1649, %v1645
    %v1762 = vpack.c.b16 %v1654, %v1650
    %v1763 = vpack.c.b16 %v1655, %v1651
    %v1764 = vpack.c.b16 %v1656, %v1652
    %v1765 = vpack.c.b16 %v1657, %v1653
    %v1766 = vpack.c.b16 %v1662, %v1658
    %v1767 = vpack.c.b16 %v1663, %v1659
    %v1768 = vpack.c.b16 %v1664, %v1660
    %v1769 = vpack.c.b16 %v1665, %v1661
    %v1770 = vpack.c.b16 %v1670, %v1666
    %v1771 = vpack.c.b16 %v1671, %v1667
    %v1772 = vpack.c.b16 %v1672, %v1668
    %v1773 = vpack.c.b16 %v1673, %v1669
    %v1774 = vpack.c.b16 %v1678, %v1674
    %v1775 = vpack.c.b16 %v1679, %v1675
    %v1776 = vpack.c.b16 %v1680, %v1676
    %v1777 = vpack.c.b16 %v1681, %v1677
    %1874 = vmatprep.subr.bf16.mxu0 %v1711
    %1875 = vmatpush1.bf16.msra.mxu0 %v1710
    %1876 = vmatprep.subr.bf16.mxu0 %v1707
    %1877 = vmatpush1.bf16.msra.mxu0 %v1706
    %1878 = vmatprep.subr.bf16.mxu0 %v1703
    %1879 = vmatpush1.bf16.msra.mxu0 %v1702
    %1880 = vmatprep.subr.bf16.mxu0 %v1699
    %1881 = vmatpush1.bf16.msra.mxu0 %v1698
    %1882 = vmatprep.subr.bf16.mxu0 %v1695
    %1883 = vmatpush1.bf16.msra.mxu0 %v1694
    %1884 = vmatprep.subr.bf16.mxu0 %v1691
    %1885 = vmatpush1.bf16.msra.mxu0 %v1690
    %1886 = vmatprep.subr.bf16.mxu0 %v1687
    %1887 = vmatpush1.bf16.msra.mxu0 %v1686
    %1888 = vmatprep.subr.bf16.mxu0 %v1683
    %1889 = vmatpush1.bf16.msra.mxu0 %v1682
    %1890 = vmatprep.subr.bf16.mxu0 %v1743
    %1891 = vmatpush2.bf16.msra.mxu0 %v1742
    %1892 = vmatprep.subr.bf16.mxu0 %v1739
    %1893 = vmatpush2.bf16.msra.mxu0 %v1738
    %1894 = vmatprep.subr.bf16.mxu0 %v1735
    %1895 = vmatpush2.bf16.msra.mxu0 %v1734
    %1896 = vmatprep.subr.bf16.mxu0 %v1731
    %1897 = vmatpush2.bf16.msra.mxu0 %v1730
    %1898 = vmatprep.subr.bf16.mxu0 %v1727
    %1899 = vmatpush2.bf16.msra.mxu0 %v1726
    %1900 = vmatprep.subr.bf16.mxu0 %v1723
    %1901 = vmatpush2.bf16.msra.mxu0 %v1722
    %1902 = vmatprep.subr.bf16.mxu0 %v1719
    %1903 = vmatpush2.bf16.msra.mxu0 %v1718
    %1904 = vmatprep.subr.bf16.mxu0 %v1715
    %1905 = vmatpush2.bf16.msra.mxu0 %v1714
    %1906 = vmatprep.mubr.bf16.mxu0 %v1274
    %1907 = vmatmul.mubr.bf16.gmra.mxu0 %v1273
    %v1908 = vpop.f32.mrf.mxu0
    %v1909 = vadd.f32 %v1377, %v1908
    %v1910 = vpop.f32.mrf.mxu0
    %v1911 = vadd.f32 %v1381, %v1910
    %v1912 = vpop.f32.mrf.mxu0
    %v1913 = vadd.f32 %v1377, %v1912
    %v1914 = vpop.f32.mrf.mxu0
    %v1915 = vadd.f32 %v1381, %v1914
    %1916 = vdwg.mxu0
    %1917 = vmatprep.subr.bf16.mxu0 %v1775
    %1918 = vmatpush1.bf16.msra.mxu0 %v1774
    %1919 = vmatprep.subr.bf16.mxu0 %v1771
    %1920 = vmatpush1.bf16.msra.mxu0 %v1770
    %1921 = vmatprep.subr.bf16.mxu0 %v1767
    %1922 = vmatpush1.bf16.msra.mxu0 %v1766
    %1923 = vmatprep.subr.bf16.mxu0 %v1763
    %1924 = vmatpush1.bf16.msra.mxu0 %v1762
    %1925 = vmatprep.subr.bf16.mxu0 %v1759
    %1926 = vmatpush1.bf16.msra.mxu0 %v1758
    %1927 = vmatprep.subr.bf16.mxu0 %v1755
    %1928 = vmatpush1.bf16.msra.mxu0 %v1754
    %1929 = vmatprep.subr.bf16.mxu0 %v1751
    %1930 = vmatpush1.bf16.msra.mxu0 %v1750
    %1931 = vmatprep.subr.bf16.mxu0 %v1747
    %1932 = vmatpush1.bf16.msra.mxu0 %v1746
    %1933 = vmatprep.subr.bf16.mxu0 0
    %1934 = vmatpush2.bf16.msra.mxu0 0
    %1935 = vmatprep.subr.bf16.mxu0 0
    %1936 = vmatpush2.bf16.msra.mxu0 0
    %1937 = vmatprep.subr.bf16.mxu0 0
    %1938 = vmatpush2.bf16.msra.mxu0 0
    %1939 = vmatprep.subr.bf16.mxu0 0
    %1940 = vmatpush2.bf16.msra.mxu0 0
    %1941 = vmatprep.subr.bf16.mxu0 0
    %1942 = vmatpush2.bf16.msra.mxu0 0
    %1943 = vmatprep.subr.bf16.mxu0 0
    %1944 = vmatpush2.bf16.msra.mxu0 0
    %1945 = vmatprep.subr.bf16.mxu0 0
    %1946 = vmatpush2.bf16.msra.mxu0 0
    %1947 = vmatprep.subr.bf16.mxu0 0
    %1948 = vmatpush2.bf16.msra.mxu0 0
    %1949 = vmatprep.mubr.bf16.mxu0 0
    %1950 = vmatmul.mubr.bf16.gmra.mxu0 %v1275
    %v1951 = vpop.f32.mrf.mxu0
    %v1952 = vadd.f32 %v1909, %v1951
    %v1953 = vpop.f32.mrf.mxu0
    %v1954 = vadd.f32 %v1911, %v1953
    %v1955 = vpop.f32.mrf.mxu0
    %v1956 = vadd.f32 %v1913, %v1955
    %v1957 = vpop.f32.mrf.mxu0
    %v1958 = vadd.f32 %v1915, %v1957
    %1959 = vdwg.mxu0
    %1960 = vmatprep.subr.bf16.mxu0 %v1713
    %1961 = vmatpush1.bf16.msra.mxu0 %v1712
    %1962 = vmatprep.subr.bf16.mxu0 %v1709
    %1963 = vmatpush1.bf16.msra.mxu0 %v1708
    %1964 = vmatprep.subr.bf16.mxu0 %v1705
    %1965 = vmatpush1.bf16.msra.mxu0 %v1704
    %1966 = vmatprep.subr.bf16.mxu0 %v1701
    %1967 = vmatpush1.bf16.msra.mxu0 %v1700
    %1968 = vmatprep.subr.bf16.mxu0 %v1697
    %1969 = vmatpush1.bf16.msra.mxu0 %v1696
    %1970 = vmatprep.subr.bf16.mxu0 %v1693
    %1971 = vmatpush1.bf16.msra.mxu0 %v1692
    %1972 = vmatprep.subr.bf16.mxu0 %v1689
    %1973 = vmatpush1.bf16.msra.mxu0 %v1688
    %1974 = vmatprep.subr.bf16.mxu0 %v1685
    %1975 = vmatpush1.bf16.msra.mxu0 %v1684
    %1976 = vmatprep.subr.bf16.mxu0 %v1745
    %1977 = vmatpush2.bf16.msra.mxu0 %v1744
    %1978 = vmatprep.subr.bf16.mxu0 %v1741
    %1979 = vmatpush2.bf16.msra.mxu0 %v1740
    %1980 = vmatprep.subr.bf16.mxu0 %v1737
    %1981 = vmatpush2.bf16.msra.mxu0 %v1736
    %1982 = vmatprep.subr.bf16.mxu0 %v1733
    %1983 = vmatpush2.bf16.msra.mxu0 %v1732
    %1984 = vmatprep.subr.bf16.mxu0 %v1729
    %1985 = vmatpush2.bf16.msra.mxu0 %v1728
    %1986 = vmatprep.subr.bf16.mxu0 %v1725
    %1987 = vmatpush2.bf16.msra.mxu0 %v1724
    %1988 = vmatprep.subr.bf16.mxu0 %v1721
    %1989 = vmatpush2.bf16.msra.mxu0 %v1720
    %1990 = vmatprep.subr.bf16.mxu0 %v1717
    %1991 = vmatpush2.bf16.msra.mxu0 %v1716
    %1992 = vmatprep.mubr.bf16.mxu0 %v1274
    %1993 = vmatmul.mubr.bf16.gmra.mxu0 %v1273
    %v1994 = vpop.f32.mrf.mxu0
    %v1995 = vadd.f32 %v1385, %v1994
    %v1996 = vpop.f32.mrf.mxu0
    %v1997 = vadd.f32 %v1389, %v1996
    %v1998 = vpop.f32.mrf.mxu0
    %v1999 = vadd.f32 %v1385, %v1998
    %v2000 = vpop.f32.mrf.mxu0
    %v2001 = vadd.f32 %v1389, %v2000
    %2002 = vdwg.mxu0
    %2003 = vmatprep.subr.bf16.mxu0 %v1777
    %2004 = vmatpush1.bf16.msra.mxu0 %v1776
    %2005 = vmatprep.subr.bf16.mxu0 %v1773
    %2006 = vmatpush1.bf16.msra.mxu0 %v1772
    %2007 = vmatprep.subr.bf16.mxu0 %v1769
    %2008 = vmatpush1.bf16.msra.mxu0 %v1768
    %2009 = vmatprep.subr.bf16.mxu0 %v1765
    %2010 = vmatpush1.bf16.msra.mxu0 %v1764
    %2011 = vmatprep.subr.bf16.mxu0 %v1761
    %2012 = vmatpush1.bf16.msra.mxu0 %v1760
    %2013 = vmatprep.subr.bf16.mxu0 %v1757
    %2014 = vmatpush1.bf16.msra.mxu0 %v1756
    %2015 = vmatprep.subr.bf16.mxu0 %v1753
    %2016 = vmatpush1.bf16.msra.mxu0 %v1752
    %2017 = vmatprep.subr.bf16.mxu0 %v1749
    %2018 = vmatpush1.bf16.msra.mxu0 %v1748
    %2019 = vmatprep.subr.bf16.mxu0 0
    %2020 = vmatpush2.bf16.msra.mxu0 0
    %2021 = vmatprep.subr.bf16.mxu0 0
    %2022 = vmatpush2.bf16.msra.mxu0 0
    %2023 = vmatprep.subr.bf16.mxu0 0
    %2024 = vmatpush2.bf16.msra.mxu0 0
    %2025 = vmatprep.subr.bf16.mxu0 0
    %2026 = vmatpush2.bf16.msra.mxu0 0
    %2027 = vmatprep.subr.bf16.mxu0 0
    %2028 = vmatpush2.bf16.msra.mxu0 0
    %2029 = vmatprep.subr.bf16.mxu0 0
    %2030 = vmatpush2.bf16.msra.mxu0 0
    %2031 = vmatprep.subr.bf16.mxu0 0
    %2032 = vmatpush2.bf16.msra.mxu0 0
    %2033 = vmatprep.subr.bf16.mxu0 0
    %2034 = vmatpush2.bf16.msra.mxu0 0
    %2035 = vmatprep.mubr.bf16.mxu0 0
    %2036 = vmatmul.mubr.bf16.gmra.mxu0 %v1275
    %v2037 = vpop.f32.mrf.mxu0
    %v2038 = vadd.f32 %v1995, %v2037
    %v2039 = vpop.f32.mrf.mxu0
    %v2040 = vadd.f32 %v1997, %v2039
    %v2041 = vpop.f32.mrf.mxu0
    %v2042 = vadd.f32 %v1999, %v2041
    %v2043 = vpop.f32.mrf.mxu0
    %v2044 = vadd.f32 %v2001, %v2043
    %2045 = vdwg.mxu0
    %v2046 = vpack.c.bf16 %v1956, %v1952
    %v2047 = vpack.c.bf16 %v1958, %v1954
    %v2048 = vpack.c.bf16 %v2042, %v2038
    %v2049 = vpack.c.bf16 %v2044, %v2040
    %v2050 = vmul.bf16 %v2046, 1056980736
    %v2051 = vmul.bf16 %v2047, 1056980736
    %v2052 = vmul.bf16 %v2048, 1056980736
    %v2053 = vmul.bf16 %v2049, 1056980736
    %v2054 = vtanh.bf16.pop %v2050
    %v2055 = vtanh.bf16.pop %v2051
    %v2056 = vtanh.bf16.pop %v2052
    %v2057 = vtanh.bf16.pop %v2053
    %v2058 = vmul.bf16 %v2054, 1056980736
    %v2059 = vmul.bf16 %v2055, 1056980736
    %v2060 = vmul.bf16 %v2056, 1056980736
    %v2061 = vmul.bf16 %v2057, 1056980736
    %v2062 = vadd.bf16 %v2058, 1056980736
    %v2063 = vadd.bf16 %v2059, 1056980736
    %v2064 = vadd.bf16 %v2060, 1056980736
    %v2065 = vadd.bf16 %v2061, 1056980736
    %v2066 = vld [vmem:[#allocation9] sm:$0xff]
    %v2067 = vld [vmem:[#allocation9 + $0x8] sm:$0xff]
    %v2068 = vld [vmem:[#allocation9 + $0x10] sm:$0xff]
    %v2069 = vld [vmem:[#allocation9 + $0x18] sm:$0xff]
    %v2070 = vld [vmem:[#allocation9 + $0x20] sm:$0xff]
    %v2071 = vld [vmem:[#allocation9 + $0x28] sm:$0xff]
    %v2072 = vld [vmem:[#allocation9 + $0x30] sm:$0xff]
    %v2073 = vld [vmem:[#allocation9 + $0x38] sm:$0xff]
    %v2074 = vld [vmem:[#allocation9 + $0x40] sm:$0xff]
    %v2075 = vld [vmem:[#allocation9 + $0x48] sm:$0xff]
    %v2076 = vld [vmem:[#allocation9 + $0x50] sm:$0xff]
    %v2077 = vld [vmem:[#allocation9 + $0x58] sm:$0xff]
    %v2078 = vld [vmem:[#allocation9 + $0x60] sm:$0xff]
    %v2079 = vld [vmem:[#allocation9 + $0x68] sm:$0xff]
    %v2080 = vld [vmem:[#allocation9 + $0x70] sm:$0xff]
    %v2081 = vld [vmem:[#allocation9 + $0x78] sm:$0xff]
    %v2082 = vld [vmem:[#allocation9 + $0x80] sm:$0xff]
    %v2083 = vld [vmem:[#allocation9 + $0x88] sm:$0xff]
    %v2084 = vld [vmem:[#allocation9 + $0x90] sm:$0xff]
    %v2085 = vld [vmem:[#allocation9 + $0x98] sm:$0xff]
    %v2086 = vld [vmem:[#allocation9 + $0xa0] sm:$0xff]
    %v2087 = vld [vmem:[#allocation9 + $0xa8] sm:$0xff]
    %v2088 = vld [vmem:[#allocation9 + $0xb0] sm:$0xff]
    %v2089 = vld [vmem:[#allocation9 + $0xb8] sm:$0xff]
    %v2090 = vld [vmem:[#allocation9 + $0xc0] sm:$0xff]
    %v2091 = vld [vmem:[#allocation9 + $0xc8] sm:$0xff]
    %v2092 = vld [vmem:[#allocation9 + $0xd0] sm:$0xff]
    %v2093 = vld [vmem:[#allocation9 + $0xd8] sm:$0xff]
    %v2094 = vld [vmem:[#allocation9 + $0xe0] sm:$0xff]
    %v2095 = vld [vmem:[#allocation9 + $0xe8] sm:$0xff]
    %v2096 = vld [vmem:[#allocation9 + $0xf0] sm:$0xff]
    %v2097 = vld [vmem:[#allocation9 + $0xf8] sm:$0xff]
    %v2098 = vld [vmem:[#allocation9 + $0x100] sm:$0xff]
    %v2099 = vld [vmem:[#allocation9 + $0x108] sm:$0xff]
    %v2100 = vld [vmem:[#allocation9 + $0x110] sm:$0xff]
    %v2101 = vld [vmem:[#allocation9 + $0x118] sm:$0xff]
    %v2102 = vld [vmem:[#allocation9 + $0x120] sm:$0xff]
    %v2103 = vld [vmem:[#allocation9 + $0x128] sm:$0xff]
    %v2104 = vld [vmem:[#allocation9 + $0x130] sm:$0xff]
    %v2105 = vld [vmem:[#allocation9 + $0x138] sm:$0xff]
    %v2106 = vld [vmem:[#allocation9 + $0x140] sm:$0xff]
    %v2107 = vld [vmem:[#allocation9 + $0x148] sm:$0xff]
    %v2108 = vld [vmem:[#allocation9 + $0x150] sm:$0xff]
    %v2109 = vld [vmem:[#allocation9 + $0x158] sm:$0xff]
    %v2110 = vld [vmem:[#allocation9 + $0x160] sm:$0xff]
    %v2111 = vld [vmem:[#allocation9 + $0x168] sm:$0xff]
    %v2112 = vld [vmem:[#allocation9 + $0x170] sm:$0xff]
    %v2113 = vld [vmem:[#allocation9 + $0x178] sm:$0xff]
    %v2114 = vld [vmem:[#allocation9 + $0x180] sm:$0xff]
    %v2115 = vld [vmem:[#allocation9 + $0x188] sm:$0xff]
    %v2116 = vld [vmem:[#allocation9 + $0x190] sm:$0xff]
    %v2117 = vld [vmem:[#allocation9 + $0x198] sm:$0xff]
    %v2118 = vld [vmem:[#allocation9 + $0x1a0] sm:$0xff]
    %v2119 = vld [vmem:[#allocation9 + $0x1a8] sm:$0xff]
    %v2120 = vld [vmem:[#allocation9 + $0x1b0] sm:$0xff]
    %v2121 = vld [vmem:[#allocation9 + $0x1b8] sm:$0xff]
    %v2122 = vld [vmem:[#allocation9 + $0x1c0] sm:$0xff]
    %v2123 = vld [vmem:[#allocation9 + $0x1c8] sm:$0xff]
    %v2124 = vld [vmem:[#allocation9 + $0x1d0] sm:$0xff]
    %v2125 = vld [vmem:[#allocation9 + $0x1d8] sm:$0xff]
    %v2126 = vld [vmem:[#allocation9 + $0x1e0] sm:$0xff]
    %v2127 = vld [vmem:[#allocation9 + $0x1e8] sm:$0xff]
    %v2128 = vld [vmem:[#allocation9 + $0x1f0] sm:$0xff]
    %v2129 = vld [vmem:[#allocation9 + $0x1f8] sm:$0xff]
    %v2130 = vld [vmem:[#allocation9 + $0x200] sm:$0xff]
    %v2131 = vld [vmem:[#allocation9 + $0x208] sm:$0xff]
    %v2132 = vld [vmem:[#allocation9 + $0x210] sm:$0xff]
    %v2133 = vld [vmem:[#allocation9 + $0x218] sm:$0xff]
    %v2134 = vld [vmem:[#allocation9 + $0x220] sm:$0xff]
    %v2135 = vld [vmem:[#allocation9 + $0x228] sm:$0xff]
    %v2136 = vld [vmem:[#allocation9 + $0x230] sm:$0xff]
    %v2137 = vld [vmem:[#allocation9 + $0x238] sm:$0xff]
    %v2138 = vld [vmem:[#allocation9 + $0x240] sm:$0xff]
    %v2139 = vld [vmem:[#allocation9 + $0x248] sm:$0xff]
    %v2140 = vld [vmem:[#allocation9 + $0x250] sm:$0xff]
    %v2141 = vld [vmem:[#allocation9 + $0x258] sm:$0xff]
    %v2142 = vld [vmem:[#allocation9 + $0x260] sm:$0xff]
    %v2143 = vld [vmem:[#allocation9 + $0x268] sm:$0xff]
    %v2144 = vld [vmem:[#allocation9 + $0x270] sm:$0xff]
    %v2145 = vld [vmem:[#allocation9 + $0x278] sm:$0xff]
    %v2146 = vld [vmem:[#allocation9 + $0x280] sm:$0xff]
    %v2147 = vld [vmem:[#allocation9 + $0x288] sm:$0xff]
    %v2148 = vld [vmem:[#allocation9 + $0x290] sm:$0xff]
    %v2149 = vld [vmem:[#allocation9 + $0x298] sm:$0xff]
    %v2150 = vld [vmem:[#allocation9 + $0x2a0] sm:$0xff]
    %v2151 = vld [vmem:[#allocation9 + $0x2a8] sm:$0xff]
    %v2152 = vld [vmem:[#allocation9 + $0x2b0] sm:$0xff]
    %v2153 = vld [vmem:[#allocation9 + $0x2b8] sm:$0xff]
    %v2154 = vld [vmem:[#allocation9 + $0x2c0] sm:$0xff]
    %v2155 = vld [vmem:[#allocation9 + $0x2c8] sm:$0xff]
    %v2156 = vld [vmem:[#allocation9 + $0x2d0] sm:$0xff]
    %v2157 = vld [vmem:[#allocation9 + $0x2d8] sm:$0xff]
    %v2158 = vld [vmem:[#allocation9 + $0x2e0] sm:$0xff]
    %v2159 = vld [vmem:[#allocation9 + $0x2e8] sm:$0xff]
    %v2160 = vld [vmem:[#allocation9 + $0x2f0] sm:$0xff]
    %v2161 = vld [vmem:[#allocation9 + $0x2f8] sm:$0xff]
    %v2162 = vld [vmem:[#allocation9 + $0x300] sm:$0xff]
    %v2163 = vld [vmem:[#allocation9 + $0x308] sm:$0xff]
    %v2164 = vld [vmem:[#allocation9 + $0x310] sm:$0xff]
    %v2165 = vld [vmem:[#allocation9 + $0x318] sm:$0xff]
    %v2166 = vld [vmem:[#allocation9 + $0x320] sm:$0xff]
    %v2167 = vld [vmem:[#allocation9 + $0x328] sm:$0xff]
    %v2168 = vld [vmem:[#allocation9 + $0x330] sm:$0xff]
    %v2169 = vld [vmem:[#allocation9 + $0x338] sm:$0xff]
    %v2170 = vld [vmem:[#allocation9 + $0x340] sm:$0xff]
    %v2171 = vld [vmem:[#allocation9 + $0x348] sm:$0xff]
    %v2172 = vld [vmem:[#allocation9 + $0x350] sm:$0xff]
    %v2173 = vld [vmem:[#allocation9 + $0x358] sm:$0xff]
    %v2174 = vld [vmem:[#allocation9 + $0x360] sm:$0xff]
    %v2175 = vld [vmem:[#allocation9 + $0x368] sm:$0xff]
    %v2176 = vld [vmem:[#allocation9 + $0x370] sm:$0xff]
    %v2177 = vld [vmem:[#allocation9 + $0x378] sm:$0xff]
    %v2178 = vld [vmem:[#allocation9 + $0x380] sm:$0xff]
    %v2179 = vld [vmem:[#allocation9 + $0x388] sm:$0xff]
    %v2180 = vld [vmem:[#allocation9 + $0x390] sm:$0xff]
    %v2181 = vld [vmem:[#allocation9 + $0x398] sm:$0xff]
    %v2182 = vld [vmem:[#allocation9 + $0x3a0] sm:$0xff]
    %v2183 = vld [vmem:[#allocation9 + $0x3a8] sm:$0xff]
    %v2184 = vld [vmem:[#allocation9 + $0x3b0] sm:$0xff]
    %v2185 = vld [vmem:[#allocation9 + $0x3b8] sm:$0xff]
    %v2186 = vld [vmem:[#allocation9 + $0x3c0] sm:$0xff]
    %v2187 = vld [vmem:[#allocation9 + $0x3c8] sm:$0xff]
    %v2188 = vld [vmem:[#allocation9 + $0x3d0] sm:$0xff]
    %v2189 = vld [vmem:[#allocation9 + $0x3d8] sm:$0xff]
    %v2190 = vld [vmem:[#allocation9 + $0x3e0] sm:$0xff]
    %v2191 = vld [vmem:[#allocation9 + $0x3e8] sm:$0xff]
    %v2192 = vld [vmem:[#allocation9 + $0x3f0] sm:$0xff]
    %v2193 = vld [vmem:[#allocation9 + $0x3f8] sm:$0xff]
    %v2194 = vld [vmem:[%s10] sm:$0xf]
    %v2196 = vlaneseq
    %v2197 = vshrl.u32 %v2196, 7
    %v2198 = vsub.s32 0, %v2197
    %v2199 = vrot.slane %v2194, %v2198
    %v2200 = vlaneseq
    %v2201 = vshrl.u32 %v2200, 7
    %v2202 = vsub.s32 1, %v2201
    %v2203 = vrot.slane %v2194, %v2202
    %v2204 = vlaneseq
    %v2205 = vshrl.u32 %v2204, 7
    %v2206 = vsub.s32 2, %v2205
    %v2207 = vrot.slane %v2194, %v2206
    %v2208 = vlaneseq
    %v2209 = vshrl.u32 %v2208, 7
    %v2210 = vsub.s32 3, %v2209
    %v2211 = vrot.slane %v2194, %v2210
    %v2344 = vunpack.c.l.b16 %v2066
    %v2345 = vunpack.c.h.b16 %v2066
    %v2346 = vunpack.c.l.b16 %v2067
    %v2347 = vunpack.c.h.b16 %v2067
    %v2348 = vunpack.c.l.b16 %v2068
    %v2349 = vunpack.c.h.b16 %v2068
    %v2350 = vunpack.c.l.b16 %v2069
    %v2351 = vunpack.c.h.b16 %v2069
    %v2352 = vunpack.c.l.b16 %v2070
    %v2353 = vunpack.c.h.b16 %v2070
    %v2354 = vunpack.c.l.b16 %v2071
    %v2355 = vunpack.c.h.b16 %v2071
    %v2356 = vunpack.c.l.b16 %v2072
    %v2357 = vunpack.c.h.b16 %v2072
    %v2358 = vunpack.c.l.b16 %v2073
    %v2359 = vunpack.c.h.b16 %v2073
    %v2360 = vunpack.c.l.b16 %v2074
    %v2361 = vunpack.c.h.b16 %v2074
    %v2362 = vunpack.c.l.b16 %v2075
    %v2363 = vunpack.c.h.b16 %v2075
    %v2364 = vunpack.c.l.b16 %v2076
    %v2365 = vunpack.c.h.b16 %v2076
    %v2366 = vunpack.c.l.b16 %v2077
    %v2367 = vunpack.c.h.b16 %v2077
    %v2368 = vunpack.c.l.b16 %v2078
    %v2369 = vunpack.c.h.b16 %v2078
    %v2370 = vunpack.c.l.b16 %v2079
    %v2371 = vunpack.c.h.b16 %v2079
    %v2372 = vunpack.c.l.b16 %v2080
    %v2373 = vunpack.c.h.b16 %v2080
    %v2374 = vunpack.c.l.b16 %v2081
    %v2375 = vunpack.c.h.b16 %v2081
    %v2376 = vunpack.c.l.b16 %v2082
    %v2377 = vunpack.c.h.b16 %v2082
    %v2378 = vunpack.c.l.b16 %v2083
    %v2379 = vunpack.c.h.b16 %v2083
    %v2380 = vunpack.c.l.b16 %v2084
    %v2381 = vunpack.c.h.b16 %v2084
    %v2382 = vunpack.c.l.b16 %v2085
    %v2383 = vunpack.c.h.b16 %v2085
    %v2384 = vunpack.c.l.b16 %v2086
    %v2385 = vunpack.c.h.b16 %v2086
    %v2386 = vunpack.c.l.b16 %v2087
    %v2387 = vunpack.c.h.b16 %v2087
    %v2388 = vunpack.c.l.b16 %v2088
    %v2389 = vunpack.c.h.b16 %v2088
    %v2390 = vunpack.c.l.b16 %v2089
    %v2391 = vunpack.c.h.b16 %v2089
    %v2392 = vunpack.c.l.b16 %v2090
    %v2393 = vunpack.c.h.b16 %v2090
    %v2394 = vunpack.c.l.b16 %v2091
    %v2395 = vunpack.c.h.b16 %v2091
    %v2396 = vunpack.c.l.b16 %v2092
    %v2397 = vunpack.c.h.b16 %v2092
    %v2398 = vunpack.c.l.b16 %v2093
    %v2399 = vunpack.c.h.b16 %v2093
    %v2400 = vunpack.c.l.b16 %v2094
    %v2401 = vunpack.c.h.b16 %v2094
    %v2402 = vunpack.c.l.b16 %v2095
    %v2403 = vunpack.c.h.b16 %v2095
    %v2404 = vunpack.c.l.b16 %v2096
    %v2405 = vunpack.c.h.b16 %v2096
    %v2406 = vunpack.c.l.b16 %v2097
    %v2407 = vunpack.c.h.b16 %v2097
    %v2408 = vunpack.c.l.b16 %v2098
    %v2409 = vunpack.c.h.b16 %v2098
    %v2410 = vunpack.c.l.b16 %v2099
    %v2411 = vunpack.c.h.b16 %v2099
    %v2412 = vunpack.c.l.b16 %v2100
    %v2413 = vunpack.c.h.b16 %v2100
    %v2414 = vunpack.c.l.b16 %v2101
    %v2415 = vunpack.c.h.b16 %v2101
    %v2416 = vunpack.c.l.b16 %v2102
    %v2417 = vunpack.c.h.b16 %v2102
    %v2418 = vunpack.c.l.b16 %v2103
    %v2419 = vunpack.c.h.b16 %v2103
    %v2420 = vunpack.c.l.b16 %v2104
    %v2421 = vunpack.c.h.b16 %v2104
    %v2422 = vunpack.c.l.b16 %v2105
    %v2423 = vunpack.c.h.b16 %v2105
    %v2424 = vunpack.c.l.b16 %v2106
    %v2425 = vunpack.c.h.b16 %v2106
    %v2426 = vunpack.c.l.b16 %v2107
    %v2427 = vunpack.c.h.b16 %v2107
    %v2428 = vunpack.c.l.b16 %v2108
    %v2429 = vunpack.c.h.b16 %v2108
    %v2430 = vunpack.c.l.b16 %v2109
    %v2431 = vunpack.c.h.b16 %v2109
    %v2432 = vunpack.c.l.b16 %v2110
    %v2433 = vunpack.c.h.b16 %v2110
    %v2434 = vunpack.c.l.b16 %v2111
    %v2435 = vunpack.c.h.b16 %v2111
    %v2436 = vunpack.c.l.b16 %v2112
    %v2437 = vunpack.c.h.b16 %v2112
    %v2438 = vunpack.c.l.b16 %v2113
    %v2439 = vunpack.c.h.b16 %v2113
    %v2440 = vunpack.c.l.b16 %v2114
    %v2441 = vunpack.c.h.b16 %v2114
    %v2442 = vunpack.c.l.b16 %v2115
    %v2443 = vunpack.c.h.b16 %v2115
    %v2444 = vunpack.c.l.b16 %v2116
    %v2445 = vunpack.c.h.b16 %v2116
    %v2446 = vunpack.c.l.b16 %v2117
    %v2447 = vunpack.c.h.b16 %v2117
    %v2448 = vunpack.c.l.b16 %v2118
    %v2449 = vunpack.c.h.b16 %v2118
    %v2450 = vunpack.c.l.b16 %v2119
    %v2451 = vunpack.c.h.b16 %v2119
    %v2452 = vunpack.c.l.b16 %v2120
    %v2453 = vunpack.c.h.b16 %v2120
    %v2454 = vunpack.c.l.b16 %v2121
    %v2455 = vunpack.c.h.b16 %v2121
    %v2456 = vunpack.c.l.b16 %v2122
    %v2457 = vunpack.c.h.b16 %v2122
    %v2458 = vunpack.c.l.b16 %v2123
    %v2459 = vunpack.c.h.b16 %v2123
    %v2460 = vunpack.c.l.b16 %v2124
    %v2461 = vunpack.c.h.b16 %v2124
    %v2462 = vunpack.c.l.b16 %v2125
    %v2463 = vunpack.c.h.b16 %v2125
    %v2464 = vunpack.c.l.b16 %v2126
    %v2465 = vunpack.c.h.b16 %v2126
    %v2466 = vunpack.c.l.b16 %v2127
    %v2467 = vunpack.c.h.b16 %v2127
    %v2468 = vunpack.c.l.b16 %v2128
    %v2469 = vunpack.c.h.b16 %v2128
    %v2470 = vunpack.c.l.b16 %v2129
    %v2471 = vunpack.c.h.b16 %v2129
    %v2472 = vunpack.c.l.b16 %v2130
    %v2473 = vunpack.c.h.b16 %v2130
    %v2474 = vunpack.c.l.b16 %v2131
    %v2475 = vunpack.c.h.b16 %v2131
    %v2476 = vunpack.c.l.b16 %v2132
    %v2477 = vunpack.c.h.b16 %v2132
    %v2478 = vunpack.c.l.b16 %v2133
    %v2479 = vunpack.c.h.b16 %v2133
    %v2480 = vunpack.c.l.b16 %v2134
    %v2481 = vunpack.c.h.b16 %v2134
    %v2482 = vunpack.c.l.b16 %v2135
    %v2483 = vunpack.c.h.b16 %v2135
    %v2484 = vunpack.c.l.b16 %v2136
    %v2485 = vunpack.c.h.b16 %v2136
    %v2486 = vunpack.c.l.b16 %v2137
    %v2487 = vunpack.c.h.b16 %v2137
    %v2488 = vunpack.c.l.b16 %v2138
    %v2489 = vunpack.c.h.b16 %v2138
    %v2490 = vunpack.c.l.b16 %v2139
    %v2491 = vunpack.c.h.b16 %v2139
    %v2492 = vunpack.c.l.b16 %v2140
    %v2493 = vunpack.c.h.b16 %v2140
    %v2494 = vunpack.c.l.b16 %v2141
    %v2495 = vunpack.c.h.b16 %v2141
    %v2496 = vunpack.c.l.b16 %v2142
    %v2497 = vunpack.c.h.b16 %v2142
    %v2498 = vunpack.c.l.b16 %v2143
    %v2499 = vunpack.c.h.b16 %v2143
    %v2500 = vunpack.c.l.b16 %v2144
    %v2501 = vunpack.c.h.b16 %v2144
    %v2502 = vunpack.c.l.b16 %v2145
    %v2503 = vunpack.c.h.b16 %v2145
    %v2504 = vunpack.c.l.b16 %v2146
    %v2505 = vunpack.c.h.b16 %v2146
    %v2506 = vunpack.c.l.b16 %v2147
    %v2507 = vunpack.c.h.b16 %v2147
    %v2508 = vunpack.c.l.b16 %v2148
    %v2509 = vunpack.c.h.b16 %v2148
    %v2510 = vunpack.c.l.b16 %v2149
    %v2511 = vunpack.c.h.b16 %v2149
    %v2512 = vunpack.c.l.b16 %v2150
    %v2513 = vunpack.c.h.b16 %v2150
    %v2514 = vunpack.c.l.b16 %v2151
    %v2515 = vunpack.c.h.b16 %v2151
    %v2516 = vunpack.c.l.b16 %v2152
    %v2517 = vunpack.c.h.b16 %v2152
    %v2518 = vunpack.c.l.b16 %v2153
    %v2519 = vunpack.c.h.b16 %v2153
    %v2520 = vunpack.c.l.b16 %v2154
    %v2521 = vunpack.c.h.b16 %v2154
    %v2522 = vunpack.c.l.b16 %v2155
    %v2523 = vunpack.c.h.b16 %v2155
    %v2524 = vunpack.c.l.b16 %v2156
    %v2525 = vunpack.c.h.b16 %v2156
    %v2526 = vunpack.c.l.b16 %v2157
    %v2527 = vunpack.c.h.b16 %v2157
    %v2528 = vunpack.c.l.b16 %v2158
    %v2529 = vunpack.c.h.b16 %v2158
    %v2530 = vunpack.c.l.b16 %v2159
    %v2531 = vunpack.c.h.b16 %v2159
    %v2532 = vunpack.c.l.b16 %v2160
    %v2533 = vunpack.c.h.b16 %v2160
    %v2534 = vunpack.c.l.b16 %v2161
    %v2535 = vunpack.c.h.b16 %v2161
    %v2536 = vunpack.c.l.b16 %v2162
    %v2537 = vunpack.c.h.b16 %v2162
    %v2538 = vunpack.c.l.b16 %v2163
    %v2539 = vunpack.c.h.b16 %v2163
    %v2540 = vunpack.c.l.b16 %v2164
    %v2541 = vunpack.c.h.b16 %v2164
    %v2542 = vunpack.c.l.b16 %v2165
    %v2543 = vunpack.c.h.b16 %v2165
    %v2544 = vunpack.c.l.b16 %v2166
    %v2545 = vunpack.c.h.b16 %v2166
    %v2546 = vunpack.c.l.b16 %v2167
    %v2547 = vunpack.c.h.b16 %v2167
    %v2548 = vunpack.c.l.b16 %v2168
    %v2549 = vunpack.c.h.b16 %v2168
    %v2550 = vunpack.c.l.b16 %v2169
    %v2551 = vunpack.c.h.b16 %v2169
    %v2552 = vunpack.c.l.b16 %v2170
    %v2553 = vunpack.c.h.b16 %v2170
    %v2554 = vunpack.c.l.b16 %v2171
    %v2555 = vunpack.c.h.b16 %v2171
    %v2556 = vunpack.c.l.b16 %v2172
    %v2557 = vunpack.c.h.b16 %v2172
    %v2558 = vunpack.c.l.b16 %v2173
    %v2559 = vunpack.c.h.b16 %v2173
    %v2560 = vunpack.c.l.b16 %v2174
    %v2561 = vunpack.c.h.b16 %v2174
    %v2562 = vunpack.c.l.b16 %v2175
    %v2563 = vunpack.c.h.b16 %v2175
    %v2564 = vunpack.c.l.b16 %v2176
    %v2565 = vunpack.c.h.b16 %v2176
    %v2566 = vunpack.c.l.b16 %v2177
    %v2567 = vunpack.c.h.b16 %v2177
    %v2568 = vunpack.c.l.b16 %v2178
    %v2569 = vunpack.c.h.b16 %v2178
    %v2570 = vunpack.c.l.b16 %v2179
    %v2571 = vunpack.c.h.b16 %v2179
    %v2572 = vunpack.c.l.b16 %v2180
    %v2573 = vunpack.c.h.b16 %v2180
    %v2574 = vunpack.c.l.b16 %v2181
    %v2575 = vunpack.c.h.b16 %v2181
    %v2576 = vunpack.c.l.b16 %v2182
    %v2577 = vunpack.c.h.b16 %v2182
    %v2578 = vunpack.c.l.b16 %v2183
    %v2579 = vunpack.c.h.b16 %v2183
    %v2580 = vunpack.c.l.b16 %v2184
    %v2581 = vunpack.c.h.b16 %v2184
    %v2582 = vunpack.c.l.b16 %v2185
    %v2583 = vunpack.c.h.b16 %v2185
    %v2584 = vunpack.c.l.b16 %v2186
    %v2585 = vunpack.c.h.b16 %v2186
    %v2586 = vunpack.c.l.b16 %v2187
    %v2587 = vunpack.c.h.b16 %v2187
    %v2588 = vunpack.c.l.b16 %v2188
    %v2589 = vunpack.c.h.b16 %v2188
    %v2590 = vunpack.c.l.b16 %v2189
    %v2591 = vunpack.c.h.b16 %v2189
    %v2592 = vunpack.c.l.b16 %v2190
    %v2593 = vunpack.c.h.b16 %v2190
    %v2594 = vunpack.c.l.b16 %v2191
    %v2595 = vunpack.c.h.b16 %v2191
    %v2596 = vunpack.c.l.b16 %v2192
    %v2597 = vunpack.c.h.b16 %v2192
    %v2598 = vunpack.c.l.b16 %v2193
    %v2599 = vunpack.c.h.b16 %v2193
    %v2600 = vpack.c.b16 %v2348, %v2344
    %v2601 = vpack.c.b16 %v2349, %v2345
    %v2602 = vpack.c.b16 %v2350, %v2346
    %v2603 = vpack.c.b16 %v2351, %v2347
    %v2604 = vpack.c.b16 %v2356, %v2352
    %v2605 = vpack.c.b16 %v2357, %v2353
    %v2606 = vpack.c.b16 %v2358, %v2354
    %v2607 = vpack.c.b16 %v2359, %v2355
    %v2608 = vpack.c.b16 %v2364, %v2360
    %v2609 = vpack.c.b16 %v2365, %v2361
    %v2610 = vpack.c.b16 %v2366, %v2362
    %v2611 = vpack.c.b16 %v2367, %v2363
    %v2612 = vpack.c.b16 %v2372, %v2368
    %v2613 = vpack.c.b16 %v2373, %v2369
    %v2614 = vpack.c.b16 %v2374, %v2370
    %v2615 = vpack.c.b16 %v2375, %v2371
    %v2616 = vpack.c.b16 %v2380, %v2376
    %v2617 = vpack.c.b16 %v2381, %v2377
    %v2618 = vpack.c.b16 %v2382, %v2378
    %v2619 = vpack.c.b16 %v2383, %v2379
    %v2620 = vpack.c.b16 %v2388, %v2384
    %v2621 = vpack.c.b16 %v2389, %v2385
    %v2622 = vpack.c.b16 %v2390, %v2386
    %v2623 = vpack.c.b16 %v2391, %v2387
    %v2624 = vpack.c.b16 %v2396, %v2392
    %v2625 = vpack.c.b16 %v2397, %v2393
    %v2626 = vpack.c.b16 %v2398, %v2394
    %v2627 = vpack.c.b16 %v2399, %v2395
    %v2628 = vpack.c.b16 %v2404, %v2400
    %v2629 = vpack.c.b16 %v2405, %v2401
    %v2630 = vpack.c.b16 %v2406, %v2402
    %v2631 = vpack.c.b16 %v2407, %v2403
    %v2632 = vpack.c.b16 %v2412, %v2408
    %v2633 = vpack.c.b16 %v2413, %v2409
    %v2634 = vpack.c.b16 %v2414, %v2410
    %v2635 = vpack.c.b16 %v2415, %v2411
    %v2636 = vpack.c.b16 %v2420, %v2416
    %v2637 = vpack.c.b16 %v2421, %v2417
    %v2638 = vpack.c.b16 %v2422, %v2418
    %v2639 = vpack.c.b16 %v2423, %v2419
    %v2640 = vpack.c.b16 %v2428, %v2424
    %v2641 = vpack.c.b16 %v2429, %v2425
    %v2642 = vpack.c.b16 %v2430, %v2426
    %v2643 = vpack.c.b16 %v2431, %v2427
    %v2644 = vpack.c.b16 %v2436, %v2432
    %v2645 = vpack.c.b16 %v2437, %v2433
    %v2646 = vpack.c.b16 %v2438, %v2434
    %v2647 = vpack.c.b16 %v2439, %v2435
    %v2648 = vpack.c.b16 %v2444, %v2440
    %v2649 = vpack.c.b16 %v2445, %v2441
    %v2650 = vpack.c.b16 %v2446, %v2442
    %v2651 = vpack.c.b16 %v2447, %v2443
    %v2652 = vpack.c.b16 %v2452, %v2448
    %v2653 = vpack.c.b16 %v2453, %v2449
    %v2654 = vpack.c.b16 %v2454, %v2450
    %v2655 = vpack.c.b16 %v2455, %v2451
    %v2656 = vpack.c.b16 %v2460, %v2456
    %v2657 = vpack.c.b16 %v2461, %v2457
    %v2658 = vpack.c.b16 %v2462, %v2458
    %v2659 = vpack.c.b16 %v2463, %v2459
    %v2660 = vpack.c.b16 %v2468, %v2464
    %v2661 = vpack.c.b16 %v2469, %v2465
    %v2662 = vpack.c.b16 %v2470, %v2466
    %v2663 = vpack.c.b16 %v2471, %v2467
    %v2664 = vpack.c.b16 %v2476, %v2472
    %v2665 = vpack.c.b16 %v2477, %v2473
    %v2666 = vpack.c.b16 %v2478, %v2474
    %v2667 = vpack.c.b16 %v2479, %v2475
    %v2668 = vpack.c.b16 %v2484, %v2480
    %v2669 = vpack.c.b16 %v2485, %v2481
    %v2670 = vpack.c.b16 %v2486, %v2482
    %v2671 = vpack.c.b16 %v2487, %v2483
    %v2672 = vpack.c.b16 %v2492, %v2488
    %v2673 = vpack.c.b16 %v2493, %v2489
    %v2674 = vpack.c.b16 %v2494, %v2490
    %v2675 = vpack.c.b16 %v2495, %v2491
    %v2676 = vpack.c.b16 %v2500, %v2496
    %v2677 = vpack.c.b16 %v2501, %v2497
    %v2678 = vpack.c.b16 %v2502, %v2498
    %v2679 = vpack.c.b16 %v2503, %v2499
    %v2680 = vpack.c.b16 %v2508, %v2504
    %v2681 = vpack.c.b16 %v2509, %v2505
    %v2682 = vpack.c.b16 %v2510, %v2506
    %v2683 = vpack.c.b16 %v2511, %v2507
    %v2684 = vpack.c.b16 %v2516, %v2512
    %v2685 = vpack.c.b16 %v2517, %v2513
    %v2686 = vpack.c.b16 %v2518, %v2514
    %v2687 = vpack.c.b16 %v2519, %v2515
    %v2688 = vpack.c.b16 %v2524, %v2520
    %v2689 = vpack.c.b16 %v2525, %v2521
    %v2690 = vpack.c.b16 %v2526, %v2522
    %v2691 = vpack.c.b16 %v2527, %v2523
    %v2692 = vpack.c.b16 %v2532, %v2528
    %v2693 = vpack.c.b16 %v2533, %v2529
    %v2694 = vpack.c.b16 %v2534, %v2530
    %v2695 = vpack.c.b16 %v2535, %v2531
    %v2696 = vpack.c.b16 %v2540, %v2536
    %v2697 = vpack.c.b16 %v2541, %v2537
    %v2698 = vpack.c.b16 %v2542, %v2538
    %v2699 = vpack.c.b16 %v2543, %v2539
    %v2700 = vpack.c.b16 %v2548, %v2544
    %v2701 = vpack.c.b16 %v2549, %v2545
    %v2702 = vpack.c.b16 %v2550, %v2546
    %v2703 = vpack.c.b16 %v2551, %v2547
    %v2704 = vpack.c.b16 %v2556, %v2552
    %v2705 = vpack.c.b16 %v2557, %v2553
    %v2706 = vpack.c.b16 %v2558, %v2554
    %v2707 = vpack.c.b16 %v2559, %v2555
    %v2708 = vpack.c.b16 %v2564, %v2560
    %v2709 = vpack.c.b16 %v2565, %v2561
    %v2710 = vpack.c.b16 %v2566, %v2562
    %v2711 = vpack.c.b16 %v2567, %v2563
    %v2712 = vpack.c.b16 %v2572, %v2568
    %v2713 = vpack.c.b16 %v2573, %v2569
    %v2714 = vpack.c.b16 %v2574, %v2570
    %v2715 = vpack.c.b16 %v2575, %v2571
    %v2716 = vpack.c.b16 %v2580, %v2576
    %v2717 = vpack.c.b16 %v2581, %v2577
    %v2718 = vpack.c.b16 %v2582, %v2578
    %v2719 = vpack.c.b16 %v2583, %v2579
    %v2720 = vpack.c.b16 %v2588, %v2584
    %v2721 = vpack.c.b16 %v2589, %v2585
    %v2722 = vpack.c.b16 %v2590, %v2586
    %v2723 = vpack.c.b16 %v2591, %v2587
    %v2724 = vpack.c.b16 %v2596, %v2592
    %v2725 = vpack.c.b16 %v2597, %v2593
    %v2726 = vpack.c.b16 %v2598, %v2594
    %v2727 = vpack.c.b16 %v2599, %v2595
    %2856 = vmatprep.subr.bf16.mxu0 %v2629
    %2857 = vmatpush1.bf16.msra.mxu0 %v2628
    %2858 = vmatprep.subr.bf16.mxu0 %v2625
    %2859 = vmatpush1.bf16.msra.mxu0 %v2624
    %2860 = vmatprep.subr.bf16.mxu0 %v2621
    %2861 = vmatpush1.bf16.msra.mxu0 %v2620
    %2862 = vmatprep.subr.bf16.mxu0 %v2617
    %2863 = vmatpush1.bf16.msra.mxu0 %v2616
    %2864 = vmatprep.subr.bf16.mxu0 %v2613
    %2865 = vmatpush1.bf16.msra.mxu0 %v2612
    %2866 = vmatprep.subr.bf16.mxu0 %v2609
    %2867 = vmatpush1.bf16.msra.mxu0 %v2608
    %2868 = vmatprep.subr.bf16.mxu0 %v2605
    %2869 = vmatpush1.bf16.msra.mxu0 %v2604
    %2870 = vmatprep.subr.bf16.mxu0 %v2601
    %2871 = vmatpush1.bf16.msra.mxu0 %v2600
    %2872 = vmatprep.subr.bf16.mxu0 %v2661
    %2873 = vmatpush2.bf16.msra.mxu0 %v2660
    %2874 = vmatprep.subr.bf16.mxu0 %v2657
    %2875 = vmatpush2.bf16.msra.mxu0 %v2656
    %2876 = vmatprep.subr.bf16.mxu0 %v2653
    %2877 = vmatpush2.bf16.msra.mxu0 %v2652
    %2878 = vmatprep.subr.bf16.mxu0 %v2649
    %2879 = vmatpush2.bf16.msra.mxu0 %v2648
    %2880 = vmatprep.subr.bf16.mxu0 %v2645
    %2881 = vmatpush2.bf16.msra.mxu0 %v2644
    %2882 = vmatprep.subr.bf16.mxu0 %v2641
    %2883 = vmatpush2.bf16.msra.mxu0 %v2640
    %2884 = vmatprep.subr.bf16.mxu0 %v2637
    %2885 = vmatpush2.bf16.msra.mxu0 %v2636
    %2886 = vmatprep.subr.bf16.mxu0 %v2633
    %2887 = vmatpush2.bf16.msra.mxu0 %v2632
    %2888 = vmatprep.mubr.bf16.mxu0 %v2063
    %2889 = vmatmul.mubr.bf16.gmra.mxu0 %v2062
    %v2890 = vpop.f32.mrf.mxu0
    %v2891 = vadd.f32 %v2199, %v2890
    %v2892 = vpop.f32.mrf.mxu0
    %v2893 = vadd.f32 %v2203, %v2892
    %v2894 = vpop.f32.mrf.mxu0
    %v2895 = vadd.f32 %v2199, %v2894
    %v2896 = vpop.f32.mrf.mxu0
    %v2897 = vadd.f32 %v2203, %v2896
    %2898 = vdwg.mxu0
    %2899 = vmatprep.subr.bf16.mxu0 %v2693
    %2900 = vmatpush1.bf16.msra.mxu0 %v2692
    %2901 = vmatprep.subr.bf16.mxu0 %v2689
    %2902 = vmatpush1.bf16.msra.mxu0 %v2688
    %2903 = vmatprep.subr.bf16.mxu0 %v2685
    %2904 = vmatpush1.bf16.msra.mxu0 %v2684
    %2905 = vmatprep.subr.bf16.mxu0 %v2681
    %2906 = vmatpush1.bf16.msra.mxu0 %v2680
    %2907 = vmatprep.subr.bf16.mxu0 %v2677
    %2908 = vmatpush1.bf16.msra.mxu0 %v2676
    %2909 = vmatprep.subr.bf16.mxu0 %v2673
    %2910 = vmatpush1.bf16.msra.mxu0 %v2672
    %2911 = vmatprep.subr.bf16.mxu0 %v2669
    %2912 = vmatpush1.bf16.msra.mxu0 %v2668
    %2913 = vmatprep.subr.bf16.mxu0 %v2665
    %2914 = vmatpush1.bf16.msra.mxu0 %v2664
    %2915 = vmatprep.subr.bf16.mxu0 %v2725
    %2916 = vmatpush2.bf16.msra.mxu0 %v2724
    %2917 = vmatprep.subr.bf16.mxu0 %v2721
    %2918 = vmatpush2.bf16.msra.mxu0 %v2720
    %2919 = vmatprep.subr.bf16.mxu0 %v2717
    %2920 = vmatpush2.bf16.msra.mxu0 %v2716
    %2921 = vmatprep.subr.bf16.mxu0 %v2713
    %2922 = vmatpush2.bf16.msra.mxu0 %v2712
    %2923 = vmatprep.subr.bf16.mxu0 %v2709
    %2924 = vmatpush2.bf16.msra.mxu0 %v2708
    %2925 = vmatprep.subr.bf16.mxu0 %v2705
    %2926 = vmatpush2.bf16.msra.mxu0 %v2704
    %2927 = vmatprep.subr.bf16.mxu0 %v2701
    %2928 = vmatpush2.bf16.msra.mxu0 %v2700
    %2929 = vmatprep.subr.bf16.mxu0 %v2697
    %2930 = vmatpush2.bf16.msra.mxu0 %v2696
    %2931 = vmatprep.mubr.bf16.mxu0 %v2065
    %2932 = vmatmul.mubr.bf16.gmra.mxu0 %v2064
    %v2933 = vpop.f32.mrf.mxu0
    %v2934 = vadd.f32 %v2891, %v2933
    %v2935 = vpop.f32.mrf.mxu0
    %v2936 = vadd.f32 %v2893, %v2935
    %v2937 = vpop.f32.mrf.mxu0
    %v2938 = vadd.f32 %v2895, %v2937
    %v2939 = vpop.f32.mrf.mxu0
    %v2940 = vadd.f32 %v2897, %v2939
    %2941 = vdwg.mxu0
    %2942 = vmatprep.subr.bf16.mxu0 %v2631
    %2943 = vmatpush1.bf16.msra.mxu0 %v2630
    %2944 = vmatprep.subr.bf16.mxu0 %v2627
    %2945 = vmatpush1.bf16.msra.mxu0 %v2626
    %2946 = vmatprep.subr.bf16.mxu0 %v2623
    %2947 = vmatpush1.bf16.msra.mxu0 %v2622
    %2948 = vmatprep.subr.bf16.mxu0 %v2619
    %2949 = vmatpush1.bf16.msra.mxu0 %v2618
    %2950 = vmatprep.subr.bf16.mxu0 %v2615
    %2951 = vmatpush1.bf16.msra.mxu0 %v2614
    %2952 = vmatprep.subr.bf16.mxu0 %v2611
    %2953 = vmatpush1.bf16.msra.mxu0 %v2610
    %2954 = vmatprep.subr.bf16.mxu0 %v2607
    %2955 = vmatpush1.bf16.msra.mxu0 %v2606
    %2956 = vmatprep.subr.bf16.mxu0 %v2603
    %2957 = vmatpush1.bf16.msra.mxu0 %v2602
    %2958 = vmatprep.subr.bf16.mxu0 %v2663
    %2959 = vmatpush2.bf16.msra.mxu0 %v2662
    %2960 = vmatprep.subr.bf16.mxu0 %v2659
    %2961 = vmatpush2.bf16.msra.mxu0 %v2658
    %2962 = vmatprep.subr.bf16.mxu0 %v2655
    %2963 = vmatpush2.bf16.msra.mxu0 %v2654
    %2964 = vmatprep.subr.bf16.mxu0 %v2651
    %2965 = vmatpush2.bf16.msra.mxu0 %v2650
    %2966 = vmatprep.subr.bf16.mxu0 %v2647
    %2967 = vmatpush2.bf16.msra.mxu0 %v2646
    %2968 = vmatprep.subr.bf16.mxu0 %v2643
    %2969 = vmatpush2.bf16.msra.mxu0 %v2642
    %2970 = vmatprep.subr.bf16.mxu0 %v2639
    %2971 = vmatpush2.bf16.msra.mxu0 %v2638
    %2972 = vmatprep.subr.bf16.mxu0 %v2635
    %2973 = vmatpush2.bf16.msra.mxu0 %v2634
    %2974 = vmatprep.mubr.bf16.mxu0 %v2063
    %2975 = vmatmul.mubr.bf16.gmra.mxu0 %v2062
    %v2976 = vpop.f32.mrf.mxu0
    %v2977 = vadd.f32 %v2207, %v2976
    %v2978 = vpop.f32.mrf.mxu0
    %v2979 = vadd.f32 %v2211, %v2978
    %v2980 = vpop.f32.mrf.mxu0
    %v2981 = vadd.f32 %v2207, %v2980
    %v2982 = vpop.f32.mrf.mxu0
    %v2983 = vadd.f32 %v2211, %v2982
    %2984 = vdwg.mxu0
    %2985 = vmatprep.subr.bf16.mxu0 %v2695
    %2986 = vmatpush1.bf16.msra.mxu0 %v2694
    %2987 = vmatprep.subr.bf16.mxu0 %v2691
    %2988 = vmatpush1.bf16.msra.mxu0 %v2690
    %2989 = vmatprep.subr.bf16.mxu0 %v2687
    %2990 = vmatpush1.bf16.msra.mxu0 %v2686
    %2991 = vmatprep.subr.bf16.mxu0 %v2683
    %2992 = vmatpush1.bf16.msra.mxu0 %v2682
    %2993 = vmatprep.subr.bf16.mxu0 %v2679
    %2994 = vmatpush1.bf16.msra.mxu0 %v2678
    %2995 = vmatprep.subr.bf16.mxu0 %v2675
    %2996 = vmatpush1.bf16.msra.mxu0 %v2674
    %2997 = vmatprep.subr.bf16.mxu0 %v2671
    %2998 = vmatpush1.bf16.msra.mxu0 %v2670
    %2999 = vmatprep.subr.bf16.mxu0 %v2667
    %3000 = vmatpush1.bf16.msra.mxu0 %v2666
    %3001 = vmatprep.subr.bf16.mxu0 %v2727
    %3002 = vmatpush2.bf16.msra.mxu0 %v2726
    %3003 = vmatprep.subr.bf16.mxu0 %v2723
    %3004 = vmatpush2.bf16.msra.mxu0 %v2722
    %3005 = vmatprep.subr.bf16.mxu0 %v2719
    %3006 = vmatpush2.bf16.msra.mxu0 %v2718
    %3007 = vmatprep.subr.bf16.mxu0 %v2715
    %3008 = vmatpush2.bf16.msra.mxu0 %v2714
    %3009 = vmatprep.subr.bf16.mxu0 %v2711
    %3010 = vmatpush2.bf16.msra.mxu0 %v2710
    %3011 = vmatprep.subr.bf16.mxu0 %v2707
    %3012 = vmatpush2.bf16.msra.mxu0 %v2706
    %3013 = vmatprep.subr.bf16.mxu0 %v2703
    %3014 = vmatpush2.bf16.msra.mxu0 %v2702
    %3015 = vmatprep.subr.bf16.mxu0 %v2699
    %3016 = vmatpush2.bf16.msra.mxu0 %v2698
    %3017 = vmatprep.mubr.bf16.mxu0 %v2065
    %3018 = vmatmul.mubr.bf16.gmra.mxu0 %v2064
    %v3019 = vpop.f32.mrf.mxu0
    %v3020 = vadd.f32 %v2977, %v3019
    %v3021 = vpop.f32.mrf.mxu0
    %v3022 = vadd.f32 %v2979, %v3021
    %v3023 = vpop.f32.mrf.mxu0
    %v3024 = vadd.f32 %v2981, %v3023
    %v3025 = vpop.f32.mrf.mxu0
    %v3026 = vadd.f32 %v2983, %v3025
    %3027 = vdwg.mxu0
    %v3028 = vpack.c.bf16 %v2938, %v2934
    %v3029 = vpack.c.bf16 %v2940, %v2936
    %v3030 = vpack.c.bf16 %v3024, %v3020
    %v3031 = vpack.c.bf16 %v3026, %v3022
    %v3032 = vmul.bf16 %v3028, 1009007652
    %v3033 = vmul.bf16 %v3029, 1009007652
    %v3034 = vmul.bf16 %v3030, 1009007652
    %v3035 = vmul.bf16 %v3031, 1009007652
    %v3036 = vmax.bf16 %v3028, %v3032
    %v3037 = vmax.bf16 %v3029, %v3033
    %v3038 = vmax.bf16 %v3030, %v3034
    %v3039 = vmax.bf16 %v3031, %v3035
    %v3040 = vld [vmem:[#allocation10] sm:$0xff]
    %v3041 = vld [vmem:[#allocation10 + $0x8] sm:$0xff]
    %v3042 = vld [vmem:[#allocation10 + $0x10] sm:$0xff]
    %v3043 = vld [vmem:[#allocation10 + $0x18] sm:$0xff]
    %v3044 = vld [vmem:[#allocation10 + $0x20] sm:$0xff]
    %v3045 = vld [vmem:[#allocation10 + $0x28] sm:$0xff]
    %v3046 = vld [vmem:[#allocation10 + $0x30] sm:$0xff]
    %v3047 = vld [vmem:[#allocation10 + $0x38] sm:$0xff]
    %v3048 = vld [vmem:[#allocation10 + $0x40] sm:$0xff]
    %v3049 = vld [vmem:[#allocation10 + $0x48] sm:$0xff]
    %v3050 = vld [vmem:[#allocation10 + $0x50] sm:$0xff]
    %v3051 = vld [vmem:[#allocation10 + $0x58] sm:$0xff]
    %v3052 = vld [vmem:[#allocation10 + $0x60] sm:$0xff]
    %v3053 = vld [vmem:[#allocation10 + $0x68] sm:$0xff]
    %v3054 = vld [vmem:[#allocation10 + $0x70] sm:$0xff]
    %v3055 = vld [vmem:[#allocation10 + $0x78] sm:$0xff]
    %v3056 = vld [vmem:[#allocation10 + $0x80] sm:$0xff]
    %v3057 = vld [vmem:[#allocation10 + $0x88] sm:$0xff]
    %v3058 = vld [vmem:[#allocation10 + $0x90] sm:$0xff]
    %v3059 = vld [vmem:[#allocation10 + $0x98] sm:$0xff]
    %v3060 = vld [vmem:[#allocation10 + $0xa0] sm:$0xff]
    %v3061 = vld [vmem:[#allocation10 + $0xa8] sm:$0xff]
    %v3062 = vld [vmem:[#allocation10 + $0xb0] sm:$0xff]
    %v3063 = vld [vmem:[#allocation10 + $0xb8] sm:$0xff]
    %v3064 = vld [vmem:[#allocation10 + $0xc0] sm:$0xff]
    %v3065 = vld [vmem:[#allocation10 + $0xc8] sm:$0xff]
    %v3066 = vld [vmem:[#allocation10 + $0xd0] sm:$0xff]
    %v3067 = vld [vmem:[#allocation10 + $0xd8] sm:$0xff]
    %v3068 = vld [vmem:[#allocation10 + $0xe0] sm:$0xff]
    %v3069 = vld [vmem:[#allocation10 + $0xe8] sm:$0xff]
    %v3070 = vld [vmem:[#allocation10 + $0xf0] sm:$0xff]
    %v3071 = vld [vmem:[#allocation10 + $0xf8] sm:$0xff]
    %v3072 = vld [vmem:[#allocation10 + $0x100] sm:$0xff]
    %v3073 = vld [vmem:[#allocation10 + $0x108] sm:$0xff]
    %v3074 = vld [vmem:[#allocation10 + $0x110] sm:$0xff]
    %v3075 = vld [vmem:[#allocation10 + $0x118] sm:$0xff]
    %v3076 = vld [vmem:[#allocation10 + $0x120] sm:$0xff]
    %v3077 = vld [vmem:[#allocation10 + $0x128] sm:$0xff]
    %v3078 = vld [vmem:[#allocation10 + $0x130] sm:$0xff]
    %v3079 = vld [vmem:[#allocation10 + $0x138] sm:$0xff]
    %v3080 = vld [vmem:[#allocation10 + $0x140] sm:$0xff]
    %v3081 = vld [vmem:[#allocation10 + $0x148] sm:$0xff]
    %v3082 = vld [vmem:[#allocation10 + $0x150] sm:$0xff]
    %v3083 = vld [vmem:[#allocation10 + $0x158] sm:$0xff]
    %v3084 = vld [vmem:[#allocation10 + $0x160] sm:$0xff]
    %v3085 = vld [vmem:[#allocation10 + $0x168] sm:$0xff]
    %v3086 = vld [vmem:[#allocation10 + $0x170] sm:$0xff]
    %v3087 = vld [vmem:[#allocation10 + $0x178] sm:$0xff]
    %v3088 = vld [vmem:[#allocation10 + $0x180] sm:$0xff]
    %v3089 = vld [vmem:[#allocation10 + $0x188] sm:$0xff]
    %v3090 = vld [vmem:[#allocation10 + $0x190] sm:$0xff]
    %v3091 = vld [vmem:[#allocation10 + $0x198] sm:$0xff]
    %v3092 = vld [vmem:[#allocation10 + $0x1a0] sm:$0xff]
    %v3093 = vld [vmem:[#allocation10 + $0x1a8] sm:$0xff]
    %v3094 = vld [vmem:[#allocation10 + $0x1b0] sm:$0xff]
    %v3095 = vld [vmem:[#allocation10 + $0x1b8] sm:$0xff]
    %v3096 = vld [vmem:[#allocation10 + $0x1c0] sm:$0xff]
    %v3097 = vld [vmem:[#allocation10 + $0x1c8] sm:$0xff]
    %v3098 = vld [vmem:[#allocation10 + $0x1d0] sm:$0xff]
    %v3099 = vld [vmem:[#allocation10 + $0x1d8] sm:$0xff]
    %v3100 = vld [vmem:[#allocation10 + $0x1e0] sm:$0xff]
    %v3101 = vld [vmem:[#allocation10 + $0x1e8] sm:$0xff]
    %v3102 = vld [vmem:[#allocation10 + $0x1f0] sm:$0xff]
    %v3103 = vld [vmem:[#allocation10 + $0x1f8] sm:$0xff]
    %v3104 = vld [vmem:[#allocation10 + $0x200] sm:$0xff]
    %v3105 = vld [vmem:[#allocation10 + $0x208] sm:$0xff]
    %v3106 = vld [vmem:[#allocation10 + $0x210] sm:$0xff]
    %v3107 = vld [vmem:[#allocation10 + $0x218] sm:$0xff]
    %v3108 = vld [vmem:[#allocation10 + $0x220] sm:$0xff]
    %v3109 = vld [vmem:[#allocation10 + $0x228] sm:$0xff]
    %v3110 = vld [vmem:[#allocation10 + $0x230] sm:$0xff]
    %v3111 = vld [vmem:[#allocation10 + $0x238] sm:$0xff]
    %v3112 = vld [vmem:[#allocation10 + $0x240] sm:$0xff]
    %v3113 = vld [vmem:[#allocation10 + $0x248] sm:$0xff]
    %v3114 = vld [vmem:[#allocation10 + $0x250] sm:$0xff]
    %v3115 = vld [vmem:[#allocation10 + $0x258] sm:$0xff]
    %v3116 = vld [vmem:[#allocation10 + $0x260] sm:$0xff]
    %v3117 = vld [vmem:[#allocation10 + $0x268] sm:$0xff]
    %v3118 = vld [vmem:[#allocation10 + $0x270] sm:$0xff]
    %v3119 = vld [vmem:[#allocation10 + $0x278] sm:$0xff]
    %v3120 = vld [vmem:[#allocation10 + $0x280] sm:$0xff]
    %v3121 = vld [vmem:[#allocation10 + $0x288] sm:$0xff]
    %v3122 = vld [vmem:[#allocation10 + $0x290] sm:$0xff]
    %v3123 = vld [vmem:[#allocation10 + $0x298] sm:$0xff]
    %v3124 = vld [vmem:[#allocation10 + $0x2a0] sm:$0xff]
    %v3125 = vld [vmem:[#allocation10 + $0x2a8] sm:$0xff]
    %v3126 = vld [vmem:[#allocation10 + $0x2b0] sm:$0xff]
    %v3127 = vld [vmem:[#allocation10 + $0x2b8] sm:$0xff]
    %v3128 = vld [vmem:[#allocation10 + $0x2c0] sm:$0xff]
    %v3129 = vld [vmem:[#allocation10 + $0x2c8] sm:$0xff]
    %v3130 = vld [vmem:[#allocation10 + $0x2d0] sm:$0xff]
    %v3131 = vld [vmem:[#allocation10 + $0x2d8] sm:$0xff]
    %v3132 = vld [vmem:[#allocation10 + $0x2e0] sm:$0xff]
    %v3133 = vld [vmem:[#allocation10 + $0x2e8] sm:$0xff]
    %v3134 = vld [vmem:[#allocation10 + $0x2f0] sm:$0xff]
    %v3135 = vld [vmem:[#allocation10 + $0x2f8] sm:$0xff]
    %v3136 = vld [vmem:[#allocation10 + $0x300] sm:$0xff]
    %v3137 = vld [vmem:[#allocation10 + $0x308] sm:$0xff]
    %v3138 = vld [vmem:[#allocation10 + $0x310] sm:$0xff]
    %v3139 = vld [vmem:[#allocation10 + $0x318] sm:$0xff]
    %v3140 = vld [vmem:[#allocation10 + $0x320] sm:$0xff]
    %v3141 = vld [vmem:[#allocation10 + $0x328] sm:$0xff]
    %v3142 = vld [vmem:[#allocation10 + $0x330] sm:$0xff]
    %v3143 = vld [vmem:[#allocation10 + $0x338] sm:$0xff]
    %v3144 = vld [vmem:[#allocation10 + $0x340] sm:$0xff]
    %v3145 = vld [vmem:[#allocation10 + $0x348] sm:$0xff]
    %v3146 = vld [vmem:[#allocation10 + $0x350] sm:$0xff]
    %v3147 = vld [vmem:[#allocation10 + $0x358] sm:$0xff]
    %v3148 = vld [vmem:[#allocation10 + $0x360] sm:$0xff]
    %v3149 = vld [vmem:[#allocation10 + $0x368] sm:$0xff]
    %v3150 = vld [vmem:[#allocation10 + $0x370] sm:$0xff]
    %v3151 = vld [vmem:[#allocation10 + $0x378] sm:$0xff]
    %v3152 = vld [vmem:[#allocation10 + $0x380] sm:$0xff]
    %v3153 = vld [vmem:[#allocation10 + $0x388] sm:$0xff]
    %v3154 = vld [vmem:[#allocation10 + $0x390] sm:$0xff]
    %v3155 = vld [vmem:[#allocation10 + $0x398] sm:$0xff]
    %v3156 = vld [vmem:[#allocation10 + $0x3a0] sm:$0xff]
    %v3157 = vld [vmem:[#allocation10 + $0x3a8] sm:$0xff]
    %v3158 = vld [vmem:[#allocation10 + $0x3b0] sm:$0xff]
    %v3159 = vld [vmem:[#allocation10 + $0x3b8] sm:$0xff]
    %v3160 = vld [vmem:[#allocation10 + $0x3c0] sm:$0xff]
    %v3161 = vld [vmem:[#allocation10 + $0x3c8] sm:$0xff]
    %v3162 = vld [vmem:[#allocation10 + $0x3d0] sm:$0xff]
    %v3163 = vld [vmem:[#allocation10 + $0x3d8] sm:$0xff]
    %v3164 = vld [vmem:[#allocation10 + $0x3e0] sm:$0xff]
    %v3165 = vld [vmem:[#allocation10 + $0x3e8] sm:$0xff]
    %v3166 = vld [vmem:[#allocation10 + $0x3f0] sm:$0xff]
    %v3167 = vld [vmem:[#allocation10 + $0x3f8] sm:$0xff]
    %v3168 = vld [vmem:[%s12] sm:$0xf]
    %v3170 = vlaneseq
    %v3171 = vshrl.u32 %v3170, 7
    %v3172 = vsub.s32 0, %v3171
    %v3173 = vrot.slane %v3168, %v3172
    %v3174 = vlaneseq
    %v3175 = vshrl.u32 %v3174, 7
    %v3176 = vsub.s32 1, %v3175
    %v3177 = vrot.slane %v3168, %v3176
    %v3178 = vlaneseq
    %v3179 = vshrl.u32 %v3178, 7
    %v3180 = vsub.s32 2, %v3179
    %v3181 = vrot.slane %v3168, %v3180
    %v3182 = vlaneseq
    %v3183 = vshrl.u32 %v3182, 7
    %v3184 = vsub.s32 3, %v3183
    %v3185 = vrot.slane %v3168, %v3184
    %v3318 = vunpack.c.l.b16 %v3040
    %v3319 = vunpack.c.h.b16 %v3040
    %v3320 = vunpack.c.l.b16 %v3041
    %v3321 = vunpack.c.h.b16 %v3041
    %v3322 = vunpack.c.l.b16 %v3042
    %v3323 = vunpack.c.h.b16 %v3042
    %v3324 = vunpack.c.l.b16 %v3043
    %v3325 = vunpack.c.h.b16 %v3043
    %v3326 = vunpack.c.l.b16 %v3044
    %v3327 = vunpack.c.h.b16 %v3044
    %v3328 = vunpack.c.l.b16 %v3045
    %v3329 = vunpack.c.h.b16 %v3045
    %v3330 = vunpack.c.l.b16 %v3046
    %v3331 = vunpack.c.h.b16 %v3046
    %v3332 = vunpack.c.l.b16 %v3047
    %v3333 = vunpack.c.h.b16 %v3047
    %v3334 = vunpack.c.l.b16 %v3048
    %v3335 = vunpack.c.h.b16 %v3048
    %v3336 = vunpack.c.l.b16 %v3049
    %v3337 = vunpack.c.h.b16 %v3049
    %v3338 = vunpack.c.l.b16 %v3050
    %v3339 = vunpack.c.h.b16 %v3050
    %v3340 = vunpack.c.l.b16 %v3051
    %v3341 = vunpack.c.h.b16 %v3051
    %v3342 = vunpack.c.l.b16 %v3052
    %v3343 = vunpack.c.h.b16 %v3052
    %v3344 = vunpack.c.l.b16 %v3053
    %v3345 = vunpack.c.h.b16 %v3053
    %v3346 = vunpack.c.l.b16 %v3054
    %v3347 = vunpack.c.h.b16 %v3054
    %v3348 = vunpack.c.l.b16 %v3055
    %v3349 = vunpack.c.h.b16 %v3055
    %v3350 = vunpack.c.l.b16 %v3056
    %v3351 = vunpack.c.h.b16 %v3056
    %v3352 = vunpack.c.l.b16 %v3057
    %v3353 = vunpack.c.h.b16 %v3057
    %v3354 = vunpack.c.l.b16 %v3058
    %v3355 = vunpack.c.h.b16 %v3058
    %v3356 = vunpack.c.l.b16 %v3059
    %v3357 = vunpack.c.h.b16 %v3059
    %v3358 = vunpack.c.l.b16 %v3060
    %v3359 = vunpack.c.h.b16 %v3060
    %v3360 = vunpack.c.l.b16 %v3061
    %v3361 = vunpack.c.h.b16 %v3061
    %v3362 = vunpack.c.l.b16 %v3062
    %v3363 = vunpack.c.h.b16 %v3062
    %v3364 = vunpack.c.l.b16 %v3063
    %v3365 = vunpack.c.h.b16 %v3063
    %v3366 = vunpack.c.l.b16 %v3064
    %v3367 = vunpack.c.h.b16 %v3064
    %v3368 = vunpack.c.l.b16 %v3065
    %v3369 = vunpack.c.h.b16 %v3065
    %v3370 = vunpack.c.l.b16 %v3066
    %v3371 = vunpack.c.h.b16 %v3066
    %v3372 = vunpack.c.l.b16 %v3067
    %v3373 = vunpack.c.h.b16 %v3067
    %v3374 = vunpack.c.l.b16 %v3068
    %v3375 = vunpack.c.h.b16 %v3068
    %v3376 = vunpack.c.l.b16 %v3069
    %v3377 = vunpack.c.h.b16 %v3069
    %v3378 = vunpack.c.l.b16 %v3070
    %v3379 = vunpack.c.h.b16 %v3070
    %v3380 = vunpack.c.l.b16 %v3071
    %v3381 = vunpack.c.h.b16 %v3071
    %v3382 = vunpack.c.l.b16 %v3072
    %v3383 = vunpack.c.h.b16 %v3072
    %v3384 = vunpack.c.l.b16 %v3073
    %v3385 = vunpack.c.h.b16 %v3073
    %v3386 = vunpack.c.l.b16 %v3074
    %v3387 = vunpack.c.h.b16 %v3074
    %v3388 = vunpack.c.l.b16 %v3075
    %v3389 = vunpack.c.h.b16 %v3075
    %v3390 = vunpack.c.l.b16 %v3076
    %v3391 = vunpack.c.h.b16 %v3076
    %v3392 = vunpack.c.l.b16 %v3077
    %v3393 = vunpack.c.h.b16 %v3077
    %v3394 = vunpack.c.l.b16 %v3078
    %v3395 = vunpack.c.h.b16 %v3078
    %v3396 = vunpack.c.l.b16 %v3079
    %v3397 = vunpack.c.h.b16 %v3079
    %v3398 = vunpack.c.l.b16 %v3080
    %v3399 = vunpack.c.h.b16 %v3080
    %v3400 = vunpack.c.l.b16 %v3081
    %v3401 = vunpack.c.h.b16 %v3081
    %v3402 = vunpack.c.l.b16 %v3082
    %v3403 = vunpack.c.h.b16 %v3082
    %v3404 = vunpack.c.l.b16 %v3083
    %v3405 = vunpack.c.h.b16 %v3083
    %v3406 = vunpack.c.l.b16 %v3084
    %v3407 = vunpack.c.h.b16 %v3084
    %v3408 = vunpack.c.l.b16 %v3085
    %v3409 = vunpack.c.h.b16 %v3085
    %v3410 = vunpack.c.l.b16 %v3086
    %v3411 = vunpack.c.h.b16 %v3086
    %v3412 = vunpack.c.l.b16 %v3087
    %v3413 = vunpack.c.h.b16 %v3087
    %v3414 = vunpack.c.l.b16 %v3088
    %v3415 = vunpack.c.h.b16 %v3088
    %v3416 = vunpack.c.l.b16 %v3089
    %v3417 = vunpack.c.h.b16 %v3089
    %v3418 = vunpack.c.l.b16 %v3090
    %v3419 = vunpack.c.h.b16 %v3090
    %v3420 = vunpack.c.l.b16 %v3091
    %v3421 = vunpack.c.h.b16 %v3091
    %v3422 = vunpack.c.l.b16 %v3092
    %v3423 = vunpack.c.h.b16 %v3092
    %v3424 = vunpack.c.l.b16 %v3093
    %v3425 = vunpack.c.h.b16 %v3093
    %v3426 = vunpack.c.l.b16 %v3094
    %v3427 = vunpack.c.h.b16 %v3094
    %v3428 = vunpack.c.l.b16 %v3095
    %v3429 = vunpack.c.h.b16 %v3095
    %v3430 = vunpack.c.l.b16 %v3096
    %v3431 = vunpack.c.h.b16 %v3096
    %v3432 = vunpack.c.l.b16 %v3097
    %v3433 = vunpack.c.h.b16 %v3097
    %v3434 = vunpack.c.l.b16 %v3098
    %v3435 = vunpack.c.h.b16 %v3098
    %v3436 = vunpack.c.l.b16 %v3099
    %v3437 = vunpack.c.h.b16 %v3099
    %v3438 = vunpack.c.l.b16 %v3100
    %v3439 = vunpack.c.h.b16 %v3100
    %v3440 = vunpack.c.l.b16 %v3101
    %v3441 = vunpack.c.h.b16 %v3101
    %v3442 = vunpack.c.l.b16 %v3102
    %v3443 = vunpack.c.h.b16 %v3102
    %v3444 = vunpack.c.l.b16 %v3103
    %v3445 = vunpack.c.h.b16 %v3103
    %v3446 = vunpack.c.l.b16 %v3104
    %v3447 = vunpack.c.h.b16 %v3104
    %v3448 = vunpack.c.l.b16 %v3105
    %v3449 = vunpack.c.h.b16 %v3105
    %v3450 = vunpack.c.l.b16 %v3106
    %v3451 = vunpack.c.h.b16 %v3106
    %v3452 = vunpack.c.l.b16 %v3107
    %v3453 = vunpack.c.h.b16 %v3107
    %v3454 = vunpack.c.l.b16 %v3108
    %v3455 = vunpack.c.h.b16 %v3108
    %v3456 = vunpack.c.l.b16 %v3109
    %v3457 = vunpack.c.h.b16 %v3109
    %v3458 = vunpack.c.l.b16 %v3110
    %v3459 = vunpack.c.h.b16 %v3110
    %v3460 = vunpack.c.l.b16 %v3111
    %v3461 = vunpack.c.h.b16 %v3111
    %v3462 = vunpack.c.l.b16 %v3112
    %v3463 = vunpack.c.h.b16 %v3112
    %v3464 = vunpack.c.l.b16 %v3113
    %v3465 = vunpack.c.h.b16 %v3113
    %v3466 = vunpack.c.l.b16 %v3114
    %v3467 = vunpack.c.h.b16 %v3114
    %v3468 = vunpack.c.l.b16 %v3115
    %v3469 = vunpack.c.h.b16 %v3115
    %v3470 = vunpack.c.l.b16 %v3116
    %v3471 = vunpack.c.h.b16 %v3116
    %v3472 = vunpack.c.l.b16 %v3117
    %v3473 = vunpack.c.h.b16 %v3117
    %v3474 = vunpack.c.l.b16 %v3118
    %v3475 = vunpack.c.h.b16 %v3118
    %v3476 = vunpack.c.l.b16 %v3119
    %v3477 = vunpack.c.h.b16 %v3119
    %v3478 = vunpack.c.l.b16 %v3120
    %v3479 = vunpack.c.h.b16 %v3120
    %v3480 = vunpack.c.l.b16 %v3121
    %v3481 = vunpack.c.h.b16 %v3121
    %v3482 = vunpack.c.l.b16 %v3122
    %v3483 = vunpack.c.h.b16 %v3122
    %v3484 = vunpack.c.l.b16 %v3123
    %v3485 = vunpack.c.h.b16 %v3123
    %v3486 = vunpack.c.l.b16 %v3124
    %v3487 = vunpack.c.h.b16 %v3124
    %v3488 = vunpack.c.l.b16 %v3125
    %v3489 = vunpack.c.h.b16 %v3125
    %v3490 = vunpack.c.l.b16 %v3126
    %v3491 = vunpack.c.h.b16 %v3126
    %v3492 = vunpack.c.l.b16 %v3127
    %v3493 = vunpack.c.h.b16 %v3127
    %v3494 = vunpack.c.l.b16 %v3128
    %v3495 = vunpack.c.h.b16 %v3128
    %v3496 = vunpack.c.l.b16 %v3129
    %v3497 = vunpack.c.h.b16 %v3129
    %v3498 = vunpack.c.l.b16 %v3130
    %v3499 = vunpack.c.h.b16 %v3130
    %v3500 = vunpack.c.l.b16 %v3131
    %v3501 = vunpack.c.h.b16 %v3131
    %v3502 = vunpack.c.l.b16 %v3132
    %v3503 = vunpack.c.h.b16 %v3132
    %v3504 = vunpack.c.l.b16 %v3133
    %v3505 = vunpack.c.h.b16 %v3133
    %v3506 = vunpack.c.l.b16 %v3134
    %v3507 = vunpack.c.h.b16 %v3134
    %v3508 = vunpack.c.l.b16 %v3135
    %v3509 = vunpack.c.h.b16 %v3135
    %v3510 = vunpack.c.l.b16 %v3136
    %v3511 = vunpack.c.h.b16 %v3136
    %v3512 = vunpack.c.l.b16 %v3137
    %v3513 = vunpack.c.h.b16 %v3137
    %v3514 = vunpack.c.l.b16 %v3138
    %v3515 = vunpack.c.h.b16 %v3138
    %v3516 = vunpack.c.l.b16 %v3139
    %v3517 = vunpack.c.h.b16 %v3139
    %v3518 = vunpack.c.l.b16 %v3140
    %v3519 = vunpack.c.h.b16 %v3140
    %v3520 = vunpack.c.l.b16 %v3141
    %v3521 = vunpack.c.h.b16 %v3141
    %v3522 = vunpack.c.l.b16 %v3142
    %v3523 = vunpack.c.h.b16 %v3142
    %v3524 = vunpack.c.l.b16 %v3143
    %v3525 = vunpack.c.h.b16 %v3143
    %v3526 = vunpack.c.l.b16 %v3144
    %v3527 = vunpack.c.h.b16 %v3144
    %v3528 = vunpack.c.l.b16 %v3145
    %v3529 = vunpack.c.h.b16 %v3145
    %v3530 = vunpack.c.l.b16 %v3146
    %v3531 = vunpack.c.h.b16 %v3146
    %v3532 = vunpack.c.l.b16 %v3147
    %v3533 = vunpack.c.h.b16 %v3147
    %v3534 = vunpack.c.l.b16 %v3148
    %v3535 = vunpack.c.h.b16 %v3148
    %v3536 = vunpack.c.l.b16 %v3149
    %v3537 = vunpack.c.h.b16 %v3149
    %v3538 = vunpack.c.l.b16 %v3150
    %v3539 = vunpack.c.h.b16 %v3150
    %v3540 = vunpack.c.l.b16 %v3151
    %v3541 = vunpack.c.h.b16 %v3151
    %v3542 = vunpack.c.l.b16 %v3152
    %v3543 = vunpack.c.h.b16 %v3152
    %v3544 = vunpack.c.l.b16 %v3153
    %v3545 = vunpack.c.h.b16 %v3153
    %v3546 = vunpack.c.l.b16 %v3154
    %v3547 = vunpack.c.h.b16 %v3154
    %v3548 = vunpack.c.l.b16 %v3155
    %v3549 = vunpack.c.h.b16 %v3155
    %v3550 = vunpack.c.l.b16 %v3156
    %v3551 = vunpack.c.h.b16 %v3156
    %v3552 = vunpack.c.l.b16 %v3157
    %v3553 = vunpack.c.h.b16 %v3157
    %v3554 = vunpack.c.l.b16 %v3158
    %v3555 = vunpack.c.h.b16 %v3158
    %v3556 = vunpack.c.l.b16 %v3159
    %v3557 = vunpack.c.h.b16 %v3159
    %v3558 = vunpack.c.l.b16 %v3160
    %v3559 = vunpack.c.h.b16 %v3160
    %v3560 = vunpack.c.l.b16 %v3161
    %v3561 = vunpack.c.h.b16 %v3161
    %v3562 = vunpack.c.l.b16 %v3162
    %v3563 = vunpack.c.h.b16 %v3162
    %v3564 = vunpack.c.l.b16 %v3163
    %v3565 = vunpack.c.h.b16 %v3163
    %v3566 = vunpack.c.l.b16 %v3164
    %v3567 = vunpack.c.h.b16 %v3164
    %v3568 = vunpack.c.l.b16 %v3165
    %v3569 = vunpack.c.h.b16 %v3165
    %v3570 = vunpack.c.l.b16 %v3166
    %v3571 = vunpack.c.h.b16 %v3166
    %v3572 = vunpack.c.l.b16 %v3167
    %v3573 = vunpack.c.h.b16 %v3167
    %v3574 = vpack.c.b16 %v3322, %v3318
    %v3575 = vpack.c.b16 %v3323, %v3319
    %v3576 = vpack.c.b16 %v3324, %v3320
    %v3577 = vpack.c.b16 %v3325, %v3321
    %v3578 = vpack.c.b16 %v3330, %v3326
    %v3579 = vpack.c.b16 %v3331, %v3327
    %v3580 = vpack.c.b16 %v3332, %v3328
    %v3581 = vpack.c.b16 %v3333, %v3329
    %v3582 = vpack.c.b16 %v3338, %v3334
    %v3583 = vpack.c.b16 %v3339, %v3335
    %v3584 = vpack.c.b16 %v3340, %v3336
    %v3585 = vpack.c.b16 %v3341, %v3337
    %v3586 = vpack.c.b16 %v3346, %v3342
    %v3587 = vpack.c.b16 %v3347, %v3343
    %v3588 = vpack.c.b16 %v3348, %v3344
    %v3589 = vpack.c.b16 %v3349, %v3345
    %v3590 = vpack.c.b16 %v3354, %v3350
    %v3591 = vpack.c.b16 %v3355, %v3351
    %v3592 = vpack.c.b16 %v3356, %v3352
    %v3593 = vpack.c.b16 %v3357, %v3353
    %v3594 = vpack.c.b16 %v3362, %v3358
    %v3595 = vpack.c.b16 %v3363, %v3359
    %v3596 = vpack.c.b16 %v3364, %v3360
    %v3597 = vpack.c.b16 %v3365, %v3361
    %v3598 = vpack.c.b16 %v3370, %v3366
    %v3599 = vpack.c.b16 %v3371, %v3367
    %v3600 = vpack.c.b16 %v3372, %v3368
    %v3601 = vpack.c.b16 %v3373, %v3369
    %v3602 = vpack.c.b16 %v3378, %v3374
    %v3603 = vpack.c.b16 %v3379, %v3375
    %v3604 = vpack.c.b16 %v3380, %v3376
    %v3605 = vpack.c.b16 %v3381, %v3377
    %v3606 = vpack.c.b16 %v3386, %v3382
    %v3607 = vpack.c.b16 %v3387, %v3383
    %v3608 = vpack.c.b16 %v3388, %v3384
    %v3609 = vpack.c.b16 %v3389, %v3385
    %v3610 = vpack.c.b16 %v3394, %v3390
    %v3611 = vpack.c.b16 %v3395, %v3391
    %v3612 = vpack.c.b16 %v3396, %v3392
    %v3613 = vpack.c.b16 %v3397, %v3393
    %v3614 = vpack.c.b16 %v3402, %v3398
    %v3615 = vpack.c.b16 %v3403, %v3399
    %v3616 = vpack.c.b16 %v3404, %v3400
    %v3617 = vpack.c.b16 %v3405, %v3401
    %v3618 = vpack.c.b16 %v3410, %v3406
    %v3619 = vpack.c.b16 %v3411, %v3407
    %v3620 = vpack.c.b16 %v3412, %v3408
    %v3621 = vpack.c.b16 %v3413, %v3409
    %v3622 = vpack.c.b16 %v3418, %v3414
    %v3623 = vpack.c.b16 %v3419, %v3415
    %v3624 = vpack.c.b16 %v3420, %v3416
    %v3625 = vpack.c.b16 %v3421, %v3417
    %v3626 = vpack.c.b16 %v3426, %v3422
    %v3627 = vpack.c.b16 %v3427, %v3423
    %v3628 = vpack.c.b16 %v3428, %v3424
    %v3629 = vpack.c.b16 %v3429, %v3425
    %v3630 = vpack.c.b16 %v3434, %v3430
    %v3631 = vpack.c.b16 %v3435, %v3431
    %v3632 = vpack.c.b16 %v3436, %v3432
    %v3633 = vpack.c.b16 %v3437, %v3433
    %v3634 = vpack.c.b16 %v3442, %v3438
    %v3635 = vpack.c.b16 %v3443, %v3439
    %v3636 = vpack.c.b16 %v3444, %v3440
    %v3637 = vpack.c.b16 %v3445, %v3441
    %v3638 = vpack.c.b16 %v3450, %v3446
    %v3639 = vpack.c.b16 %v3451, %v3447
    %v3640 = vpack.c.b16 %v3452, %v3448
    %v3641 = vpack.c.b16 %v3453, %v3449
    %v3642 = vpack.c.b16 %v3458, %v3454
    %v3643 = vpack.c.b16 %v3459, %v3455
    %v3644 = vpack.c.b16 %v3460, %v3456
    %v3645 = vpack.c.b16 %v3461, %v3457
    %v3646 = vpack.c.b16 %v3466, %v3462
    %v3647 = vpack.c.b16 %v3467, %v3463
    %v3648 = vpack.c.b16 %v3468, %v3464
    %v3649 = vpack.c.b16 %v3469, %v3465
    %v3650 = vpack.c.b16 %v3474, %v3470
    %v3651 = vpack.c.b16 %v3475, %v3471
    %v3652 = vpack.c.b16 %v3476, %v3472
    %v3653 = vpack.c.b16 %v3477, %v3473
    %v3654 = vpack.c.b16 %v3482, %v3478
    %v3655 = vpack.c.b16 %v3483, %v3479
    %v3656 = vpack.c.b16 %v3484, %v3480
    %v3657 = vpack.c.b16 %v3485, %v3481
    %v3658 = vpack.c.b16 %v3490, %v3486
    %v3659 = vpack.c.b16 %v3491, %v3487
    %v3660 = vpack.c.b16 %v3492, %v3488
    %v3661 = vpack.c.b16 %v3493, %v3489
    %v3662 = vpack.c.b16 %v3498, %v3494
    %v3663 = vpack.c.b16 %v3499, %v3495
    %v3664 = vpack.c.b16 %v3500, %v3496
    %v3665 = vpack.c.b16 %v3501, %v3497
    %v3666 = vpack.c.b16 %v3506, %v3502
    %v3667 = vpack.c.b16 %v3507, %v3503
    %v3668 = vpack.c.b16 %v3508, %v3504
    %v3669 = vpack.c.b16 %v3509, %v3505
    %v3670 = vpack.c.b16 %v3514, %v3510
    %v3671 = vpack.c.b16 %v3515, %v3511
    %v3672 = vpack.c.b16 %v3516, %v3512
    %v3673 = vpack.c.b16 %v3517, %v3513
    %v3674 = vpack.c.b16 %v3522, %v3518
    %v3675 = vpack.c.b16 %v3523, %v3519
    %v3676 = vpack.c.b16 %v3524, %v3520
    %v3677 = vpack.c.b16 %v3525, %v3521
    %v3678 = vpack.c.b16 %v3530, %v3526
    %v3679 = vpack.c.b16 %v3531, %v3527
    %v3680 = vpack.c.b16 %v3532, %v3528
    %v3681 = vpack.c.b16 %v3533, %v3529
    %v3682 = vpack.c.b16 %v3538, %v3534
    %v3683 = vpack.c.b16 %v3539, %v3535
    %v3684 = vpack.c.b16 %v3540, %v3536
    %v3685 = vpack.c.b16 %v3541, %v3537
    %v3686 = vpack.c.b16 %v3546, %v3542
    %v3687 = vpack.c.b16 %v3547, %v3543
    %v3688 = vpack.c.b16 %v3548, %v3544
    %v3689 = vpack.c.b16 %v3549, %v3545
    %v3690 = vpack.c.b16 %v3554, %v3550
    %v3691 = vpack.c.b16 %v3555, %v3551
    %v3692 = vpack.c.b16 %v3556, %v3552
    %v3693 = vpack.c.b16 %v3557, %v3553
    %v3694 = vpack.c.b16 %v3562, %v3558
    %v3695 = vpack.c.b16 %v3563, %v3559
    %v3696 = vpack.c.b16 %v3564, %v3560
    %v3697 = vpack.c.b16 %v3565, %v3561
    %v3698 = vpack.c.b16 %v3570, %v3566
    %v3699 = vpack.c.b16 %v3571, %v3567
    %v3700 = vpack.c.b16 %v3572, %v3568
    %v3701 = vpack.c.b16 %v3573, %v3569
    %3830 = vmatprep.subr.bf16.mxu0 %v3603
    %3831 = vmatpush1.bf16.msra.mxu0 %v3602
    %3832 = vmatprep.subr.bf16.mxu0 %v3599
    %3833 = vmatpush1.bf16.msra.mxu0 %v3598
    %3834 = vmatprep.subr.bf16.mxu0 %v3595
    %3835 = vmatpush1.bf16.msra.mxu0 %v3594
    %3836 = vmatprep.subr.bf16.mxu0 %v3591
    %3837 = vmatpush1.bf16.msra.mxu0 %v3590
    %3838 = vmatprep.subr.bf16.mxu0 %v3587
    %3839 = vmatpush1.bf16.msra.mxu0 %v3586
    %3840 = vmatprep.subr.bf16.mxu0 %v3583
    %3841 = vmatpush1.bf16.msra.mxu0 %v3582
    %3842 = vmatprep.subr.bf16.mxu0 %v3579
    %3843 = vmatpush1.bf16.msra.mxu0 %v3578
    %3844 = vmatprep.subr.bf16.mxu0 %v3575
    %3845 = vmatpush1.bf16.msra.mxu0 %v3574
    %3846 = vmatprep.subr.bf16.mxu0 %v3635
    %3847 = vmatpush2.bf16.msra.mxu0 %v3634
    %3848 = vmatprep.subr.bf16.mxu0 %v3631
    %3849 = vmatpush2.bf16.msra.mxu0 %v3630
    %3850 = vmatprep.subr.bf16.mxu0 %v3627
    %3851 = vmatpush2.bf16.msra.mxu0 %v3626
    %3852 = vmatprep.subr.bf16.mxu0 %v3623
    %3853 = vmatpush2.bf16.msra.mxu0 %v3622
    %3854 = vmatprep.subr.bf16.mxu0 %v3619
    %3855 = vmatpush2.bf16.msra.mxu0 %v3618
    %3856 = vmatprep.subr.bf16.mxu0 %v3615
    %3857 = vmatpush2.bf16.msra.mxu0 %v3614
    %3858 = vmatprep.subr.bf16.mxu0 %v3611
    %3859 = vmatpush2.bf16.msra.mxu0 %v3610
    %3860 = vmatprep.subr.bf16.mxu0 %v3607
    %3861 = vmatpush2.bf16.msra.mxu0 %v3606
    %3862 = vmatprep.mubr.bf16.mxu0 %v3037
    %3863 = vmatmul.mubr.bf16.gmra.mxu0 %v3036
    %v3864 = vpop.f32.mrf.mxu0
    %v3865 = vadd.f32 %v3173, %v3864
    %v3866 = vpop.f32.mrf.mxu0
    %v3867 = vadd.f32 %v3177, %v3866
    %v3868 = vpop.f32.mrf.mxu0
    %v3869 = vadd.f32 %v3173, %v3868
    %v3870 = vpop.f32.mrf.mxu0
    %v3871 = vadd.f32 %v3177, %v3870
    %3872 = vdwg.mxu0
    %3873 = vmatprep.subr.bf16.mxu0 %v3667
    %3874 = vmatpush1.bf16.msra.mxu0 %v3666
    %3875 = vmatprep.subr.bf16.mxu0 %v3663
    %3876 = vmatpush1.bf16.msra.mxu0 %v3662
    %3877 = vmatprep.subr.bf16.mxu0 %v3659
    %3878 = vmatpush1.bf16.msra.mxu0 %v3658
    %3879 = vmatprep.subr.bf16.mxu0 %v3655
    %3880 = vmatpush1.bf16.msra.mxu0 %v3654
    %3881 = vmatprep.subr.bf16.mxu0 %v3651
    %3882 = vmatpush1.bf16.msra.mxu0 %v3650
    %3883 = vmatprep.subr.bf16.mxu0 %v3647
    %3884 = vmatpush1.bf16.msra.mxu0 %v3646
    %3885 = vmatprep.subr.bf16.mxu0 %v3643
    %3886 = vmatpush1.bf16.msra.mxu0 %v3642
    %3887 = vmatprep.subr.bf16.mxu0 %v3639
    %3888 = vmatpush1.bf16.msra.mxu0 %v3638
    %3889 = vmatprep.subr.bf16.mxu0 %v3699
    %3890 = vmatpush2.bf16.msra.mxu0 %v3698
    %3891 = vmatprep.subr.bf16.mxu0 %v3695
    %3892 = vmatpush2.bf16.msra.mxu0 %v3694
    %3893 = vmatprep.subr.bf16.mxu0 %v3691
    %3894 = vmatpush2.bf16.msra.mxu0 %v3690
    %3895 = vmatprep.subr.bf16.mxu0 %v3687
    %3896 = vmatpush2.bf16.msra.mxu0 %v3686
    %3897 = vmatprep.subr.bf16.mxu0 %v3683
    %3898 = vmatpush2.bf16.msra.mxu0 %v3682
    %3899 = vmatprep.subr.bf16.mxu0 %v3679
    %3900 = vmatpush2.bf16.msra.mxu0 %v3678
    %3901 = vmatprep.subr.bf16.mxu0 %v3675
    %3902 = vmatpush2.bf16.msra.mxu0 %v3674
    %3903 = vmatprep.subr.bf16.mxu0 %v3671
    %3904 = vmatpush2.bf16.msra.mxu0 %v3670
    %3905 = vmatprep.mubr.bf16.mxu0 %v3039
    %3906 = vmatmul.mubr.bf16.gmra.mxu0 %v3038
    %v3907 = vpop.f32.mrf.mxu0
    %v3908 = vadd.f32 %v3865, %v3907
    %v3909 = vpop.f32.mrf.mxu0
    %v3910 = vadd.f32 %v3867, %v3909
    %v3911 = vpop.f32.mrf.mxu0
    %v3912 = vadd.f32 %v3869, %v3911
    %v3913 = vpop.f32.mrf.mxu0
    %v3914 = vadd.f32 %v3871, %v3913
    %3915 = vdwg.mxu0
    %3916 = vmatprep.subr.bf16.mxu0 %v3605
    %3917 = vmatpush1.bf16.msra.mxu0 %v3604
    %3918 = vmatprep.subr.bf16.mxu0 %v3601
    %3919 = vmatpush1.bf16.msra.mxu0 %v3600
    %3920 = vmatprep.subr.bf16.mxu0 %v3597
    %3921 = vmatpush1.bf16.msra.mxu0 %v3596
    %3922 = vmatprep.subr.bf16.mxu0 %v3593
    %3923 = vmatpush1.bf16.msra.mxu0 %v3592
    %3924 = vmatprep.subr.bf16.mxu0 %v3589
    %3925 = vmatpush1.bf16.msra.mxu0 %v3588
    %3926 = vmatprep.subr.bf16.mxu0 %v3585
    %3927 = vmatpush1.bf16.msra.mxu0 %v3584
    %3928 = vmatprep.subr.bf16.mxu0 %v3581
    %3929 = vmatpush1.bf16.msra.mxu0 %v3580
    %3930 = vmatprep.subr.bf16.mxu0 %v3577
    %3931 = vmatpush1.bf16.msra.mxu0 %v3576
    %3932 = vmatprep.subr.bf16.mxu0 %v3637
    %3933 = vmatpush2.bf16.msra.mxu0 %v3636
    %3934 = vmatprep.subr.bf16.mxu0 %v3633
    %3935 = vmatpush2.bf16.msra.mxu0 %v3632
    %3936 = vmatprep.subr.bf16.mxu0 %v3629
    %3937 = vmatpush2.bf16.msra.mxu0 %v3628
    %3938 = vmatprep.subr.bf16.mxu0 %v3625
    %3939 = vmatpush2.bf16.msra.mxu0 %v3624
    %3940 = vmatprep.subr.bf16.mxu0 %v3621
    %3941 = vmatpush2.bf16.msra.mxu0 %v3620
    %3942 = vmatprep.subr.bf16.mxu0 %v3617
    %3943 = vmatpush2.bf16.msra.mxu0 %v3616
    %3944 = vmatprep.subr.bf16.mxu0 %v3613
    %3945 = vmatpush2.bf16.msra.mxu0 %v3612
    %3946 = vmatprep.subr.bf16.mxu0 %v3609
    %3947 = vmatpush2.bf16.msra.mxu0 %v3608
    %3948 = vmatprep.mubr.bf16.mxu0 %v3037
    %3949 = vmatmul.mubr.bf16.gmra.mxu0 %v3036
    %v3950 = vpop.f32.mrf.mxu0
    %v3951 = vadd.f32 %v3181, %v3950
    %v3952 = vpop.f32.mrf.mxu0
    %v3953 = vadd.f32 %v3185, %v3952
    %v3954 = vpop.f32.mrf.mxu0
    %v3955 = vadd.f32 %v3181, %v3954
    %v3956 = vpop.f32.mrf.mxu0
    %v3957 = vadd.f32 %v3185, %v3956
    %3958 = vdwg.mxu0
    %3959 = vmatprep.subr.bf16.mxu0 %v3669
    %3960 = vmatpush1.bf16.msra.mxu0 %v3668
    %3961 = vmatprep.subr.bf16.mxu0 %v3665
    %3962 = vmatpush1.bf16.msra.mxu0 %v3664
    %3963 = vmatprep.subr.bf16.mxu0 %v3661
    %3964 = vmatpush1.bf16.msra.mxu0 %v3660
    %3965 = vmatprep.subr.bf16.mxu0 %v3657
    %3966 = vmatpush1.bf16.msra.mxu0 %v3656
    %3967 = vmatprep.subr.bf16.mxu0 %v3653
    %3968 = vmatpush1.bf16.msra.mxu0 %v3652
    %3969 = vmatprep.subr.bf16.mxu0 %v3649
    %3970 = vmatpush1.bf16.msra.mxu0 %v3648
    %3971 = vmatprep.subr.bf16.mxu0 %v3645
    %3972 = vmatpush1.bf16.msra.mxu0 %v3644
    %3973 = vmatprep.subr.bf16.mxu0 %v3641
    %3974 = vmatpush1.bf16.msra.mxu0 %v3640
    %3975 = vmatprep.subr.bf16.mxu0 %v3701
    %3976 = vmatpush2.bf16.msra.mxu0 %v3700
    %3977 = vmatprep.subr.bf16.mxu0 %v3697
    %3978 = vmatpush2.bf16.msra.mxu0 %v3696
    %3979 = vmatprep.subr.bf16.mxu0 %v3693
    %3980 = vmatpush2.bf16.msra.mxu0 %v3692
    %3981 = vmatprep.subr.bf16.mxu0 %v3689
    %3982 = vmatpush2.bf16.msra.mxu0 %v3688
    %3983 = vmatprep.subr.bf16.mxu0 %v3685
    %3984 = vmatpush2.bf16.msra.mxu0 %v3684
    %3985 = vmatprep.subr.bf16.mxu0 %v3681
    %3986 = vmatpush2.bf16.msra.mxu0 %v3680
    %3987 = vmatprep.subr.bf16.mxu0 %v3677
    %3988 = vmatpush2.bf16.msra.mxu0 %v3676
    %3989 = vmatprep.subr.bf16.mxu0 %v3673
    %3990 = vmatpush2.bf16.msra.mxu0 %v3672
    %3991 = vmatprep.mubr.bf16.mxu0 %v3039
    %3992 = vmatmul.mubr.bf16.gmra.mxu0 %v3038
    %v3993 = vpop.f32.mrf.mxu0
    %v3994 = vadd.f32 %v3951, %v3993
    %v3995 = vpop.f32.mrf.mxu0
    %v3996 = vadd.f32 %v3953, %v3995
    %v3997 = vpop.f32.mrf.mxu0
    %v3998 = vadd.f32 %v3955, %v3997
    %v3999 = vpop.f32.mrf.mxu0
    %v4000 = vadd.f32 %v3957, %v3999
    %4001 = vdwg.mxu0
    %v4002 = vpack.c.bf16 %v3912, %v3908
    %v4003 = vpack.c.bf16 %v3914, %v3910
    %v4004 = vpack.c.bf16 %v3998, %v3994
    %v4005 = vpack.c.bf16 %v4000, %v3996
    %v4006 = vmul.bf16 %v4002, 1009007652
    %v4007 = vmul.bf16 %v4003, 1009007652
    %v4008 = vmul.bf16 %v4004, 1009007652
    %v4009 = vmul.bf16 %v4005, 1009007652
    %v4010 = vmax.bf16 %v4002, %v4006
    %v4011 = vmax.bf16 %v4003, %v4007
    %v4012 = vmax.bf16 %v4004, %v4008
    %v4013 = vmax.bf16 %v4005, %v4009
    %v4014 = vld [vmem:[#allocation12] sm:$0xff]
    %v4015 = vld [vmem:[#allocation12 + $0x8] sm:$0xf]
    %v4016 = vld [vmem:[#allocation12 + $0xc] sm:$0xff]
    %v4017 = vld [vmem:[#allocation12 + $0x14] sm:$0xf]
    %v4018 = vld [vmem:[#allocation12 + $0x18] sm:$0xff]
    %v4019 = vld [vmem:[#allocation12 + $0x20] sm:$0xf]
    %v4020 = vld [vmem:[#allocation12 + $0x24] sm:$0xff]
    %v4021 = vld [vmem:[#allocation12 + $0x2c] sm:$0xf]
    %v4022 = vld [vmem:[#allocation12 + $0x30] sm:$0xff]
    %v4023 = vld [vmem:[#allocation12 + $0x38] sm:$0xf]
    %v4024 = vld [vmem:[#allocation12 + $0x3c] sm:$0xff]
    %v4025 = vld [vmem:[#allocation12 + $0x44] sm:$0xf]
    %v4026 = vld [vmem:[#allocation12 + $0x48] sm:$0xff]
    %v4027 = vld [vmem:[#allocation12 + $0x50] sm:$0xf]
    %v4028 = vld [vmem:[#allocation12 + $0x54] sm:$0xff]
    %v4029 = vld [vmem:[#allocation12 + $0x5c] sm:$0xf]
    %v4030 = vld [vmem:[#allocation12 + $0x60] sm:$0xff]
    %v4031 = vld [vmem:[#allocation12 + $0x68] sm:$0xf]
    %v4032 = vld [vmem:[#allocation12 + $0x6c] sm:$0xff]
    %v4033 = vld [vmem:[#allocation12 + $0x74] sm:$0xf]
    %v4034 = vld [vmem:[#allocation12 + $0x78] sm:$0xff]
    %v4035 = vld [vmem:[#allocation12 + $0x80] sm:$0xf]
    %v4036 = vld [vmem:[#allocation12 + $0x84] sm:$0xff]
    %v4037 = vld [vmem:[#allocation12 + $0x8c] sm:$0xf]
    %v4038 = vld [vmem:[#allocation12 + $0x90] sm:$0xff]
    %v4039 = vld [vmem:[#allocation12 + $0x98] sm:$0xf]
    %v4040 = vld [vmem:[#allocation12 + $0x9c] sm:$0xff]
    %v4041 = vld [vmem:[#allocation12 + $0xa4] sm:$0xf]
    %v4042 = vld [vmem:[#allocation12 + $0xa8] sm:$0xff]
    %v4043 = vld [vmem:[#allocation12 + $0xb0] sm:$0xf]
    %v4044 = vld [vmem:[#allocation12 + $0xb4] sm:$0xff]
    %v4045 = vld [vmem:[#allocation12 + $0xbc] sm:$0xf]
    %v4046 = vld [vmem:[#allocation12 + $0xc0] sm:$0xff]
    %v4047 = vld [vmem:[#allocation12 + $0xc8] sm:$0xf]
    %v4048 = vld [vmem:[#allocation12 + $0xcc] sm:$0xff]
    %v4049 = vld [vmem:[#allocation12 + $0xd4] sm:$0xf]
    %v4050 = vld [vmem:[#allocation12 + $0xd8] sm:$0xff]
    %v4051 = vld [vmem:[#allocation12 + $0xe0] sm:$0xf]
    %v4052 = vld [vmem:[#allocation12 + $0xe4] sm:$0xff]
    %v4053 = vld [vmem:[#allocation12 + $0xec] sm:$0xf]
    %v4054 = vld [vmem:[#allocation12 + $0xf0] sm:$0xff]
    %v4055 = vld [vmem:[#allocation12 + $0xf8] sm:$0xf]
    %v4056 = vld [vmem:[#allocation12 + $0xfc] sm:$0xff]
    %v4057 = vld [vmem:[#allocation12 + $0x104] sm:$0xf]
    %v4058 = vld [vmem:[#allocation12 + $0x108] sm:$0xff]
    %v4059 = vld [vmem:[#allocation12 + $0x110] sm:$0xf]
    %v4060 = vld [vmem:[#allocation12 + $0x114] sm:$0xff]
    %v4061 = vld [vmem:[#allocation12 + $0x11c] sm:$0xf]
    %v4062 = vld [vmem:[#allocation12 + $0x120] sm:$0xff]
    %v4063 = vld [vmem:[#allocation12 + $0x128] sm:$0xf]
    %v4064 = vld [vmem:[#allocation12 + $0x12c] sm:$0xff]
    %v4065 = vld [vmem:[#allocation12 + $0x134] sm:$0xf]
    %v4066 = vld [vmem:[#allocation12 + $0x138] sm:$0xff]
    %v4067 = vld [vmem:[#allocation12 + $0x140] sm:$0xf]
    %v4068 = vld [vmem:[#allocation12 + $0x144] sm:$0xff]
    %v4069 = vld [vmem:[#allocation12 + $0x14c] sm:$0xf]
    %v4070 = vld [vmem:[#allocation12 + $0x150] sm:$0xff]
    %v4071 = vld [vmem:[#allocation12 + $0x158] sm:$0xf]
    %v4072 = vld [vmem:[#allocation12 + $0x15c] sm:$0xff]
    %v4073 = vld [vmem:[#allocation12 + $0x164] sm:$0xf]
    %v4074 = vld [vmem:[#allocation12 + $0x168] sm:$0xff]
    %v4075 = vld [vmem:[#allocation12 + $0x170] sm:$0xf]
    %v4076 = vld [vmem:[#allocation12 + $0x174] sm:$0xff]
    %v4077 = vld [vmem:[#allocation12 + $0x17c] sm:$0xf]
    %v4078 = vld [vmem:[#allocation12 + $0x180] sm:$0xff]
    %v4079 = vld [vmem:[#allocation12 + $0x188] sm:$0xf]
    %v4080 = vld [vmem:[#allocation12 + $0x18c] sm:$0xff]
    %v4081 = vld [vmem:[#allocation12 + $0x194] sm:$0xf]
    %v4082 = vld [vmem:[#allocation12 + $0x198] sm:$0xff]
    %v4083 = vld [vmem:[#allocation12 + $0x1a0] sm:$0xf]
    %v4084 = vld [vmem:[#allocation12 + $0x1a4] sm:$0xff]
    %v4085 = vld [vmem:[#allocation12 + $0x1ac] sm:$0xf]
    %v4086 = vld [vmem:[#allocation12 + $0x1b0] sm:$0xff]
    %v4087 = vld [vmem:[#allocation12 + $0x1b8] sm:$0xf]
    %v4088 = vld [vmem:[#allocation12 + $0x1bc] sm:$0xff]
    %v4089 = vld [vmem:[#allocation12 + $0x1c4] sm:$0xf]
    %v4090 = vld [vmem:[#allocation12 + $0x1c8] sm:$0xff]
    %v4091 = vld [vmem:[#allocation12 + $0x1d0] sm:$0xf]
    %v4092 = vld [vmem:[#allocation12 + $0x1d4] sm:$0xff]
    %v4093 = vld [vmem:[#allocation12 + $0x1dc] sm:$0xf]
    %v4094 = vld [vmem:[#allocation12 + $0x1e0] sm:$0xff]
    %v4095 = vld [vmem:[#allocation12 + $0x1e8] sm:$0xf]
    %v4096 = vld [vmem:[#allocation12 + $0x1ec] sm:$0xff]
    %v4097 = vld [vmem:[#allocation12 + $0x1f4] sm:$0xf]
    %v4098 = vld [vmem:[#allocation12 + $0x1f8] sm:$0xff]
    %v4099 = vld [vmem:[#allocation12 + $0x200] sm:$0xf]
    %v4100 = vld [vmem:[#allocation12 + $0x204] sm:$0xff]
    %v4101 = vld [vmem:[#allocation12 + $0x20c] sm:$0xf]
    %v4102 = vld [vmem:[#allocation12 + $0x210] sm:$0xff]
    %v4103 = vld [vmem:[#allocation12 + $0x218] sm:$0xf]
    %v4104 = vld [vmem:[#allocation12 + $0x21c] sm:$0xff]
    %v4105 = vld [vmem:[#allocation12 + $0x224] sm:$0xf]
    %v4106 = vld [vmem:[#allocation12 + $0x228] sm:$0xff]
    %v4107 = vld [vmem:[#allocation12 + $0x230] sm:$0xf]
    %v4108 = vld [vmem:[#allocation12 + $0x234] sm:$0xff]
    %v4109 = vld [vmem:[#allocation12 + $0x23c] sm:$0xf]
    %v4110 = vld [vmem:[#allocation12 + $0x240] sm:$0xff]
    %v4111 = vld [vmem:[#allocation12 + $0x248] sm:$0xf]
    %v4112 = vld [vmem:[#allocation12 + $0x24c] sm:$0xff]
    %v4113 = vld [vmem:[#allocation12 + $0x254] sm:$0xf]
    %v4114 = vld [vmem:[#allocation12 + $0x258] sm:$0xff]
    %v4115 = vld [vmem:[#allocation12 + $0x260] sm:$0xf]
    %v4116 = vld [vmem:[#allocation12 + $0x264] sm:$0xff]
    %v4117 = vld [vmem:[#allocation12 + $0x26c] sm:$0xf]
    %v4118 = vld [vmem:[#allocation12 + $0x270] sm:$0xff]
    %v4119 = vld [vmem:[#allocation12 + $0x278] sm:$0xf]
    %v4120 = vld [vmem:[#allocation12 + $0x27c] sm:$0xff]
    %v4121 = vld [vmem:[#allocation12 + $0x284] sm:$0xf]
    %v4122 = vld [vmem:[#allocation12 + $0x288] sm:$0xff]
    %v4123 = vld [vmem:[#allocation12 + $0x290] sm:$0xf]
    %v4124 = vld [vmem:[#allocation12 + $0x294] sm:$0xff]
    %v4125 = vld [vmem:[#allocation12 + $0x29c] sm:$0xf]
    %v4126 = vld [vmem:[#allocation12 + $0x2a0] sm:$0xff]
    %v4127 = vld [vmem:[#allocation12 + $0x2a8] sm:$0xf]
    %v4128 = vld [vmem:[#allocation12 + $0x2ac] sm:$0xff]
    %v4129 = vld [vmem:[#allocation12 + $0x2b4] sm:$0xf]
    %v4130 = vld [vmem:[#allocation12 + $0x2b8] sm:$0xff]
    %v4131 = vld [vmem:[#allocation12 + $0x2c0] sm:$0xf]
    %v4132 = vld [vmem:[#allocation12 + $0x2c4] sm:$0xff]
    %v4133 = vld [vmem:[#allocation12 + $0x2cc] sm:$0xf]
    %v4134 = vld [vmem:[#allocation12 + $0x2d0] sm:$0xff]
    %v4135 = vld [vmem:[#allocation12 + $0x2d8] sm:$0xf]
    %v4136 = vld [vmem:[#allocation12 + $0x2dc] sm:$0xff]
    %v4137 = vld [vmem:[#allocation12 + $0x2e4] sm:$0xf]
    %v4138 = vld [vmem:[#allocation12 + $0x2e8] sm:$0xff]
    %v4139 = vld [vmem:[#allocation12 + $0x2f0] sm:$0xf]
    %v4140 = vld [vmem:[#allocation12 + $0x2f4] sm:$0xff]
    %v4141 = vld [vmem:[#allocation12 + $0x2fc] sm:$0xf]
    %v4142 = vld [vmem:[%s14] sm:$0x7]
    %v4144 = vlaneseq
    %v4145 = vshrl.u32 %v4144, 7
    %v4146 = vsub.s32 0, %v4145
    %v4147 = vrot.slane %v4142, %v4146
    %v4148 = vlaneseq
    %v4149 = vshrl.u32 %v4148, 7
    %v4150 = vsub.s32 1, %v4149
    %v4151 = vrot.slane %v4142, %v4150
    %v4152 = vlaneseq
    %v4153 = vshrl.u32 %v4152, 7
    %v4154 = vsub.s32 2, %v4153
    %v4155 = vrot.slane %v4142, %v4154
    %v4287 = vunpack.c.l.b16 %v4014
    %v4288 = vunpack.c.h.b16 %v4014
    %v4289 = vunpack.c.l.b16 %v4015
    %v4290 = vunpack.c.l.b16 %v4016
    %v4291 = vunpack.c.h.b16 %v4016
    %v4292 = vunpack.c.l.b16 %v4017
    %v4293 = vunpack.c.l.b16 %v4018
    %v4294 = vunpack.c.h.b16 %v4018
    %v4295 = vunpack.c.l.b16 %v4019
    %v4296 = vunpack.c.l.b16 %v4020
    %v4297 = vunpack.c.h.b16 %v4020
    %v4298 = vunpack.c.l.b16 %v4021
    %v4299 = vunpack.c.l.b16 %v4022
    %v4300 = vunpack.c.h.b16 %v4022
    %v4301 = vunpack.c.l.b16 %v4023
    %v4302 = vunpack.c.l.b16 %v4024
    %v4303 = vunpack.c.h.b16 %v4024
    %v4304 = vunpack.c.l.b16 %v4025
    %v4305 = vunpack.c.l.b16 %v4026
    %v4306 = vunpack.c.h.b16 %v4026
    %v4307 = vunpack.c.l.b16 %v4027
    %v4308 = vunpack.c.l.b16 %v4028
    %v4309 = vunpack.c.h.b16 %v4028
    %v4310 = vunpack.c.l.b16 %v4029
    %v4311 = vunpack.c.l.b16 %v4030
    %v4312 = vunpack.c.h.b16 %v4030
    %v4313 = vunpack.c.l.b16 %v4031
    %v4314 = vunpack.c.l.b16 %v4032
    %v4315 = vunpack.c.h.b16 %v4032
    %v4316 = vunpack.c.l.b16 %v4033
    %v4317 = vunpack.c.l.b16 %v4034
    %v4318 = vunpack.c.h.b16 %v4034
    %v4319 = vunpack.c.l.b16 %v4035
    %v4320 = vunpack.c.l.b16 %v4036
    %v4321 = vunpack.c.h.b16 %v4036
    %v4322 = vunpack.c.l.b16 %v4037
    %v4323 = vunpack.c.l.b16 %v4038
    %v4324 = vunpack.c.h.b16 %v4038
    %v4325 = vunpack.c.l.b16 %v4039
    %v4326 = vunpack.c.l.b16 %v4040
    %v4327 = vunpack.c.h.b16 %v4040
    %v4328 = vunpack.c.l.b16 %v4041
    %v4329 = vunpack.c.l.b16 %v4042
    %v4330 = vunpack.c.h.b16 %v4042
    %v4331 = vunpack.c.l.b16 %v4043
    %v4332 = vunpack.c.l.b16 %v4044
    %v4333 = vunpack.c.h.b16 %v4044
    %v4334 = vunpack.c.l.b16 %v4045
    %v4335 = vunpack.c.l.b16 %v4046
    %v4336 = vunpack.c.h.b16 %v4046
    %v4337 = vunpack.c.l.b16 %v4047
    %v4338 = vunpack.c.l.b16 %v4048
    %v4339 = vunpack.c.h.b16 %v4048
    %v4340 = vunpack.c.l.b16 %v4049
    %v4341 = vunpack.c.l.b16 %v4050
    %v4342 = vunpack.c.h.b16 %v4050
    %v4343 = vunpack.c.l.b16 %v4051
    %v4344 = vunpack.c.l.b16 %v4052
    %v4345 = vunpack.c.h.b16 %v4052
    %v4346 = vunpack.c.l.b16 %v4053
    %v4347 = vunpack.c.l.b16 %v4054
    %v4348 = vunpack.c.h.b16 %v4054
    %v4349 = vunpack.c.l.b16 %v4055
    %v4350 = vunpack.c.l.b16 %v4056
    %v4351 = vunpack.c.h.b16 %v4056
    %v4352 = vunpack.c.l.b16 %v4057
    %v4353 = vunpack.c.l.b16 %v4058
    %v4354 = vunpack.c.h.b16 %v4058
    %v4355 = vunpack.c.l.b16 %v4059
    %v4356 = vunpack.c.l.b16 %v4060
    %v4357 = vunpack.c.h.b16 %v4060
    %v4358 = vunpack.c.l.b16 %v4061
    %v4359 = vunpack.c.l.b16 %v4062
    %v4360 = vunpack.c.h.b16 %v4062
    %v4361 = vunpack.c.l.b16 %v4063
    %v4362 = vunpack.c.l.b16 %v4064
    %v4363 = vunpack.c.h.b16 %v4064
    %v4364 = vunpack.c.l.b16 %v4065
    %v4365 = vunpack.c.l.b16 %v4066
    %v4366 = vunpack.c.h.b16 %v4066
    %v4367 = vunpack.c.l.b16 %v4067
    %v4368 = vunpack.c.l.b16 %v4068
    %v4369 = vunpack.c.h.b16 %v4068
    %v4370 = vunpack.c.l.b16 %v4069
    %v4371 = vunpack.c.l.b16 %v4070
    %v4372 = vunpack.c.h.b16 %v4070
    %v4373 = vunpack.c.l.b16 %v4071
    %v4374 = vunpack.c.l.b16 %v4072
    %v4375 = vunpack.c.h.b16 %v4072
    %v4376 = vunpack.c.l.b16 %v4073
    %v4377 = vunpack.c.l.b16 %v4074
    %v4378 = vunpack.c.h.b16 %v4074
    %v4379 = vunpack.c.l.b16 %v4075
    %v4380 = vunpack.c.l.b16 %v4076
    %v4381 = vunpack.c.h.b16 %v4076
    %v4382 = vunpack.c.l.b16 %v4077
    %v4383 = vunpack.c.l.b16 %v4078
    %v4384 = vunpack.c.h.b16 %v4078
    %v4385 = vunpack.c.l.b16 %v4079
    %v4386 = vunpack.c.l.b16 %v4080
    %v4387 = vunpack.c.h.b16 %v4080
    %v4388 = vunpack.c.l.b16 %v4081
    %v4389 = vunpack.c.l.b16 %v4082
    %v4390 = vunpack.c.h.b16 %v4082
    %v4391 = vunpack.c.l.b16 %v4083
    %v4392 = vunpack.c.l.b16 %v4084
    %v4393 = vunpack.c.h.b16 %v4084
    %v4394 = vunpack.c.l.b16 %v4085
    %v4395 = vunpack.c.l.b16 %v4086
    %v4396 = vunpack.c.h.b16 %v4086
    %v4397 = vunpack.c.l.b16 %v4087
    %v4398 = vunpack.c.l.b16 %v4088
    %v4399 = vunpack.c.h.b16 %v4088
    %v4400 = vunpack.c.l.b16 %v4089
    %v4401 = vunpack.c.l.b16 %v4090
    %v4402 = vunpack.c.h.b16 %v4090
    %v4403 = vunpack.c.l.b16 %v4091
    %v4404 = vunpack.c.l.b16 %v4092
    %v4405 = vunpack.c.h.b16 %v4092
    %v4406 = vunpack.c.l.b16 %v4093
    %v4407 = vunpack.c.l.b16 %v4094
    %v4408 = vunpack.c.h.b16 %v4094
    %v4409 = vunpack.c.l.b16 %v4095
    %v4410 = vunpack.c.l.b16 %v4096
    %v4411 = vunpack.c.h.b16 %v4096
    %v4412 = vunpack.c.l.b16 %v4097
    %v4413 = vunpack.c.l.b16 %v4098
    %v4414 = vunpack.c.h.b16 %v4098
    %v4415 = vunpack.c.l.b16 %v4099
    %v4416 = vunpack.c.l.b16 %v4100
    %v4417 = vunpack.c.h.b16 %v4100
    %v4418 = vunpack.c.l.b16 %v4101
    %v4419 = vunpack.c.l.b16 %v4102
    %v4420 = vunpack.c.h.b16 %v4102
    %v4421 = vunpack.c.l.b16 %v4103
    %v4422 = vunpack.c.l.b16 %v4104
    %v4423 = vunpack.c.h.b16 %v4104
    %v4424 = vunpack.c.l.b16 %v4105
    %v4425 = vunpack.c.l.b16 %v4106
    %v4426 = vunpack.c.h.b16 %v4106
    %v4427 = vunpack.c.l.b16 %v4107
    %v4428 = vunpack.c.l.b16 %v4108
    %v4429 = vunpack.c.h.b16 %v4108
    %v4430 = vunpack.c.l.b16 %v4109
    %v4431 = vunpack.c.l.b16 %v4110
    %v4432 = vunpack.c.h.b16 %v4110
    %v4433 = vunpack.c.l.b16 %v4111
    %v4434 = vunpack.c.l.b16 %v4112
    %v4435 = vunpack.c.h.b16 %v4112
    %v4436 = vunpack.c.l.b16 %v4113
    %v4437 = vunpack.c.l.b16 %v4114
    %v4438 = vunpack.c.h.b16 %v4114
    %v4439 = vunpack.c.l.b16 %v4115
    %v4440 = vunpack.c.l.b16 %v4116
    %v4441 = vunpack.c.h.b16 %v4116
    %v4442 = vunpack.c.l.b16 %v4117
    %v4443 = vunpack.c.l.b16 %v4118
    %v4444 = vunpack.c.h.b16 %v4118
    %v4445 = vunpack.c.l.b16 %v4119
    %v4446 = vunpack.c.l.b16 %v4120
    %v4447 = vunpack.c.h.b16 %v4120
    %v4448 = vunpack.c.l.b16 %v4121
    %v4449 = vunpack.c.l.b16 %v4122
    %v4450 = vunpack.c.h.b16 %v4122
    %v4451 = vunpack.c.l.b16 %v4123
    %v4452 = vunpack.c.l.b16 %v4124
    %v4453 = vunpack.c.h.b16 %v4124
    %v4454 = vunpack.c.l.b16 %v4125
    %v4455 = vunpack.c.l.b16 %v4126
    %v4456 = vunpack.c.h.b16 %v4126
    %v4457 = vunpack.c.l.b16 %v4127
    %v4458 = vunpack.c.l.b16 %v4128
    %v4459 = vunpack.c.h.b16 %v4128
    %v4460 = vunpack.c.l.b16 %v4129
    %v4461 = vunpack.c.l.b16 %v4130
    %v4462 = vunpack.c.h.b16 %v4130
    %v4463 = vunpack.c.l.b16 %v4131
    %v4464 = vunpack.c.l.b16 %v4132
    %v4465 = vunpack.c.h.b16 %v4132
    %v4466 = vunpack.c.l.b16 %v4133
    %v4467 = vunpack.c.l.b16 %v4134
    %v4468 = vunpack.c.h.b16 %v4134
    %v4469 = vunpack.c.l.b16 %v4135
    %v4470 = vunpack.c.l.b16 %v4136
    %v4471 = vunpack.c.h.b16 %v4136
    %v4472 = vunpack.c.l.b16 %v4137
    %v4473 = vunpack.c.l.b16 %v4138
    %v4474 = vunpack.c.h.b16 %v4138
    %v4475 = vunpack.c.l.b16 %v4139
    %v4476 = vunpack.c.l.b16 %v4140
    %v4477 = vunpack.c.h.b16 %v4140
    %v4478 = vunpack.c.l.b16 %v4141
    %v4479 = vpack.c.b16 %v4290, %v4287
    %v4480 = vpack.c.b16 %v4291, %v4288
    %v4481 = vpack.c.b16 %v4292, %v4289
    %v4482 = vpack.c.b16 %v4296, %v4293
    %v4483 = vpack.c.b16 %v4297, %v4294
    %v4484 = vpack.c.b16 %v4298, %v4295
    %v4485 = vpack.c.b16 %v4302, %v4299
    %v4486 = vpack.c.b16 %v4303, %v4300
    %v4487 = vpack.c.b16 %v4304, %v4301
    %v4488 = vpack.c.b16 %v4308, %v4305
    %v4489 = vpack.c.b16 %v4309, %v4306
    %v4490 = vpack.c.b16 %v4310, %v4307
    %v4491 = vpack.c.b16 %v4314, %v4311
    %v4492 = vpack.c.b16 %v4315, %v4312
    %v4493 = vpack.c.b16 %v4316, %v4313
    %v4494 = vpack.c.b16 %v4320, %v4317
    %v4495 = vpack.c.b16 %v4321, %v4318
    %v4496 = vpack.c.b16 %v4322, %v4319
    %v4497 = vpack.c.b16 %v4326, %v4323
    %v4498 = vpack.c.b16 %v4327, %v4324
    %v4499 = vpack.c.b16 %v4328, %v4325
    %v4500 = vpack.c.b16 %v4332, %v4329
    %v4501 = vpack.c.b16 %v4333, %v4330
    %v4502 = vpack.c.b16 %v4334, %v4331
    %v4503 = vpack.c.b16 %v4338, %v4335
    %v4504 = vpack.c.b16 %v4339, %v4336
    %v4505 = vpack.c.b16 %v4340, %v4337
    %v4506 = vpack.c.b16 %v4344, %v4341
    %v4507 = vpack.c.b16 %v4345, %v4342
    %v4508 = vpack.c.b16 %v4346, %v4343
    %v4509 = vpack.c.b16 %v4350, %v4347
    %v4510 = vpack.c.b16 %v4351, %v4348
    %v4511 = vpack.c.b16 %v4352, %v4349
    %v4512 = vpack.c.b16 %v4356, %v4353
    %v4513 = vpack.c.b16 %v4357, %v4354
    %v4514 = vpack.c.b16 %v4358, %v4355
    %v4515 = vpack.c.b16 %v4362, %v4359
    %v4516 = vpack.c.b16 %v4363, %v4360
    %v4517 = vpack.c.b16 %v4364, %v4361
    %v4518 = vpack.c.b16 %v4368, %v4365
    %v4519 = vpack.c.b16 %v4369, %v4366
    %v4520 = vpack.c.b16 %v4370, %v4367
    %v4521 = vpack.c.b16 %v4374, %v4371
    %v4522 = vpack.c.b16 %v4375, %v4372
    %v4523 = vpack.c.b16 %v4376, %v4373
    %v4524 = vpack.c.b16 %v4380, %v4377
    %v4525 = vpack.c.b16 %v4381, %v4378
    %v4526 = vpack.c.b16 %v4382, %v4379
    %v4527 = vpack.c.b16 %v4386, %v4383
    %v4528 = vpack.c.b16 %v4387, %v4384
    %v4529 = vpack.c.b16 %v4388, %v4385
    %v4530 = vpack.c.b16 %v4392, %v4389
    %v4531 = vpack.c.b16 %v4393, %v4390
    %v4532 = vpack.c.b16 %v4394, %v4391
    %v4533 = vpack.c.b16 %v4398, %v4395
    %v4534 = vpack.c.b16 %v4399, %v4396
    %v4535 = vpack.c.b16 %v4400, %v4397
    %v4536 = vpack.c.b16 %v4404, %v4401
    %v4537 = vpack.c.b16 %v4405, %v4402
    %v4538 = vpack.c.b16 %v4406, %v4403
    %v4539 = vpack.c.b16 %v4410, %v4407
    %v4540 = vpack.c.b16 %v4411, %v4408
    %v4541 = vpack.c.b16 %v4412, %v4409
    %v4542 = vpack.c.b16 %v4416, %v4413
    %v4543 = vpack.c.b16 %v4417, %v4414
    %v4544 = vpack.c.b16 %v4418, %v4415
    %v4545 = vpack.c.b16 %v4422, %v4419
    %v4546 = vpack.c.b16 %v4423, %v4420
    %v4547 = vpack.c.b16 %v4424, %v4421
    %v4548 = vpack.c.b16 %v4428, %v4425
    %v4549 = vpack.c.b16 %v4429, %v4426
    %v4550 = vpack.c.b16 %v4430, %v4427
    %v4551 = vpack.c.b16 %v4434, %v4431
    %v4552 = vpack.c.b16 %v4435, %v4432
    %v4553 = vpack.c.b16 %v4436, %v4433
    %v4554 = vpack.c.b16 %v4440, %v4437
    %v4555 = vpack.c.b16 %v4441, %v4438
    %v4556 = vpack.c.b16 %v4442, %v4439
    %v4557 = vpack.c.b16 %v4446, %v4443
    %v4558 = vpack.c.b16 %v4447, %v4444
    %v4559 = vpack.c.b16 %v4448, %v4445
    %v4560 = vpack.c.b16 %v4452, %v4449
    %v4561 = vpack.c.b16 %v4453, %v4450
    %v4562 = vpack.c.b16 %v4454, %v4451
    %v4563 = vpack.c.b16 %v4458, %v4455
    %v4564 = vpack.c.b16 %v4459, %v4456
    %v4565 = vpack.c.b16 %v4460, %v4457
    %v4566 = vpack.c.b16 %v4464, %v4461
    %v4567 = vpack.c.b16 %v4465, %v4462
    %v4568 = vpack.c.b16 %v4466, %v4463
    %v4569 = vpack.c.b16 %v4470, %v4467
    %v4570 = vpack.c.b16 %v4471, %v4468
    %v4571 = vpack.c.b16 %v4472, %v4469
    %v4572 = vpack.c.b16 %v4476, %v4473
    %v4573 = vpack.c.b16 %v4477, %v4474
    %v4574 = vpack.c.b16 %v4478, %v4475
    %4671 = vmatprep.subr.bf16.mxu0 %v4501
    %4672 = vmatpush1.bf16.msra.mxu0 %v4500
    %4673 = vmatprep.subr.bf16.mxu0 %v4498
    %4674 = vmatpush1.bf16.msra.mxu0 %v4497
    %4675 = vmatprep.subr.bf16.mxu0 %v4495
    %4676 = vmatpush1.bf16.msra.mxu0 %v4494
    %4677 = vmatprep.subr.bf16.mxu0 %v4492
    %4678 = vmatpush1.bf16.msra.mxu0 %v4491
    %4679 = vmatprep.subr.bf16.mxu0 %v4489
    %4680 = vmatpush1.bf16.msra.mxu0 %v4488
    %4681 = vmatprep.subr.bf16.mxu0 %v4486
    %4682 = vmatpush1.bf16.msra.mxu0 %v4485
    %4683 = vmatprep.subr.bf16.mxu0 %v4483
    %4684 = vmatpush1.bf16.msra.mxu0 %v4482
    %4685 = vmatprep.subr.bf16.mxu0 %v4480
    %4686 = vmatpush1.bf16.msra.mxu0 %v4479
    %4687 = vmatprep.subr.bf16.mxu0 %v4525
    %4688 = vmatpush2.bf16.msra.mxu0 %v4524
    %4689 = vmatprep.subr.bf16.mxu0 %v4522
    %4690 = vmatpush2.bf16.msra.mxu0 %v4521
    %4691 = vmatprep.subr.bf16.mxu0 %v4519
    %4692 = vmatpush2.bf16.msra.mxu0 %v4518
    %4693 = vmatprep.subr.bf16.mxu0 %v4516
    %4694 = vmatpush2.bf16.msra.mxu0 %v4515
    %4695 = vmatprep.subr.bf16.mxu0 %v4513
    %4696 = vmatpush2.bf16.msra.mxu0 %v4512
    %4697 = vmatprep.subr.bf16.mxu0 %v4510
    %4698 = vmatpush2.bf16.msra.mxu0 %v4509
    %4699 = vmatprep.subr.bf16.mxu0 %v4507
    %4700 = vmatpush2.bf16.msra.mxu0 %v4506
    %4701 = vmatprep.subr.bf16.mxu0 %v4504
    %4702 = vmatpush2.bf16.msra.mxu0 %v4503
    %4703 = vmatprep.mubr.bf16.mxu0 %v4011
    %4704 = vmatmul.mubr.bf16.gmra.mxu0 %v4010
    %v4705 = vpop.f32.mrf.mxu0
    %v4706 = vadd.f32 %v4147, %v4705
    %v4707 = vpop.f32.mrf.mxu0
    %v4708 = vadd.f32 %v4151, %v4707
    %v4709 = vpop.f32.mrf.mxu0
    %v4710 = vadd.f32 %v4147, %v4709
    %v4711 = vpop.f32.mrf.mxu0
    %v4712 = vadd.f32 %v4151, %v4711
    %4713 = vdwg.mxu0
    %4714 = vmatprep.subr.bf16.mxu0 %v4549
    %4715 = vmatpush1.bf16.msra.mxu0 %v4548
    %4716 = vmatprep.subr.bf16.mxu0 %v4546
    %4717 = vmatpush1.bf16.msra.mxu0 %v4545
    %4718 = vmatprep.subr.bf16.mxu0 %v4543
    %4719 = vmatpush1.bf16.msra.mxu0 %v4542
    %4720 = vmatprep.subr.bf16.mxu0 %v4540
    %4721 = vmatpush1.bf16.msra.mxu0 %v4539
    %4722 = vmatprep.subr.bf16.mxu0 %v4537
    %4723 = vmatpush1.bf16.msra.mxu0 %v4536
    %4724 = vmatprep.subr.bf16.mxu0 %v4534
    %4725 = vmatpush1.bf16.msra.mxu0 %v4533
    %4726 = vmatprep.subr.bf16.mxu0 %v4531
    %4727 = vmatpush1.bf16.msra.mxu0 %v4530
    %4728 = vmatprep.subr.bf16.mxu0 %v4528
    %4729 = vmatpush1.bf16.msra.mxu0 %v4527
    %4730 = vmatprep.subr.bf16.mxu0 %v4573
    %4731 = vmatpush2.bf16.msra.mxu0 %v4572
    %4732 = vmatprep.subr.bf16.mxu0 %v4570
    %4733 = vmatpush2.bf16.msra.mxu0 %v4569
    %4734 = vmatprep.subr.bf16.mxu0 %v4567
    %4735 = vmatpush2.bf16.msra.mxu0 %v4566
    %4736 = vmatprep.subr.bf16.mxu0 %v4564
    %4737 = vmatpush2.bf16.msra.mxu0 %v4563
    %4738 = vmatprep.subr.bf16.mxu0 %v4561
    %4739 = vmatpush2.bf16.msra.mxu0 %v4560
    %4740 = vmatprep.subr.bf16.mxu0 %v4558
    %4741 = vmatpush2.bf16.msra.mxu0 %v4557
    %4742 = vmatprep.subr.bf16.mxu0 %v4555
    %4743 = vmatpush2.bf16.msra.mxu0 %v4554
    %4744 = vmatprep.subr.bf16.mxu0 %v4552
    %4745 = vmatpush2.bf16.msra.mxu0 %v4551
    %4746 = vmatprep.mubr.bf16.mxu0 %v4013
    %4747 = vmatmul.mubr.bf16.gmra.mxu0 %v4012
    %v4748 = vpop.f32.mrf.mxu0
    %v4749 = vadd.f32 %v4706, %v4748
    %v4750 = vpop.f32.mrf.mxu0
    %v4751 = vadd.f32 %v4708, %v4750
    %v4752 = vpop.f32.mrf.mxu0
    %v4753 = vadd.f32 %v4710, %v4752
    %v4754 = vpop.f32.mrf.mxu0
    %v4755 = vadd.f32 %v4712, %v4754
    %4756 = vdwg.mxu0
    %4757 = vmatprep.subr.bf16.mxu0 0
    %4758 = vmatpush1.bf16.msra.mxu0 %v4502
    %4759 = vmatprep.subr.bf16.mxu0 0
    %4760 = vmatpush1.bf16.msra.mxu0 %v4499
    %4761 = vmatprep.subr.bf16.mxu0 0
    %4762 = vmatpush1.bf16.msra.mxu0 %v4496
    %4763 = vmatprep.subr.bf16.mxu0 0
    %4764 = vmatpush1.bf16.msra.mxu0 %v4493
    %4765 = vmatprep.subr.bf16.mxu0 0
    %4766 = vmatpush1.bf16.msra.mxu0 %v4490
    %4767 = vmatprep.subr.bf16.mxu0 0
    %4768 = vmatpush1.bf16.msra.mxu0 %v4487
    %4769 = vmatprep.subr.bf16.mxu0 0
    %4770 = vmatpush1.bf16.msra.mxu0 %v4484
    %4771 = vmatprep.subr.bf16.mxu0 0
    %4772 = vmatpush1.bf16.msra.mxu0 %v4481
    %4773 = vmatprep.subr.bf16.mxu0 0
    %4774 = vmatpush2.bf16.msra.mxu0 %v4526
    %4775 = vmatprep.subr.bf16.mxu0 0
    %4776 = vmatpush2.bf16.msra.mxu0 %v4523
    %4777 = vmatprep.subr.bf16.mxu0 0
    %4778 = vmatpush2.bf16.msra.mxu0 %v4520
    %4779 = vmatprep.subr.bf16.mxu0 0
    %4780 = vmatpush2.bf16.msra.mxu0 %v4517
    %4781 = vmatprep.subr.bf16.mxu0 0
    %4782 = vmatpush2.bf16.msra.mxu0 %v4514
    %4783 = vmatprep.subr.bf16.mxu0 0
    %4784 = vmatpush2.bf16.msra.mxu0 %v4511
    %4785 = vmatprep.subr.bf16.mxu0 0
    %4786 = vmatpush2.bf16.msra.mxu0 %v4508
    %4787 = vmatprep.subr.bf16.mxu0 0
    %4788 = vmatpush2.bf16.msra.mxu0 %v4505
    %4789 = vmatprep.mubr.bf16.mxu0 %v4011
    %4790 = vmatmul.mubr.bf16.gmra.mxu0 %v4010
    %v4791 = vpop.f32.mrf.mxu0
    %v4792 = vadd.f32 %v4155, %v4791
    %v4793 = vpop.f32.mrf.mxu0
    %v4794 = vpop.f32.mrf.mxu0
    %v4795 = vadd.f32 %v4155, %v4794
    %v4796 = vpop.f32.mrf.mxu0
    %4797 = vdwg.mxu0
    %4798 = vmatprep.subr.bf16.mxu0 0
    %4799 = vmatpush1.bf16.msra.mxu0 %v4550
    %4800 = vmatprep.subr.bf16.mxu0 0
    %4801 = vmatpush1.bf16.msra.mxu0 %v4547
    %4802 = vmatprep.subr.bf16.mxu0 0
    %4803 = vmatpush1.bf16.msra.mxu0 %v4544
    %4804 = vmatprep.subr.bf16.mxu0 0
    %4805 = vmatpush1.bf16.msra.mxu0 %v4541
    %4806 = vmatprep.subr.bf16.mxu0 0
    %4807 = vmatpush1.bf16.msra.mxu0 %v4538
    %4808 = vmatprep.subr.bf16.mxu0 0
    %4809 = vmatpush1.bf16.msra.mxu0 %v4535
    %4810 = vmatprep.subr.bf16.mxu0 0
    %4811 = vmatpush1.bf16.msra.mxu0 %v4532
    %4812 = vmatprep.subr.bf16.mxu0 0
    %4813 = vmatpush1.bf16.msra.mxu0 %v4529
    %4814 = vmatprep.subr.bf16.mxu0 0
    %4815 = vmatpush2.bf16.msra.mxu0 %v4574
    %4816 = vmatprep.subr.bf16.mxu0 0
    %4817 = vmatpush2.bf16.msra.mxu0 %v4571
    %4818 = vmatprep.subr.bf16.mxu0 0
    %4819 = vmatpush2.bf16.msra.mxu0 %v4568
    %4820 = vmatprep.subr.bf16.mxu0 0
    %4821 = vmatpush2.bf16.msra.mxu0 %v4565
    %4822 = vmatprep.subr.bf16.mxu0 0
    %4823 = vmatpush2.bf16.msra.mxu0 %v4562
    %4824 = vmatprep.subr.bf16.mxu0 0
    %4825 = vmatpush2.bf16.msra.mxu0 %v4559
    %4826 = vmatprep.subr.bf16.mxu0 0
    %4827 = vmatpush2.bf16.msra.mxu0 %v4556
    %4828 = vmatprep.subr.bf16.mxu0 0
    %4829 = vmatpush2.bf16.msra.mxu0 %v4553
    %4830 = vmatprep.mubr.bf16.mxu0 %v4013
    %4831 = vmatmul.mubr.bf16.gmra.mxu0 %v4012
    %v4832 = vpop.f32.mrf.mxu0
    %v4833 = vadd.f32 %v4792, %v4832
    %v4834 = vpop.f32.mrf.mxu0
    %v4835 = vpop.f32.mrf.mxu0
    %v4836 = vadd.f32 %v4795, %v4835
    %v4837 = vpop.f32.mrf.mxu0
    %4838 = vdwg.mxu0
    %v4839 = vpack.c.bf16 %v4753, %v4749
    %v4840 = vpack.c.bf16 %v4755, %v4751
    %v4841 = vpack.c.bf16 %v4836, %v4833
    %v4842 = vmax.bf16 %v4839, 0
    %v4843 = vmax.bf16 %v4840, 0
    %v4844 = vmax.bf16 %v4841, 0
    %v4845 = vld [vmem:[#allocation13] sm:$0xff]
    %v4846 = vld [vmem:[#allocation13 + $0x8] sm:$0xf]
    %v4847 = vld [vmem:[#allocation13 + $0xc] sm:$0xff]
    %v4848 = vld [vmem:[#allocation13 + $0x14] sm:$0xf]
    %v4849 = vld [vmem:[#allocation13 + $0x18] sm:$0xff]
    %v4850 = vld [vmem:[#allocation13 + $0x20] sm:$0xf]
    %v4851 = vld [vmem:[#allocation13 + $0x24] sm:$0xff]
    %v4852 = vld [vmem:[#allocation13 + $0x2c] sm:$0xf]
    %v4853 = vld [vmem:[#allocation13 + $0x30] sm:$0xff]
    %v4854 = vld [vmem:[#allocation13 + $0x38] sm:$0xf]
    %v4855 = vld [vmem:[#allocation13 + $0x3c] sm:$0xff]
    %v4856 = vld [vmem:[#allocation13 + $0x44] sm:$0xf]
    %v4857 = vld [vmem:[#allocation13 + $0x48] sm:$0xff]
    %v4858 = vld [vmem:[#allocation13 + $0x50] sm:$0xf]
    %v4859 = vld [vmem:[#allocation13 + $0x54] sm:$0xff]
    %v4860 = vld [vmem:[#allocation13 + $0x5c] sm:$0xf]
    %v4861 = vld [vmem:[#allocation13 + $0x60] sm:$0xff]
    %v4862 = vld [vmem:[#allocation13 + $0x68] sm:$0xf]
    %v4863 = vld [vmem:[#allocation13 + $0x6c] sm:$0xff]
    %v4864 = vld [vmem:[#allocation13 + $0x74] sm:$0xf]
    %v4865 = vld [vmem:[#allocation13 + $0x78] sm:$0xff]
    %v4866 = vld [vmem:[#allocation13 + $0x80] sm:$0xf]
    %v4867 = vld [vmem:[#allocation13 + $0x84] sm:$0xff]
    %v4868 = vld [vmem:[#allocation13 + $0x8c] sm:$0xf]
    %v4869 = vld [vmem:[#allocation13 + $0x90] sm:$0xff]
    %v4870 = vld [vmem:[#allocation13 + $0x98] sm:$0xf]
    %v4871 = vld [vmem:[#allocation13 + $0x9c] sm:$0xff]
    %v4872 = vld [vmem:[#allocation13 + $0xa4] sm:$0xf]
    %v4873 = vld [vmem:[#allocation13 + $0xa8] sm:$0xff]
    %v4874 = vld [vmem:[#allocation13 + $0xb0] sm:$0xf]
    %v4875 = vld [vmem:[#allocation13 + $0xb4] sm:$0xff]
    %v4876 = vld [vmem:[#allocation13 + $0xbc] sm:$0xf]
    %v4877 = vld [vmem:[#allocation13 + $0xc0] sm:$0xff]
    %v4878 = vld [vmem:[#allocation13 + $0xc8] sm:$0xf]
    %v4879 = vld [vmem:[#allocation13 + $0xcc] sm:$0xff]
    %v4880 = vld [vmem:[#allocation13 + $0xd4] sm:$0xf]
    %v4881 = vld [vmem:[#allocation13 + $0xd8] sm:$0xff]
    %v4882 = vld [vmem:[#allocation13 + $0xe0] sm:$0xf]
    %v4883 = vld [vmem:[#allocation13 + $0xe4] sm:$0xff]
    %v4884 = vld [vmem:[#allocation13 + $0xec] sm:$0xf]
    %v4885 = vld [vmem:[#allocation13 + $0xf0] sm:$0xff]
    %v4886 = vld [vmem:[#allocation13 + $0xf8] sm:$0xf]
    %v4887 = vld [vmem:[#allocation13 + $0xfc] sm:$0xff]
    %v4888 = vld [vmem:[#allocation13 + $0x104] sm:$0xf]
    %v4889 = vld [vmem:[#allocation13 + $0x108] sm:$0xff]
    %v4890 = vld [vmem:[#allocation13 + $0x110] sm:$0xf]
    %v4891 = vld [vmem:[#allocation13 + $0x114] sm:$0xff]
    %v4892 = vld [vmem:[#allocation13 + $0x11c] sm:$0xf]
    %v4893 = vld [vmem:[#allocation13 + $0x120] sm:$0xff]
    %v4894 = vld [vmem:[#allocation13 + $0x128] sm:$0xf]
    %v4895 = vld [vmem:[#allocation13 + $0x12c] sm:$0xff]
    %v4896 = vld [vmem:[#allocation13 + $0x134] sm:$0xf]
    %v4897 = vld [vmem:[#allocation13 + $0x138] sm:$0xff]
    %v4898 = vld [vmem:[#allocation13 + $0x140] sm:$0xf]
    %v4899 = vld [vmem:[#allocation13 + $0x144] sm:$0xff]
    %v4900 = vld [vmem:[#allocation13 + $0x14c] sm:$0xf]
    %v4901 = vld [vmem:[#allocation13 + $0x150] sm:$0xff]
    %v4902 = vld [vmem:[#allocation13 + $0x158] sm:$0xf]
    %v4903 = vld [vmem:[#allocation13 + $0x15c] sm:$0xff]
    %v4904 = vld [vmem:[#allocation13 + $0x164] sm:$0xf]
    %v4905 = vld [vmem:[#allocation13 + $0x168] sm:$0xff]
    %v4906 = vld [vmem:[#allocation13 + $0x170] sm:$0xf]
    %v4907 = vld [vmem:[#allocation13 + $0x174] sm:$0xff]
    %v4908 = vld [vmem:[#allocation13 + $0x17c] sm:$0xf]
    %v4909 = vld [vmem:[#allocation13 + $0x180] sm:$0xff]
    %v4910 = vld [vmem:[#allocation13 + $0x188] sm:$0xf]
    %v4911 = vld [vmem:[#allocation13 + $0x18c] sm:$0xff]
    %v4912 = vld [vmem:[#allocation13 + $0x194] sm:$0xf]
    %v4913 = vld [vmem:[#allocation13 + $0x198] sm:$0xff]
    %v4914 = vld [vmem:[#allocation13 + $0x1a0] sm:$0xf]
    %v4915 = vld [vmem:[#allocation13 + $0x1a4] sm:$0xff]
    %v4916 = vld [vmem:[#allocation13 + $0x1ac] sm:$0xf]
    %v4917 = vld [vmem:[#allocation13 + $0x1b0] sm:$0xff]
    %v4918 = vld [vmem:[#allocation13 + $0x1b8] sm:$0xf]
    %v4919 = vld [vmem:[#allocation13 + $0x1bc] sm:$0xff]
    %v4920 = vld [vmem:[#allocation13 + $0x1c4] sm:$0xf]
    %v4921 = vld [vmem:[#allocation13 + $0x1c8] sm:$0xff]
    %v4922 = vld [vmem:[#allocation13 + $0x1d0] sm:$0xf]
    %v4923 = vld [vmem:[#allocation13 + $0x1d4] sm:$0xff]
    %v4924 = vld [vmem:[#allocation13 + $0x1dc] sm:$0xf]
    %v4925 = vld [vmem:[#allocation13 + $0x1e0] sm:$0xff]
    %v4926 = vld [vmem:[#allocation13 + $0x1e8] sm:$0xf]
    %v4927 = vld [vmem:[#allocation13 + $0x1ec] sm:$0xff]
    %v4928 = vld [vmem:[#allocation13 + $0x1f4] sm:$0xf]
    %v4929 = vld [vmem:[#allocation13 + $0x1f8] sm:$0xff]
    %v4930 = vld [vmem:[#allocation13 + $0x200] sm:$0xf]
    %v4931 = vld [vmem:[#allocation13 + $0x204] sm:$0xff]
    %v4932 = vld [vmem:[#allocation13 + $0x20c] sm:$0xf]
    %v4933 = vld [vmem:[#allocation13 + $0x210] sm:$0xff]
    %v4934 = vld [vmem:[#allocation13 + $0x218] sm:$0xf]
    %v4935 = vld [vmem:[#allocation13 + $0x21c] sm:$0xff]
    %v4936 = vld [vmem:[#allocation13 + $0x224] sm:$0xf]
    %v4937 = vld [vmem:[#allocation13 + $0x228] sm:$0xff]
    %v4938 = vld [vmem:[#allocation13 + $0x230] sm:$0xf]
    %v4939 = vld [vmem:[#allocation13 + $0x234] sm:$0xff]
    %v4940 = vld [vmem:[#allocation13 + $0x23c] sm:$0xf]
    %v4941 = vld [vmem:[%s16] sm:$0x7]
    %v4943 = vlaneseq
    %v4944 = vshrl.u32 %v4943, 7
    %v4945 = vsub.s32 0, %v4944
    %v4946 = vrot.slane %v4941, %v4945
    %v4947 = vlaneseq
    %v4948 = vshrl.u32 %v4947, 7
    %v4949 = vsub.s32 1, %v4948
    %v4950 = vrot.slane %v4941, %v4949
    %v4951 = vlaneseq
    %v4952 = vshrl.u32 %v4951, 7
    %v4953 = vsub.s32 2, %v4952
    %v4954 = vrot.slane %v4941, %v4953
    %v5054 = vunpack.c.l.b16 %v4845
    %v5055 = vunpack.c.h.b16 %v4845
    %v5056 = vunpack.c.l.b16 %v4846
    %v5057 = vunpack.c.l.b16 %v4847
    %v5058 = vunpack.c.h.b16 %v4847
    %v5059 = vunpack.c.l.b16 %v4848
    %v5060 = vunpack.c.l.b16 %v4849
    %v5061 = vunpack.c.h.b16 %v4849
    %v5062 = vunpack.c.l.b16 %v4850
    %v5063 = vunpack.c.l.b16 %v4851
    %v5064 = vunpack.c.h.b16 %v4851
    %v5065 = vunpack.c.l.b16 %v4852
    %v5066 = vunpack.c.l.b16 %v4853
    %v5067 = vunpack.c.h.b16 %v4853
    %v5068 = vunpack.c.l.b16 %v4854
    %v5069 = vunpack.c.l.b16 %v4855
    %v5070 = vunpack.c.h.b16 %v4855
    %v5071 = vunpack.c.l.b16 %v4856
    %v5072 = vunpack.c.l.b16 %v4857
    %v5073 = vunpack.c.h.b16 %v4857
    %v5074 = vunpack.c.l.b16 %v4858
    %v5075 = vunpack.c.l.b16 %v4859
    %v5076 = vunpack.c.h.b16 %v4859
    %v5077 = vunpack.c.l.b16 %v4860
    %v5078 = vunpack.c.l.b16 %v4861
    %v5079 = vunpack.c.h.b16 %v4861
    %v5080 = vunpack.c.l.b16 %v4862
    %v5081 = vunpack.c.l.b16 %v4863
    %v5082 = vunpack.c.h.b16 %v4863
    %v5083 = vunpack.c.l.b16 %v4864
    %v5084 = vunpack.c.l.b16 %v4865
    %v5085 = vunpack.c.h.b16 %v4865
    %v5086 = vunpack.c.l.b16 %v4866
    %v5087 = vunpack.c.l.b16 %v4867
    %v5088 = vunpack.c.h.b16 %v4867
    %v5089 = vunpack.c.l.b16 %v4868
    %v5090 = vunpack.c.l.b16 %v4869
    %v5091 = vunpack.c.h.b16 %v4869
    %v5092 = vunpack.c.l.b16 %v4870
    %v5093 = vunpack.c.l.b16 %v4871
    %v5094 = vunpack.c.h.b16 %v4871
    %v5095 = vunpack.c.l.b16 %v4872
    %v5096 = vunpack.c.l.b16 %v4873
    %v5097 = vunpack.c.h.b16 %v4873
    %v5098 = vunpack.c.l.b16 %v4874
    %v5099 = vunpack.c.l.b16 %v4875
    %v5100 = vunpack.c.h.b16 %v4875
    %v5101 = vunpack.c.l.b16 %v4876
    %v5102 = vunpack.c.l.b16 %v4877
    %v5103 = vunpack.c.h.b16 %v4877
    %v5104 = vunpack.c.l.b16 %v4878
    %v5105 = vunpack.c.l.b16 %v4879
    %v5106 = vunpack.c.h.b16 %v4879
    %v5107 = vunpack.c.l.b16 %v4880
    %v5108 = vunpack.c.l.b16 %v4881
    %v5109 = vunpack.c.h.b16 %v4881
    %v5110 = vunpack.c.l.b16 %v4882
    %v5111 = vunpack.c.l.b16 %v4883
    %v5112 = vunpack.c.h.b16 %v4883
    %v5113 = vunpack.c.l.b16 %v4884
    %v5114 = vunpack.c.l.b16 %v4885
    %v5115 = vunpack.c.h.b16 %v4885
    %v5116 = vunpack.c.l.b16 %v4886
    %v5117 = vunpack.c.l.b16 %v4887
    %v5118 = vunpack.c.h.b16 %v4887
    %v5119 = vunpack.c.l.b16 %v4888
    %v5120 = vunpack.c.l.b16 %v4889
    %v5121 = vunpack.c.h.b16 %v4889
    %v5122 = vunpack.c.l.b16 %v4890
    %v5123 = vunpack.c.l.b16 %v4891
    %v5124 = vunpack.c.h.b16 %v4891
    %v5125 = vunpack.c.l.b16 %v4892
    %v5126 = vunpack.c.l.b16 %v4893
    %v5127 = vunpack.c.h.b16 %v4893
    %v5128 = vunpack.c.l.b16 %v4894
    %v5129 = vunpack.c.l.b16 %v4895
    %v5130 = vunpack.c.h.b16 %v4895
    %v5131 = vunpack.c.l.b16 %v4896
    %v5132 = vunpack.c.l.b16 %v4897
    %v5133 = vunpack.c.h.b16 %v4897
    %v5134 = vunpack.c.l.b16 %v4898
    %v5135 = vunpack.c.l.b16 %v4899
    %v5136 = vunpack.c.h.b16 %v4899
    %v5137 = vunpack.c.l.b16 %v4900
    %v5138 = vunpack.c.l.b16 %v4901
    %v5139 = vunpack.c.h.b16 %v4901
    %v5140 = vunpack.c.l.b16 %v4902
    %v5141 = vunpack.c.l.b16 %v4903
    %v5142 = vunpack.c.h.b16 %v4903
    %v5143 = vunpack.c.l.b16 %v4904
    %v5144 = vunpack.c.l.b16 %v4905
    %v5145 = vunpack.c.h.b16 %v4905
    %v5146 = vunpack.c.l.b16 %v4906
    %v5147 = vunpack.c.l.b16 %v4907
    %v5148 = vunpack.c.h.b16 %v4907
    %v5149 = vunpack.c.l.b16 %v4908
    %v5150 = vunpack.c.l.b16 %v4909
    %v5151 = vunpack.c.h.b16 %v4909
    %v5152 = vunpack.c.l.b16 %v4910
    %v5153 = vunpack.c.l.b16 %v4911
    %v5154 = vunpack.c.h.b16 %v4911
    %v5155 = vunpack.c.l.b16 %v4912
    %v5156 = vunpack.c.l.b16 %v4913
    %v5157 = vunpack.c.h.b16 %v4913
    %v5158 = vunpack.c.l.b16 %v4914
    %v5159 = vunpack.c.l.b16 %v4915
    %v5160 = vunpack.c.h.b16 %v4915
    %v5161 = vunpack.c.l.b16 %v4916
    %v5162 = vunpack.c.l.b16 %v4917
    %v5163 = vunpack.c.h.b16 %v4917
    %v5164 = vunpack.c.l.b16 %v4918
    %v5165 = vunpack.c.l.b16 %v4919
    %v5166 = vunpack.c.h.b16 %v4919
    %v5167 = vunpack.c.l.b16 %v4920
    %v5168 = vunpack.c.l.b16 %v4921
    %v5169 = vunpack.c.h.b16 %v4921
    %v5170 = vunpack.c.l.b16 %v4922
    %v5171 = vunpack.c.l.b16 %v4923
    %v5172 = vunpack.c.h.b16 %v4923
    %v5173 = vunpack.c.l.b16 %v4924
    %v5174 = vunpack.c.l.b16 %v4925
    %v5175 = vunpack.c.h.b16 %v4925
    %v5176 = vunpack.c.l.b16 %v4926
    %v5177 = vunpack.c.l.b16 %v4927
    %v5178 = vunpack.c.h.b16 %v4927
    %v5179 = vunpack.c.l.b16 %v4928
    %v5180 = vunpack.c.l.b16 %v4929
    %v5181 = vunpack.c.h.b16 %v4929
    %v5182 = vunpack.c.l.b16 %v4930
    %v5183 = vunpack.c.l.b16 %v4931
    %v5184 = vunpack.c.h.b16 %v4931
    %v5185 = vunpack.c.l.b16 %v4932
    %v5186 = vunpack.c.l.b16 %v4933
    %v5187 = vunpack.c.h.b16 %v4933
    %v5188 = vunpack.c.l.b16 %v4934
    %v5189 = vunpack.c.l.b16 %v4935
    %v5190 = vunpack.c.h.b16 %v4935
    %v5191 = vunpack.c.l.b16 %v4936
    %v5192 = vunpack.c.l.b16 %v4937
    %v5193 = vunpack.c.h.b16 %v4937
    %v5194 = vunpack.c.l.b16 %v4938
    %v5195 = vunpack.c.l.b16 %v4939
    %v5196 = vunpack.c.h.b16 %v4939
    %v5197 = vunpack.c.l.b16 %v4940
    %v5198 = vpack.c.b16 %v5057, %v5054
    %v5199 = vpack.c.b16 %v5058, %v5055
    %v5200 = vpack.c.b16 %v5059, %v5056
    %v5201 = vpack.c.b16 %v5063, %v5060
    %v5202 = vpack.c.b16 %v5064, %v5061
    %v5203 = vpack.c.b16 %v5065, %v5062
    %v5204 = vpack.c.b16 %v5069, %v5066
    %v5205 = vpack.c.b16 %v5070, %v5067
    %v5206 = vpack.c.b16 %v5071, %v5068
    %v5207 = vpack.c.b16 %v5075, %v5072
    %v5208 = vpack.c.b16 %v5076, %v5073
    %v5209 = vpack.c.b16 %v5077, %v5074
    %v5210 = vpack.c.b16 %v5081, %v5078
    %v5211 = vpack.c.b16 %v5082, %v5079
    %v5212 = vpack.c.b16 %v5083, %v5080
    %v5213 = vpack.c.b16 %v5087, %v5084
    %v5214 = vpack.c.b16 %v5088, %v5085
    %v5215 = vpack.c.b16 %v5089, %v5086
    %v5216 = vpack.c.b16 %v5093, %v5090
    %v5217 = vpack.c.b16 %v5094, %v5091
    %v5218 = vpack.c.b16 %v5095, %v5092
    %v5219 = vpack.c.b16 %v5099, %v5096
    %v5220 = vpack.c.b16 %v5100, %v5097
    %v5221 = vpack.c.b16 %v5101, %v5098
    %v5222 = vpack.c.b16 %v5105, %v5102
    %v5223 = vpack.c.b16 %v5106, %v5103
    %v5224 = vpack.c.b16 %v5107, %v5104
    %v5225 = vpack.c.b16 %v5111, %v5108
    %v5226 = vpack.c.b16 %v5112, %v5109
    %v5227 = vpack.c.b16 %v5113, %v5110
    %v5228 = vpack.c.b16 %v5117, %v5114
    %v5229 = vpack.c.b16 %v5118, %v5115
    %v5230 = vpack.c.b16 %v5119, %v5116
    %v5231 = vpack.c.b16 %v5123, %v5120
    %v5232 = vpack.c.b16 %v5124, %v5121
    %v5233 = vpack.c.b16 %v5125, %v5122
    %v5234 = vpack.c.b16 %v5129, %v5126
    %v5235 = vpack.c.b16 %v5130, %v5127
    %v5236 = vpack.c.b16 %v5131, %v5128
    %v5237 = vpack.c.b16 %v5135, %v5132
    %v5238 = vpack.c.b16 %v5136, %v5133
    %v5239 = vpack.c.b16 %v5137, %v5134
    %v5240 = vpack.c.b16 %v5141, %v5138
    %v5241 = vpack.c.b16 %v5142, %v5139
    %v5242 = vpack.c.b16 %v5143, %v5140
    %v5243 = vpack.c.b16 %v5147, %v5144
    %v5244 = vpack.c.b16 %v5148, %v5145
    %v5245 = vpack.c.b16 %v5149, %v5146
    %v5246 = vpack.c.b16 %v5153, %v5150
    %v5247 = vpack.c.b16 %v5154, %v5151
    %v5248 = vpack.c.b16 %v5155, %v5152
    %v5249 = vpack.c.b16 %v5159, %v5156
    %v5250 = vpack.c.b16 %v5160, %v5157
    %v5251 = vpack.c.b16 %v5161, %v5158
    %v5252 = vpack.c.b16 %v5165, %v5162
    %v5253 = vpack.c.b16 %v5166, %v5163
    %v5254 = vpack.c.b16 %v5167, %v5164
    %v5255 = vpack.c.b16 %v5171, %v5168
    %v5256 = vpack.c.b16 %v5172, %v5169
    %v5257 = vpack.c.b16 %v5173, %v5170
    %v5258 = vpack.c.b16 %v5177, %v5174
    %v5259 = vpack.c.b16 %v5178, %v5175
    %v5260 = vpack.c.b16 %v5179, %v5176
    %v5261 = vpack.c.b16 %v5183, %v5180
    %v5262 = vpack.c.b16 %v5184, %v5181
    %v5263 = vpack.c.b16 %v5185, %v5182
    %v5264 = vpack.c.b16 %v5189, %v5186
    %v5265 = vpack.c.b16 %v5190, %v5187
    %v5266 = vpack.c.b16 %v5191, %v5188
    %v5267 = vpack.c.b16 %v5195, %v5192
    %v5268 = vpack.c.b16 %v5196, %v5193
    %v5269 = vpack.c.b16 %v5197, %v5194
    %5342 = vmatprep.subr.bf16.mxu0 %v5220
    %5343 = vmatpush1.bf16.msra.mxu0 %v5219
    %5344 = vmatprep.subr.bf16.mxu0 %v5217
    %5345 = vmatpush1.bf16.msra.mxu0 %v5216
    %5346 = vmatprep.subr.bf16.mxu0 %v5214
    %5347 = vmatpush1.bf16.msra.mxu0 %v5213
    %5348 = vmatprep.subr.bf16.mxu0 %v5211
    %5349 = vmatpush1.bf16.msra.mxu0 %v5210
    %5350 = vmatprep.subr.bf16.mxu0 %v5208
    %5351 = vmatpush1.bf16.msra.mxu0 %v5207
    %5352 = vmatprep.subr.bf16.mxu0 %v5205
    %5353 = vmatpush1.bf16.msra.mxu0 %v5204
    %5354 = vmatprep.subr.bf16.mxu0 %v5202
    %5355 = vmatpush1.bf16.msra.mxu0 %v5201
    %5356 = vmatprep.subr.bf16.mxu0 %v5199
    %5357 = vmatpush1.bf16.msra.mxu0 %v5198
    %5358 = vmatprep.subr.bf16.mxu0 %v5244
    %5359 = vmatpush2.bf16.msra.mxu0 %v5243
    %5360 = vmatprep.subr.bf16.mxu0 %v5241
    %5361 = vmatpush2.bf16.msra.mxu0 %v5240
    %5362 = vmatprep.subr.bf16.mxu0 %v5238
    %5363 = vmatpush2.bf16.msra.mxu0 %v5237
    %5364 = vmatprep.subr.bf16.mxu0 %v5235
    %5365 = vmatpush2.bf16.msra.mxu0 %v5234
    %5366 = vmatprep.subr.bf16.mxu0 %v5232
    %5367 = vmatpush2.bf16.msra.mxu0 %v5231
    %5368 = vmatprep.subr.bf16.mxu0 %v5229
    %5369 = vmatpush2.bf16.msra.mxu0 %v5228
    %5370 = vmatprep.subr.bf16.mxu0 %v5226
    %5371 = vmatpush2.bf16.msra.mxu0 %v5225
    %5372 = vmatprep.subr.bf16.mxu0 %v5223
    %5373 = vmatpush2.bf16.msra.mxu0 %v5222
    %5374 = vmatprep.mubr.bf16.mxu0 %v4843
    %5375 = vmatmul.mubr.bf16.gmra.mxu0 %v4842
    %v5376 = vpop.f32.mrf.mxu0
    %v5377 = vadd.f32 %v4946, %v5376
    %v5378 = vpop.f32.mrf.mxu0
    %v5379 = vadd.f32 %v4950, %v5378
    %v5380 = vpop.f32.mrf.mxu0
    %v5381 = vadd.f32 %v4946, %v5380
    %v5382 = vpop.f32.mrf.mxu0
    %v5383 = vadd.f32 %v4950, %v5382
    %5384 = vdwg.mxu0
    %5385 = vmatprep.subr.bf16.mxu0 %v5268
    %5386 = vmatpush1.bf16.msra.mxu0 %v5267
    %5387 = vmatprep.subr.bf16.mxu0 %v5265
    %5388 = vmatpush1.bf16.msra.mxu0 %v5264
    %5389 = vmatprep.subr.bf16.mxu0 %v5262
    %5390 = vmatpush1.bf16.msra.mxu0 %v5261
    %5391 = vmatprep.subr.bf16.mxu0 %v5259
    %5392 = vmatpush1.bf16.msra.mxu0 %v5258
    %5393 = vmatprep.subr.bf16.mxu0 %v5256
    %5394 = vmatpush1.bf16.msra.mxu0 %v5255
    %5395 = vmatprep.subr.bf16.mxu0 %v5253
    %5396 = vmatpush1.bf16.msra.mxu0 %v5252
    %5397 = vmatprep.subr.bf16.mxu0 %v5250
    %5398 = vmatpush1.bf16.msra.mxu0 %v5249
    %5399 = vmatprep.subr.bf16.mxu0 %v5247
    %5400 = vmatpush1.bf16.msra.mxu0 %v5246
    %5401 = vmatprep.subr.bf16.mxu0 0
    %5402 = vmatpush2.bf16.msra.mxu0 0
    %5403 = vmatprep.subr.bf16.mxu0 0
    %5404 = vmatpush2.bf16.msra.mxu0 0
    %5405 = vmatprep.subr.bf16.mxu0 0
    %5406 = vmatpush2.bf16.msra.mxu0 0
    %5407 = vmatprep.subr.bf16.mxu0 0
    %5408 = vmatpush2.bf16.msra.mxu0 0
    %5409 = vmatprep.subr.bf16.mxu0 0
    %5410 = vmatpush2.bf16.msra.mxu0 0
    %5411 = vmatprep.subr.bf16.mxu0 0
    %5412 = vmatpush2.bf16.msra.mxu0 0
    %5413 = vmatprep.subr.bf16.mxu0 0
    %5414 = vmatpush2.bf16.msra.mxu0 0
    %5415 = vmatprep.subr.bf16.mxu0 0
    %5416 = vmatpush2.bf16.msra.mxu0 0
    %5417 = vmatprep.mubr.bf16.mxu0 0
    %5418 = vmatmul.mubr.bf16.gmra.mxu0 %v4844
    %v5419 = vpop.f32.mrf.mxu0
    %v5420 = vadd.f32 %v5377, %v5419
    %v5421 = vpop.f32.mrf.mxu0
    %v5422 = vadd.f32 %v5379, %v5421
    %v5423 = vpop.f32.mrf.mxu0
    %v5424 = vadd.f32 %v5381, %v5423
    %v5425 = vpop.f32.mrf.mxu0
    %v5426 = vadd.f32 %v5383, %v5425
    %5427 = vdwg.mxu0
    %5428 = vmatprep.subr.bf16.mxu0 0
    %5429 = vmatpush1.bf16.msra.mxu0 %v5221
    %5430 = vmatprep.subr.bf16.mxu0 0
    %5431 = vmatpush1.bf16.msra.mxu0 %v5218
    %5432 = vmatprep.subr.bf16.mxu0 0
    %5433 = vmatpush1.bf16.msra.mxu0 %v5215
    %5434 = vmatprep.subr.bf16.mxu0 0
    %5435 = vmatpush1.bf16.msra.mxu0 %v5212
    %5436 = vmatprep.subr.bf16.mxu0 0
    %5437 = vmatpush1.bf16.msra.mxu0 %v5209
    %5438 = vmatprep.subr.bf16.mxu0 0
    %5439 = vmatpush1.bf16.msra.mxu0 %v5206
    %5440 = vmatprep.subr.bf16.mxu0 0
    %5441 = vmatpush1.bf16.msra.mxu0 %v5203
    %5442 = vmatprep.subr.bf16.mxu0 0
    %5443 = vmatpush1.bf16.msra.mxu0 %v5200
    %5444 = vmatprep.subr.bf16.mxu0 0
    %5445 = vmatpush2.bf16.msra.mxu0 %v5245
    %5446 = vmatprep.subr.bf16.mxu0 0
    %5447 = vmatpush2.bf16.msra.mxu0 %v5242
    %5448 = vmatprep.subr.bf16.mxu0 0
    %5449 = vmatpush2.bf16.msra.mxu0 %v5239
    %5450 = vmatprep.subr.bf16.mxu0 0
    %5451 = vmatpush2.bf16.msra.mxu0 %v5236
    %5452 = vmatprep.subr.bf16.mxu0 0
    %5453 = vmatpush2.bf16.msra.mxu0 %v5233
    %5454 = vmatprep.subr.bf16.mxu0 0
    %5455 = vmatpush2.bf16.msra.mxu0 %v5230
    %5456 = vmatprep.subr.bf16.mxu0 0
    %5457 = vmatpush2.bf16.msra.mxu0 %v5227
    %5458 = vmatprep.subr.bf16.mxu0 0
    %5459 = vmatpush2.bf16.msra.mxu0 %v5224
    %5460 = vmatprep.mubr.bf16.mxu0 %v4843
    %5461 = vmatmul.mubr.bf16.gmra.mxu0 %v4842
    %v5462 = vpop.f32.mrf.mxu0
    %v5463 = vadd.f32 %v4954, %v5462
    %v5464 = vpop.f32.mrf.mxu0
    %v5465 = vpop.f32.mrf.mxu0
    %v5466 = vadd.f32 %v4954, %v5465
    %v5467 = vpop.f32.mrf.mxu0
    %5468 = vdwg.mxu0
    %5469 = vmatprep.subr.bf16.mxu0 0
    %5470 = vmatpush1.bf16.msra.mxu0 %v5269
    %5471 = vmatprep.subr.bf16.mxu0 0
    %5472 = vmatpush1.bf16.msra.mxu0 %v5266
    %5473 = vmatprep.subr.bf16.mxu0 0
    %5474 = vmatpush1.bf16.msra.mxu0 %v5263
    %5475 = vmatprep.subr.bf16.mxu0 0
    %5476 = vmatpush1.bf16.msra.mxu0 %v5260
    %5477 = vmatprep.subr.bf16.mxu0 0
    %5478 = vmatpush1.bf16.msra.mxu0 %v5257
    %5479 = vmatprep.subr.bf16.mxu0 0
    %5480 = vmatpush1.bf16.msra.mxu0 %v5254
    %5481 = vmatprep.subr.bf16.mxu0 0
    %5482 = vmatpush1.bf16.msra.mxu0 %v5251
    %5483 = vmatprep.subr.bf16.mxu0 0
    %5484 = vmatpush1.bf16.msra.mxu0 %v5248
    %5485 = vmatprep.subr.bf16.mxu0 0
    %5486 = vmatpush2.bf16.msra.mxu0 0
    %5487 = vmatprep.subr.bf16.mxu0 0
    %5488 = vmatpush2.bf16.msra.mxu0 0
    %5489 = vmatprep.subr.bf16.mxu0 0
    %5490 = vmatpush2.bf16.msra.mxu0 0
    %5491 = vmatprep.subr.bf16.mxu0 0
    %5492 = vmatpush2.bf16.msra.mxu0 0
    %5493 = vmatprep.subr.bf16.mxu0 0
    %5494 = vmatpush2.bf16.msra.mxu0 0
    %5495 = vmatprep.subr.bf16.mxu0 0
    %5496 = vmatpush2.bf16.msra.mxu0 0
    %5497 = vmatprep.subr.bf16.mxu0 0
    %5498 = vmatpush2.bf16.msra.mxu0 0
    %5499 = vmatprep.subr.bf16.mxu0 0
    %5500 = vmatpush2.bf16.msra.mxu0 0
    %5501 = vmatprep.mubr.bf16.mxu0 0
    %5502 = vmatmul.mubr.bf16.gmra.mxu0 %v4844
    %v5503 = vpop.f32.mrf.mxu0
    %v5504 = vadd.f32 %v5463, %v5503
    %v5505 = vpop.f32.mrf.mxu0
    %v5506 = vpop.f32.mrf.mxu0
    %v5507 = vadd.f32 %v5466, %v5506
    %v5508 = vpop.f32.mrf.mxu0
    %5509 = vdwg.mxu0
    %v5510 = vpack.c.bf16 %v5424, %v5420
    %v5511 = vpack.c.bf16 %v5426, %v5422
    %v5512 = vpack.c.bf16 %v5507, %v5504
    %v5513 = vmax.bf16 %v5510, 0
    %v5514 = vmax.bf16 %v5511, 0
    %v5515 = vmax.bf16 %v5512, 0
    %v5516 = vld [vmem:[#allocation15] sm:$0xff]
    %v5517 = vld [vmem:[#allocation15 + $0x8] sm:$0xff]
    %v5518 = vld [vmem:[#allocation15 + $0x10] sm:$0xff]
    %v5519 = vld [vmem:[#allocation15 + $0x18] sm:$0xff]
    %v5520 = vld [vmem:[#allocation15 + $0x20] sm:$0xff]
    %v5521 = vld [vmem:[#allocation15 + $0x28] sm:$0xff]
    %v5522 = vld [vmem:[#allocation15 + $0x30] sm:$0xff]
    %v5523 = vld [vmem:[#allocation15 + $0x38] sm:$0xff]
    %v5524 = vld [vmem:[#allocation15 + $0x40] sm:$0xff]
    %v5525 = vld [vmem:[#allocation15 + $0x48] sm:$0xff]
    %v5526 = vld [vmem:[#allocation15 + $0x50] sm:$0xff]
    %v5527 = vld [vmem:[#allocation15 + $0x58] sm:$0xff]
    %v5528 = vld [vmem:[#allocation15 + $0x60] sm:$0xff]
    %v5529 = vld [vmem:[#allocation15 + $0x68] sm:$0xff]
    %v5530 = vld [vmem:[#allocation15 + $0x70] sm:$0xff]
    %v5531 = vld [vmem:[#allocation15 + $0x78] sm:$0xff]
    %v5532 = vld [vmem:[#allocation15 + $0x80] sm:$0xff]
    %v5533 = vld [vmem:[#allocation15 + $0x88] sm:$0xff]
    %v5534 = vld [vmem:[#allocation15 + $0x90] sm:$0xff]
    %v5535 = vld [vmem:[#allocation15 + $0x98] sm:$0xff]
    %v5536 = vld [vmem:[#allocation15 + $0xa0] sm:$0xff]
    %v5537 = vld [vmem:[#allocation15 + $0xa8] sm:$0xff]
    %v5538 = vld [vmem:[#allocation15 + $0xb0] sm:$0xff]
    %v5539 = vld [vmem:[#allocation15 + $0xb8] sm:$0xff]
    %v5540 = vld [vmem:[#allocation15 + $0xc0] sm:$0xff]
    %v5541 = vld [vmem:[#allocation15 + $0xc8] sm:$0xff]
    %v5542 = vld [vmem:[#allocation15 + $0xd0] sm:$0xff]
    %v5543 = vld [vmem:[#allocation15 + $0xd8] sm:$0xff]
    %v5544 = vld [vmem:[#allocation15 + $0xe0] sm:$0xff]
    %v5545 = vld [vmem:[#allocation15 + $0xe8] sm:$0xff]
    %v5546 = vld [vmem:[#allocation15 + $0xf0] sm:$0xff]
    %v5547 = vld [vmem:[#allocation15 + $0xf8] sm:$0xff]
    %v5548 = vld [vmem:[#allocation15 + $0x100] sm:$0xff]
    %v5549 = vld [vmem:[#allocation15 + $0x108] sm:$0xff]
    %v5550 = vld [vmem:[#allocation15 + $0x110] sm:$0xff]
    %v5551 = vld [vmem:[#allocation15 + $0x118] sm:$0xff]
    %v5552 = vld [vmem:[#allocation15 + $0x120] sm:$0xff]
    %v5553 = vld [vmem:[#allocation15 + $0x128] sm:$0xff]
    %v5554 = vld [vmem:[#allocation15 + $0x130] sm:$0xff]
    %v5555 = vld [vmem:[#allocation15 + $0x138] sm:$0xff]
    %v5556 = vld [vmem:[#allocation15 + $0x140] sm:$0xff]
    %v5557 = vld [vmem:[#allocation15 + $0x148] sm:$0xff]
    %v5558 = vld [vmem:[#allocation15 + $0x150] sm:$0xff]
    %v5559 = vld [vmem:[#allocation15 + $0x158] sm:$0xff]
    %v5560 = vld [vmem:[#allocation15 + $0x160] sm:$0xff]
    %v5561 = vld [vmem:[#allocation15 + $0x168] sm:$0xff]
    %v5562 = vld [vmem:[#allocation15 + $0x170] sm:$0xff]
    %v5563 = vld [vmem:[#allocation15 + $0x178] sm:$0xff]
    %v5564 = vld [vmem:[%s18] sm:$0x3]
    %v5566 = vlaneseq
    %v5567 = vshrl.u32 %v5566, 7
    %v5568 = vsub.s32 0, %v5567
    %v5569 = vrot.slane %v5564, %v5568
    %v5570 = vlaneseq
    %v5571 = vshrl.u32 %v5570, 7
    %v5572 = vsub.s32 1, %v5571
    %v5573 = vrot.slane %v5564, %v5572
    %v5624 = vunpack.c.l.b16 %v5516
    %v5625 = vunpack.c.h.b16 %v5516
    %v5626 = vunpack.c.l.b16 %v5517
    %v5627 = vunpack.c.h.b16 %v5517
    %v5628 = vunpack.c.l.b16 %v5518
    %v5629 = vunpack.c.h.b16 %v5518
    %v5630 = vunpack.c.l.b16 %v5519
    %v5631 = vunpack.c.h.b16 %v5519
    %v5632 = vunpack.c.l.b16 %v5520
    %v5633 = vunpack.c.h.b16 %v5520
    %v5634 = vunpack.c.l.b16 %v5521
    %v5635 = vunpack.c.h.b16 %v5521
    %v5636 = vunpack.c.l.b16 %v5522
    %v5637 = vunpack.c.h.b16 %v5522
    %v5638 = vunpack.c.l.b16 %v5523
    %v5639 = vunpack.c.h.b16 %v5523
    %v5640 = vunpack.c.l.b16 %v5524
    %v5641 = vunpack.c.h.b16 %v5524
    %v5642 = vunpack.c.l.b16 %v5525
    %v5643 = vunpack.c.h.b16 %v5525
    %v5644 = vunpack.c.l.b16 %v5526
    %v5645 = vunpack.c.h.b16 %v5526
    %v5646 = vunpack.c.l.b16 %v5527
    %v5647 = vunpack.c.h.b16 %v5527
    %v5648 = vunpack.c.l.b16 %v5528
    %v5649 = vunpack.c.h.b16 %v5528
    %v5650 = vunpack.c.l.b16 %v5529
    %v5651 = vunpack.c.h.b16 %v5529
    %v5652 = vunpack.c.l.b16 %v5530
    %v5653 = vunpack.c.h.b16 %v5530
    %v5654 = vunpack.c.l.b16 %v5531
    %v5655 = vunpack.c.h.b16 %v5531
    %v5656 = vunpack.c.l.b16 %v5532
    %v5657 = vunpack.c.h.b16 %v5532
    %v5658 = vunpack.c.l.b16 %v5533
    %v5659 = vunpack.c.h.b16 %v5533
    %v5660 = vunpack.c.l.b16 %v5534
    %v5661 = vunpack.c.h.b16 %v5534
    %v5662 = vunpack.c.l.b16 %v5535
    %v5663 = vunpack.c.h.b16 %v5535
    %v5664 = vunpack.c.l.b16 %v5536
    %v5665 = vunpack.c.h.b16 %v5536
    %v5666 = vunpack.c.l.b16 %v5537
    %v5667 = vunpack.c.h.b16 %v5537
    %v5668 = vunpack.c.l.b16 %v5538
    %v5669 = vunpack.c.h.b16 %v5538
    %v5670 = vunpack.c.l.b16 %v5539
    %v5671 = vunpack.c.h.b16 %v5539
    %v5672 = vunpack.c.l.b16 %v5540
    %v5673 = vunpack.c.h.b16 %v5540
    %v5674 = vunpack.c.l.b16 %v5541
    %v5675 = vunpack.c.h.b16 %v5541
    %v5676 = vunpack.c.l.b16 %v5542
    %v5677 = vunpack.c.h.b16 %v5542
    %v5678 = vunpack.c.l.b16 %v5543
    %v5679 = vunpack.c.h.b16 %v5543
    %v5680 = vunpack.c.l.b16 %v5544
    %v5681 = vunpack.c.h.b16 %v5544
    %v5682 = vunpack.c.l.b16 %v5545
    %v5683 = vunpack.c.h.b16 %v5545
    %v5684 = vunpack.c.l.b16 %v5546
    %v5685 = vunpack.c.h.b16 %v5546
    %v5686 = vunpack.c.l.b16 %v5547
    %v5687 = vunpack.c.h.b16 %v5547
    %v5688 = vunpack.c.l.b16 %v5548
    %v5689 = vunpack.c.h.b16 %v5548
    %v5690 = vunpack.c.l.b16 %v5549
    %v5691 = vunpack.c.h.b16 %v5549
    %v5692 = vunpack.c.l.b16 %v5550
    %v5693 = vunpack.c.h.b16 %v5550
    %v5694 = vunpack.c.l.b16 %v5551
    %v5695 = vunpack.c.h.b16 %v5551
    %v5696 = vunpack.c.l.b16 %v5552
    %v5697 = vunpack.c.h.b16 %v5552
    %v5698 = vunpack.c.l.b16 %v5553
    %v5699 = vunpack.c.h.b16 %v5553
    %v5700 = vunpack.c.l.b16 %v5554
    %v5701 = vunpack.c.h.b16 %v5554
    %v5702 = vunpack.c.l.b16 %v5555
    %v5703 = vunpack.c.h.b16 %v5555
    %v5704 = vunpack.c.l.b16 %v5556
    %v5705 = vunpack.c.h.b16 %v5556
    %v5706 = vunpack.c.l.b16 %v5557
    %v5707 = vunpack.c.h.b16 %v5557
    %v5708 = vunpack.c.l.b16 %v5558
    %v5709 = vunpack.c.h.b16 %v5558
    %v5710 = vunpack.c.l.b16 %v5559
    %v5711 = vunpack.c.h.b16 %v5559
    %v5712 = vunpack.c.l.b16 %v5560
    %v5713 = vunpack.c.h.b16 %v5560
    %v5714 = vunpack.c.l.b16 %v5561
    %v5715 = vunpack.c.h.b16 %v5561
    %v5716 = vunpack.c.l.b16 %v5562
    %v5717 = vunpack.c.h.b16 %v5562
    %v5718 = vunpack.c.l.b16 %v5563
    %v5719 = vunpack.c.h.b16 %v5563
    %v5720 = vpack.c.b16 %v5626, %v5624
    %v5721 = vpack.c.b16 %v5627, %v5625
    %v5722 = vpack.c.b16 %v5630, %v5628
    %v5723 = vpack.c.b16 %v5631, %v5629
    %v5724 = vpack.c.b16 %v5634, %v5632
    %v5725 = vpack.c.b16 %v5635, %v5633
    %v5726 = vpack.c.b16 %v5638, %v5636
    %v5727 = vpack.c.b16 %v5639, %v5637
    %v5728 = vpack.c.b16 %v5642, %v5640
    %v5729 = vpack.c.b16 %v5643, %v5641
    %v5730 = vpack.c.b16 %v5646, %v5644
    %v5731 = vpack.c.b16 %v5647, %v5645
    %v5732 = vpack.c.b16 %v5650, %v5648
    %v5733 = vpack.c.b16 %v5651, %v5649
    %v5734 = vpack.c.b16 %v5654, %v5652
    %v5735 = vpack.c.b16 %v5655, %v5653
    %v5736 = vpack.c.b16 %v5658, %v5656
    %v5737 = vpack.c.b16 %v5659, %v5657
    %v5738 = vpack.c.b16 %v5662, %v5660
    %v5739 = vpack.c.b16 %v5663, %v5661
    %v5740 = vpack.c.b16 %v5666, %v5664
    %v5741 = vpack.c.b16 %v5667, %v5665
    %v5742 = vpack.c.b16 %v5670, %v5668
    %v5743 = vpack.c.b16 %v5671, %v5669
    %v5744 = vpack.c.b16 %v5674, %v5672
    %v5745 = vpack.c.b16 %v5675, %v5673
    %v5746 = vpack.c.b16 %v5678, %v5676
    %v5747 = vpack.c.b16 %v5679, %v5677
    %v5748 = vpack.c.b16 %v5682, %v5680
    %v5749 = vpack.c.b16 %v5683, %v5681
    %v5750 = vpack.c.b16 %v5686, %v5684
    %v5751 = vpack.c.b16 %v5687, %v5685
    %v5752 = vpack.c.b16 %v5690, %v5688
    %v5753 = vpack.c.b16 %v5691, %v5689
    %v5754 = vpack.c.b16 %v5694, %v5692
    %v5755 = vpack.c.b16 %v5695, %v5693
    %v5756 = vpack.c.b16 %v5698, %v5696
    %v5757 = vpack.c.b16 %v5699, %v5697
    %v5758 = vpack.c.b16 %v5702, %v5700
    %v5759 = vpack.c.b16 %v5703, %v5701
    %v5760 = vpack.c.b16 %v5706, %v5704
    %v5761 = vpack.c.b16 %v5707, %v5705
    %v5762 = vpack.c.b16 %v5710, %v5708
    %v5763 = vpack.c.b16 %v5711, %v5709
    %v5764 = vpack.c.b16 %v5714, %v5712
    %v5765 = vpack.c.b16 %v5715, %v5713
    %v5766 = vpack.c.b16 %v5718, %v5716
    %v5767 = vpack.c.b16 %v5719, %v5717
    %5816 = vmatprep.subr.bf16.mxu0 %v5735
    %5817 = vmatpush1.bf16.msra.mxu0 %v5734
    %5818 = vmatprep.subr.bf16.mxu0 %v5733
    %5819 = vmatpush1.bf16.msra.mxu0 %v5732
    %5820 = vmatprep.subr.bf16.mxu0 %v5731
    %5821 = vmatpush1.bf16.msra.mxu0 %v5730
    %5822 = vmatprep.subr.bf16.mxu0 %v5729
    %5823 = vmatpush1.bf16.msra.mxu0 %v5728
    %5824 = vmatprep.subr.bf16.mxu0 %v5727
    %5825 = vmatpush1.bf16.msra.mxu0 %v5726
    %5826 = vmatprep.subr.bf16.mxu0 %v5725
    %5827 = vmatpush1.bf16.msra.mxu0 %v5724
    %5828 = vmatprep.subr.bf16.mxu0 %v5723
    %5829 = vmatpush1.bf16.msra.mxu0 %v5722
    %5830 = vmatprep.subr.bf16.mxu0 %v5721
    %5831 = vmatpush1.bf16.msra.mxu0 %v5720
    %5832 = vmatprep.subr.bf16.mxu0 %v5751
    %5833 = vmatpush2.bf16.msra.mxu0 %v5750
    %5834 = vmatprep.subr.bf16.mxu0 %v5749
    %5835 = vmatpush2.bf16.msra.mxu0 %v5748
    %5836 = vmatprep.subr.bf16.mxu0 %v5747
    %5837 = vmatpush2.bf16.msra.mxu0 %v5746
    %5838 = vmatprep.subr.bf16.mxu0 %v5745
    %5839 = vmatpush2.bf16.msra.mxu0 %v5744
    %5840 = vmatprep.subr.bf16.mxu0 %v5743
    %5841 = vmatpush2.bf16.msra.mxu0 %v5742
    %5842 = vmatprep.subr.bf16.mxu0 %v5741
    %5843 = vmatpush2.bf16.msra.mxu0 %v5740
    %5844 = vmatprep.subr.bf16.mxu0 %v5739
    %5845 = vmatpush2.bf16.msra.mxu0 %v5738
    %5846 = vmatprep.subr.bf16.mxu0 %v5737
    %5847 = vmatpush2.bf16.msra.mxu0 %v5736
    %5848 = vmatprep.mubr.bf16.mxu0 %v5514
    %5849 = vmatmul.mubr.bf16.gmra.mxu0 %v5513
    %v5850 = vpop.f32.mrf.mxu0
    %v5851 = vadd.f32 %v5569, %v5850
    %v5852 = vpop.f32.mrf.mxu0
    %v5853 = vadd.f32 %v5573, %v5852
    %v5854 = vpop.f32.mrf.mxu0
    %v5855 = vadd.f32 %v5569, %v5854
    %v5856 = vpop.f32.mrf.mxu0
    %v5857 = vadd.f32 %v5573, %v5856
    %5858 = vdwg.mxu0
    %5859 = vmatprep.subr.bf16.mxu0 %v5767
    %5860 = vmatpush1.bf16.msra.mxu0 %v5766
    %5861 = vmatprep.subr.bf16.mxu0 %v5765
    %5862 = vmatpush1.bf16.msra.mxu0 %v5764
    %5863 = vmatprep.subr.bf16.mxu0 %v5763
    %5864 = vmatpush1.bf16.msra.mxu0 %v5762
    %5865 = vmatprep.subr.bf16.mxu0 %v5761
    %5866 = vmatpush1.bf16.msra.mxu0 %v5760
    %5867 = vmatprep.subr.bf16.mxu0 %v5759
    %5868 = vmatpush1.bf16.msra.mxu0 %v5758
    %5869 = vmatprep.subr.bf16.mxu0 %v5757
    %5870 = vmatpush1.bf16.msra.mxu0 %v5756
    %5871 = vmatprep.subr.bf16.mxu0 %v5755
    %5872 = vmatpush1.bf16.msra.mxu0 %v5754
    %5873 = vmatprep.subr.bf16.mxu0 %v5753
    %5874 = vmatpush1.bf16.msra.mxu0 %v5752
    %5875 = vmatprep.subr.bf16.mxu0 0
    %5876 = vmatpush2.bf16.msra.mxu0 0
    %5877 = vmatprep.subr.bf16.mxu0 0
    %5878 = vmatpush2.bf16.msra.mxu0 0
    %5879 = vmatprep.subr.bf16.mxu0 0
    %5880 = vmatpush2.bf16.msra.mxu0 0
    %5881 = vmatprep.subr.bf16.mxu0 0
    %5882 = vmatpush2.bf16.msra.mxu0 0
    %5883 = vmatprep.subr.bf16.mxu0 0
    %5884 = vmatpush2.bf16.msra.mxu0 0
    %5885 = vmatprep.subr.bf16.mxu0 0
    %5886 = vmatpush2.bf16.msra.mxu0 0
    %5887 = vmatprep.subr.bf16.mxu0 0
    %5888 = vmatpush2.bf16.msra.mxu0 0
    %5889 = vmatprep.subr.bf16.mxu0 0
    %5890 = vmatpush2.bf16.msra.mxu0 0
    %5891 = vmatprep.mubr.bf16.mxu0 0
    %5892 = vmatmul.mubr.bf16.gmra.mxu0 %v5515
    %v5893 = vpop.f32.mrf.mxu0
    %v5894 = vadd.f32 %v5851, %v5893
    %v5895 = vpop.f32.mrf.mxu0
    %v5896 = vadd.f32 %v5853, %v5895
    %v5897 = vpop.f32.mrf.mxu0
    %v5898 = vadd.f32 %v5855, %v5897
    %v5899 = vpop.f32.mrf.mxu0
    %v5900 = vadd.f32 %v5857, %v5899
    %5901 = vdwg.mxu0
    %v5902 = vpack.c.bf16 %v5898, %v5894
    %v5903 = vpack.c.bf16 %v5900, %v5896
    %v5904 = vmax.bf16 %v5902, 0
    %v5905 = vmax.bf16 %v5903, 0
    %v5906 = vld [vmem:[#allocation16] sm:$0xf]
    %v5907 = vld [vmem:[#allocation16 + $0x4] sm:$0xf]
    %v5908 = vld [vmem:[#allocation16 + $0x8] sm:$0xf]
    %v5909 = vld [vmem:[#allocation16 + $0xc] sm:$0xf]
    %v5910 = vld [vmem:[#allocation16 + $0x10] sm:$0xf]
    %v5911 = vld [vmem:[#allocation16 + $0x14] sm:$0xf]
    %v5912 = vld [vmem:[#allocation16 + $0x18] sm:$0xf]
    %v5913 = vld [vmem:[#allocation16 + $0x1c] sm:$0xf]
    %v5914 = vld [vmem:[#allocation16 + $0x20] sm:$0xf]
    %v5915 = vld [vmem:[#allocation16 + $0x24] sm:$0xf]
    %v5916 = vld [vmem:[#allocation16 + $0x28] sm:$0xf]
    %v5917 = vld [vmem:[#allocation16 + $0x2c] sm:$0xf]
    %v5918 = vld [vmem:[#allocation16 + $0x30] sm:$0xf]
    %v5919 = vld [vmem:[#allocation16 + $0x34] sm:$0xf]
    %v5920 = vld [vmem:[#allocation16 + $0x38] sm:$0xf]
    %v5921 = vld [vmem:[#allocation16 + $0x3c] sm:$0xf]
    %v5922 = vld [vmem:[#allocation16 + $0x40] sm:$0xf]
    %v5923 = vld [vmem:[#allocation16 + $0x44] sm:$0xf]
    %v5924 = vld [vmem:[#allocation16 + $0x48] sm:$0xf]
    %v5925 = vld [vmem:[#allocation16 + $0x4c] sm:$0xf]
    %v5926 = vld [vmem:[#allocation16 + $0x50] sm:$0xf]
    %v5927 = vld [vmem:[#allocation16 + $0x54] sm:$0xf]
    %v5928 = vld [vmem:[#allocation16 + $0x58] sm:$0xf]
    %v5929 = vld [vmem:[#allocation16 + $0x5c] sm:$0xf]
    %v5930 = vld [vmem:[#allocation16 + $0x60] sm:$0xf]
    %v5931 = vld [vmem:[#allocation16 + $0x64] sm:$0xf]
    %v5932 = vld [vmem:[#allocation16 + $0x68] sm:$0xf]
    %v5933 = vld [vmem:[#allocation16 + $0x6c] sm:$0xf]
    %v5934 = vld [vmem:[#allocation16 + $0x70] sm:$0xf]
    %v5935 = vld [vmem:[#allocation16 + $0x74] sm:$0xf]
    %v5936 = vld [vmem:[#allocation16 + $0x78] sm:$0xf]
    %v5937 = vld [vmem:[#allocation16 + $0x7c] sm:$0xf]
    %v5938 = vld [vmem:[%s20] sm:$0x1]
    %v5940 = vlaneseq
    %v5941 = vshrl.u32 %v5940, 7
    %v5942 = vsub.s32 0, %v5941
    %v5943 = vrot.slane %v5938, %v5942
    %v5977 = vunpack.c.l.b16 %v5906
    %v5978 = vunpack.c.l.b16 %v5907
    %v5979 = vunpack.c.l.b16 %v5908
    %v5980 = vunpack.c.l.b16 %v5909
    %v5981 = vunpack.c.l.b16 %v5910
    %v5982 = vunpack.c.l.b16 %v5911
    %v5983 = vunpack.c.l.b16 %v5912
    %v5984 = vunpack.c.l.b16 %v5913
    %v5985 = vunpack.c.l.b16 %v5914
    %v5986 = vunpack.c.l.b16 %v5915
    %v5987 = vunpack.c.l.b16 %v5916
    %v5988 = vunpack.c.l.b16 %v5917
    %v5989 = vunpack.c.l.b16 %v5918
    %v5990 = vunpack.c.l.b16 %v5919
    %v5991 = vunpack.c.l.b16 %v5920
    %v5992 = vunpack.c.l.b16 %v5921
    %v5993 = vunpack.c.l.b16 %v5922
    %v5994 = vunpack.c.l.b16 %v5923
    %v5995 = vunpack.c.l.b16 %v5924
    %v5996 = vunpack.c.l.b16 %v5925
    %v5997 = vunpack.c.l.b16 %v5926
    %v5998 = vunpack.c.l.b16 %v5927
    %v5999 = vunpack.c.l.b16 %v5928
    %v6000 = vunpack.c.l.b16 %v5929
    %v6001 = vunpack.c.l.b16 %v5930
    %v6002 = vunpack.c.l.b16 %v5931
    %v6003 = vunpack.c.l.b16 %v5932
    %v6004 = vunpack.c.l.b16 %v5933
    %v6005 = vunpack.c.l.b16 %v5934
    %v6006 = vunpack.c.l.b16 %v5935
    %v6007 = vunpack.c.l.b16 %v5936
    %v6008 = vunpack.c.l.b16 %v5937
    %v6009 = vpack.c.b16 %v5978, %v5977
    %v6010 = vpack.c.b16 %v5980, %v5979
    %v6011 = vpack.c.b16 %v5982, %v5981
    %v6012 = vpack.c.b16 %v5984, %v5983
    %v6013 = vpack.c.b16 %v5986, %v5985
    %v6014 = vpack.c.b16 %v5988, %v5987
    %v6015 = vpack.c.b16 %v5990, %v5989
    %v6016 = vpack.c.b16 %v5992, %v5991
    %v6017 = vpack.c.b16 %v5994, %v5993
    %v6018 = vpack.c.b16 %v5996, %v5995
    %v6019 = vpack.c.b16 %v5998, %v5997
    %v6020 = vpack.c.b16 %v6000, %v5999
    %v6021 = vpack.c.b16 %v6002, %v6001
    %v6022 = vpack.c.b16 %v6004, %v6003
    %v6023 = vpack.c.b16 %v6006, %v6005
    %v6024 = vpack.c.b16 %v6008, %v6007
    %6041 = vmatprep.subr.bf16.mxu0 0
    %6042 = vmatpush1.bf16.msra.mxu0 %v6016
    %6043 = vmatprep.subr.bf16.mxu0 0
    %6044 = vmatpush1.bf16.msra.mxu0 %v6015
    %6045 = vmatprep.subr.bf16.mxu0 0
    %6046 = vmatpush1.bf16.msra.mxu0 %v6014
    %6047 = vmatprep.subr.bf16.mxu0 0
    %6048 = vmatpush1.bf16.msra.mxu0 %v6013
    %6049 = vmatprep.subr.bf16.mxu0 0
    %6050 = vmatpush1.bf16.msra.mxu0 %v6012
    %6051 = vmatprep.subr.bf16.mxu0 0
    %6052 = vmatpush1.bf16.msra.mxu0 %v6011
    %6053 = vmatprep.subr.bf16.mxu0 0
    %6054 = vmatpush1.bf16.msra.mxu0 %v6010
    %6055 = vmatprep.subr.bf16.mxu0 0
    %6056 = vmatpush1.bf16.msra.mxu0 %v6009
    %6057 = vmatprep.subr.bf16.mxu0 0
    %6058 = vmatpush2.bf16.msra.mxu0 %v6024
    %6059 = vmatprep.subr.bf16.mxu0 0
    %6060 = vmatpush2.bf16.msra.mxu0 %v6023
    %6061 = vmatprep.subr.bf16.mxu0 0
    %6062 = vmatpush2.bf16.msra.mxu0 %v6022
    %6063 = vmatprep.subr.bf16.mxu0 0
    %6064 = vmatpush2.bf16.msra.mxu0 %v6021
    %6065 = vmatprep.subr.bf16.mxu0 0
    %6066 = vmatpush2.bf16.msra.mxu0 %v6020
    %6067 = vmatprep.subr.bf16.mxu0 0
    %6068 = vmatpush2.bf16.msra.mxu0 %v6019
    %6069 = vmatprep.subr.bf16.mxu0 0
    %6070 = vmatpush2.bf16.msra.mxu0 %v6018
    %6071 = vmatprep.subr.bf16.mxu0 0
    %6072 = vmatpush2.bf16.msra.mxu0 %v6017
    %6073 = vmatprep.mubr.bf16.mxu0 %v5905
    %6074 = vmatmul.mubr.bf16.gmra.mxu0 %v5904
    %v6075 = vpop.f32.mrf.mxu0
    %v6076 = vadd.f32 %v5943, %v6075
    %v6077 = vpop.f32.mrf.mxu0
    %v6078 = vpop.f32.mrf.mxu0
    %v6079 = vadd.f32 %v5943, %v6078
    %v6080 = vpop.f32.mrf.mxu0
    %6081 = vdwg.mxu0
    %v6082 = vpack.c.bf16 %v6079, %v6076
    %v6083 = vmax.bf16 %v6082, 0
    %v6084 = vld [vmem:[#allocation18] sm:$0xf]
    %v6085 = vld [vmem:[#allocation18 + $0x4] sm:$0xf]
    %v6086 = vld [vmem:[#allocation18 + $0x8] sm:$0xf]
    %v6087 = vld [vmem:[#allocation18 + $0xc] sm:$0xf]
    %v6088 = vld [vmem:[#allocation18 + $0x10] sm:$0xf]
    %v6089 = vld [vmem:[#allocation18 + $0x14] sm:$0xf]
    %v6090 = vld [vmem:[#allocation18 + $0x18] sm:$0xf]
    %v6091 = vld [vmem:[#allocation18 + $0x1c] sm:$0xf]
    %v6092 = vld [vmem:[#allocation18 + $0x20] sm:$0xf]
    %v6093 = vld [vmem:[#allocation18 + $0x24] sm:$0xf]
    %v6094 = vld [vmem:[#allocation18 + $0x28] sm:$0xf]
    %v6095 = vld [vmem:[#allocation18 + $0x2c] sm:$0xf]
    %v6096 = vld [vmem:[#allocation18 + $0x30] sm:$0xf]
    %v6097 = vld [vmem:[#allocation18 + $0x34] sm:$0xf]
    %v6098 = vld [vmem:[#allocation18 + $0x38] sm:$0xf]
    %v6099 = vld [vmem:[#allocation18 + $0x3c] sm:$0xf]
    %v6100 = vld [vmem:[%s22] sm:$0x1]
    %v6102 = vlaneseq
    %v6103 = vshrl.u32 %v6102, 7
    %v6104 = vsub.s32 0, %v6103
    %v6105 = vrot.slane %v6100, %v6104
    %v6123 = vunpack.c.l.b16 %v6084
    %v6124 = vunpack.c.l.b16 %v6085
    %v6125 = vunpack.c.l.b16 %v6086
    %v6126 = vunpack.c.l.b16 %v6087
    %v6127 = vunpack.c.l.b16 %v6088
    %v6128 = vunpack.c.l.b16 %v6089
    %v6129 = vunpack.c.l.b16 %v6090
    %v6130 = vunpack.c.l.b16 %v6091
    %v6131 = vunpack.c.l.b16 %v6092
    %v6132 = vunpack.c.l.b16 %v6093
    %v6133 = vunpack.c.l.b16 %v6094
    %v6134 = vunpack.c.l.b16 %v6095
    %v6135 = vunpack.c.l.b16 %v6096
    %v6136 = vunpack.c.l.b16 %v6097
    %v6137 = vunpack.c.l.b16 %v6098
    %v6138 = vunpack.c.l.b16 %v6099
    %v6139 = vpack.c.b16 %v6124, %v6123
    %v6140 = vpack.c.b16 %v6126, %v6125
    %v6141 = vpack.c.b16 %v6128, %v6127
    %v6142 = vpack.c.b16 %v6130, %v6129
    %v6143 = vpack.c.b16 %v6132, %v6131
    %v6144 = vpack.c.b16 %v6134, %v6133
    %v6145 = vpack.c.b16 %v6136, %v6135
    %v6146 = vpack.c.b16 %v6138, %v6137
    %6155 = vmatprep.subr.bf16.mxu0 0
    %6156 = vmatpush1.bf16.msra.mxu0 %v6146
    %6157 = vmatprep.subr.bf16.mxu0 0
    %6158 = vmatpush1.bf16.msra.mxu0 %v6145
    %6159 = vmatprep.subr.bf16.mxu0 0
    %6160 = vmatpush1.bf16.msra.mxu0 %v6144
    %6161 = vmatprep.subr.bf16.mxu0 0
    %6162 = vmatpush1.bf16.msra.mxu0 %v6143
    %6163 = vmatprep.subr.bf16.mxu0 0
    %6164 = vmatpush1.bf16.msra.mxu0 %v6142
    %6165 = vmatprep.subr.bf16.mxu0 0
    %6166 = vmatpush1.bf16.msra.mxu0 %v6141
    %6167 = vmatprep.subr.bf16.mxu0 0
    %6168 = vmatpush1.bf16.msra.mxu0 %v6140
    %6169 = vmatprep.subr.bf16.mxu0 0
    %6170 = vmatpush1.bf16.msra.mxu0 %v6139
    %6171 = vmatprep.subr.bf16.mxu0 0
    %6172 = vmatpush2.bf16.msra.mxu0 0
    %6173 = vmatprep.subr.bf16.mxu0 0
    %6174 = vmatpush2.bf16.msra.mxu0 0
    %6175 = vmatprep.subr.bf16.mxu0 0
    %6176 = vmatpush2.bf16.msra.mxu0 0
    %6177 = vmatprep.subr.bf16.mxu0 0
    %6178 = vmatpush2.bf16.msra.mxu0 0
    %6179 = vmatprep.subr.bf16.mxu0 0
    %6180 = vmatpush2.bf16.msra.mxu0 0
    %6181 = vmatprep.subr.bf16.mxu0 0
    %6182 = vmatpush2.bf16.msra.mxu0 0
    %6183 = vmatprep.subr.bf16.mxu0 0
    %6184 = vmatpush2.bf16.msra.mxu0 0
    %6185 = vmatprep.subr.bf16.mxu0 0
    %6186 = vmatpush2.bf16.msra.mxu0 0
    %6187 = vmatprep.mubr.bf16.mxu0 0
    %6188 = vmatmul.mubr.bf16.gmra.mxu0 %v6083
    %v6189 = vpop.f32.mrf.mxu0
    %v6190 = vadd.f32 %v6105, %v6189
    %v6191 = vpop.f32.mrf.mxu0
    %v6192 = vpop.f32.mrf.mxu0
    %v6193 = vadd.f32 %v6105, %v6192
    %v6194 = vpop.f32.mrf.mxu0
    %6195 = vdwg.mxu0
    %v6196 = vpack.c.bf16 %v6193, %v6190
    %v6197 = vmax.bf16 %v6196, 0
    %v6198 = vld [vmem:[#allocation19] sm:$0xf]
    %v6199 = vld [vmem:[#allocation19 + $0x4] sm:$0xf]
    %v6200 = vld [vmem:[#allocation19 + $0x8] sm:$0xf]
    %v6201 = vld [vmem:[#allocation19 + $0xc] sm:$0xf]
    %v6202 = vld [vmem:[#allocation19 + $0x10] sm:$0xf]
    %v6203 = vld [vmem:[#allocation19 + $0x14] sm:$0xf]
    %v6204 = vld [vmem:[#allocation19 + $0x18] sm:$0xf]
    %v6205 = vld [vmem:[#allocation19 + $0x1c] sm:$0xf]
    %v6206 = vld [vmem:[#allocation19 + $0x20] sm:$0xf]
    %v6207 = vld [vmem:[#allocation19 + $0x24] sm:$0xf]
    %v6208 = vld [vmem:[#allocation19 + $0x28] sm:$0xf]
    %v6209 = vld [vmem:[#allocation19 + $0x2c] sm:$0xf]
    %v6210 = vld [vmem:[#allocation19 + $0x30] sm:$0xf]
    %v6211 = vld [vmem:[#allocation19 + $0x34] sm:$0xf]
    %v6212 = vld [vmem:[#allocation19 + $0x38] sm:$0xf]
    %v6213 = vld [vmem:[#allocation19 + $0x3c] sm:$0xf]
    %v6214 = vld [vmem:[%s24] sm:$0x1]
    %v6216 = vlaneseq
    %v6217 = vshrl.u32 %v6216, 7
    %v6218 = vsub.s32 0, %v6217
    %v6219 = vrot.slane %v6214, %v6218
    %v6237 = vunpack.c.l.b16 %v6198
    %v6238 = vunpack.c.l.b16 %v6199
    %v6239 = vunpack.c.l.b16 %v6200
    %v6240 = vunpack.c.l.b16 %v6201
    %v6241 = vunpack.c.l.b16 %v6202
    %v6242 = vunpack.c.l.b16 %v6203
    %v6243 = vunpack.c.l.b16 %v6204
    %v6244 = vunpack.c.l.b16 %v6205
    %v6245 = vunpack.c.l.b16 %v6206
    %v6246 = vunpack.c.l.b16 %v6207
    %v6247 = vunpack.c.l.b16 %v6208
    %v6248 = vunpack.c.l.b16 %v6209
    %v6249 = vunpack.c.l.b16 %v6210
    %v6250 = vunpack.c.l.b16 %v6211
    %v6251 = vunpack.c.l.b16 %v6212
    %v6252 = vunpack.c.l.b16 %v6213
    %v6253 = vpack.c.b16 %v6238, %v6237
    %v6254 = vpack.c.b16 %v6240, %v6239
    %v6255 = vpack.c.b16 %v6242, %v6241
    %v6256 = vpack.c.b16 %v6244, %v6243
    %v6257 = vpack.c.b16 %v6246, %v6245
    %v6258 = vpack.c.b16 %v6248, %v6247
    %v6259 = vpack.c.b16 %v6250, %v6249
    %v6260 = vpack.c.b16 %v6252, %v6251
    %6269 = vmatprep.subr.bf16.mxu0 0
    %6270 = vmatpush1.bf16.msra.mxu0 %v6260
    %6271 = vmatprep.subr.bf16.mxu0 0
    %6272 = vmatpush1.bf16.msra.mxu0 %v6259
    %6273 = vmatprep.subr.bf16.mxu0 0
    %6274 = vmatpush1.bf16.msra.mxu0 %v6258
    %6275 = vmatprep.subr.bf16.mxu0 0
    %6276 = vmatpush1.bf16.msra.mxu0 %v6257
    %6277 = vmatprep.subr.bf16.mxu0 0
    %6278 = vmatpush1.bf16.msra.mxu0 %v6256
    %6279 = vmatprep.subr.bf16.mxu0 0
    %6280 = vmatpush1.bf16.msra.mxu0 %v6255
    %6281 = vmatprep.subr.bf16.mxu0 0
    %6282 = vmatpush1.bf16.msra.mxu0 %v6254
    %6283 = vmatprep.subr.bf16.mxu0 0
    %6284 = vmatpush1.bf16.msra.mxu0 %v6253
    %6285 = vmatprep.subr.bf16.mxu0 0
    %6286 = vmatpush2.bf16.msra.mxu0 0
    %6287 = vmatprep.subr.bf16.mxu0 0
    %6288 = vmatpush2.bf16.msra.mxu0 0
    %6289 = vmatprep.subr.bf16.mxu0 0
    %6290 = vmatpush2.bf16.msra.mxu0 0
    %6291 = vmatprep.subr.bf16.mxu0 0
    %6292 = vmatpush2.bf16.msra.mxu0 0
    %6293 = vmatprep.subr.bf16.mxu0 0
    %6294 = vmatpush2.bf16.msra.mxu0 0
    %6295 = vmatprep.subr.bf16.mxu0 0
    %6296 = vmatpush2.bf16.msra.mxu0 0
    %6297 = vmatprep.subr.bf16.mxu0 0
    %6298 = vmatpush2.bf16.msra.mxu0 0
    %6299 = vmatprep.subr.bf16.mxu0 0
    %6300 = vmatpush2.bf16.msra.mxu0 0
    %6301 = vmatprep.mubr.bf16.mxu0 0
    %6302 = vmatmul.mubr.bf16.gmra.mxu0 %v6197
    %v6303 = vpop.f32.mrf.mxu0
    %v6304 = vadd.f32 %v6219, %v6303
    %v6305 = vpop.f32.mrf.mxu0
    %v6306 = vpop.f32.mrf.mxu0
    %v6307 = vadd.f32 %v6219, %v6306
    %v6308 = vpop.f32.mrf.mxu0
    %6309 = vdwg.mxu0
    %6310 = vst [vmem:[%s25] sm:$0xff] %v6304
    %6311 = vst [vmem:[%s25 + $0x8] sm:$0xff] %v6307
    // Predicated region
    $region150: #{clasnet_forward.1} parent=1 // pred_check
      _
    $region151: #{clasnet_forward.1} parent=1 // pred_check_branch
      %6313 = sbr.rel (0) target = $region153
    $region152: #{clasnet_forward.1} parent=1 // pred_region
      _
    $region153: #{clasnet_forward.1} parent=1 // pred_fallthru
      _
    // Predicated region
    $region154: #{clasnet_forward.1} parent=1 // pred_check
      _
    $region155: #{clasnet_forward.1} parent=1 // pred_check_branch
      %6315 = sbr.rel (0) target = $region157
    $region156: #{clasnet_forward.1} parent=1 // pred_region
      _
    $region157: #{clasnet_forward.1} parent=1 // pred_fallthru
      _
    %6316 = vsyncpa [#allocation3], 1
    %6317 = vsyncpa [#allocation5], 1
    %6318 = vsyncpa [#allocation8], 1
    %6319 = vsyncpa [#allocation11], 1
    %6320 = vsyncpa [#allocation14], 1
    %6321 = vsyncpa [#allocation17], 1
    %6322 = vsyncpa [#allocation20], 1

</llo_original>
